<compile_context>
chip_gen: v5e
topology: v5e:2x2
jax: 0.10.0
libtpu: 0.0.40
codegen_flags: <defaults>
</compile_context>

<pallas_src>
import functools

import jax
import jax.numpy as jnp
from jax.experimental import pallas as pl
from jax.experimental.pallas import tpu as pltpu


def _round_up(x, m):
    return (x + m - 1) // m * m


# --------------------------------------------------------------------------
# Conv layer as tiled matmul: relu(patches @ W + b) * bn_scale + bn_shift
# --------------------------------------------------------------------------
def _conv_relu_bn_kernel(p_ref, w_ref, b_ref, scale_ref, shift_ref, o_ref):
    acc = jnp.dot(p_ref[...], w_ref[...], preferred_element_type=jnp.float32)
    h = jnp.maximum(acc + b_ref[...], 0.0)
    o_ref[...] = (h * scale_ref[...] + shift_ref[...]).astype(o_ref.dtype)


def conv_relu_bn(patches, w, bias, scale, shift):
    """patches: (M, K) f32, w: (K, Cout) f32. Returns (M, Cout) f32."""
    m, k = patches.shape
    nc = w.shape[1]

    tile_m = min(512, _round_up(m, 64))          # sublane/packing friendly tile
    m_pad = _round_up(m, tile_m)

    p = jnp.pad(patches, ((0, m_pad - m), (0, 0))).astype(jnp.bfloat16)
    wb = w.astype(jnp.bfloat16)
    b2 = bias.astype(jnp.float32).reshape(1, nc)
    sc = scale.astype(jnp.float32).reshape(1, nc)
    sh = shift.astype(jnp.float32).reshape(1, nc)

    out = pl.pallas_call(
        _conv_relu_bn_kernel,
        out_shape=jax.ShapeDtypeStruct((m_pad, nc), jnp.float32),
        grid_spec=pltpu.PrefetchScalarGridSpec(
            num_scalar_prefetch=0,
            grid=(m_pad // tile_m,),
            in_specs=[
                pl.BlockSpec((tile_m, k), lambda i: (i, 0)),   # streamed patch tiles
                pl.BlockSpec((k, nc), lambda i: (0, 0)),       # resident weights
                pl.BlockSpec((1, nc), lambda i: (0, 0)),       # bias
                pl.BlockSpec((1, nc), lambda i: (0, 0)),       # bn scale
                pl.BlockSpec((1, nc), lambda i: (0, 0)),       # bn shift
            ],
            out_specs=pl.BlockSpec((tile_m, nc), lambda i: (i, 0)),
        ),
        compiler_params=pltpu.CompilerParams(
            dimension_semantics=("parallel",)),
        cost_estimate=pl.CostEstimate(
            flops=2 * m_pad * k * nc,
            transcendentals=0,
            bytes_accessed=m_pad * k * 2 + k * nc * 2 + m_pad * nc * 4),
    )(p, wb, b2, sc, sh)
    return out[:m]


# --------------------------------------------------------------------------
# MLP head: relu(fc1) -> relu(fc2) -> [dropout: identity] -> fc3 -> log_softmax
# --------------------------------------------------------------------------
def _mlp_head_kernel(x_ref, w1_ref, b1_ref, w2_ref, b2_ref, w3_ref, b3_ref,
                     o_ref, *, num_classes):
    x = x_ref[...]                                               # (B, Dp) bf16
    h = jnp.maximum(
        jnp.dot(x, w1_ref[...], preferred_element_type=jnp.float32) + b1_ref[...], 0.0)
    h = jnp.maximum(
        jnp.dot(h.astype(jnp.bfloat16), w2_ref[...],
                preferred_element_type=jnp.float32) + b2_ref[...], 0.0)
    # TODO(synk): F.dropout(p=0.5) in the reference defaults to training-mode
    # RNG; implemented as identity (eval semantics) for determinism.
    logits = (jnp.dot(h.astype(jnp.bfloat16), w3_ref[...],
                      preferred_element_type=jnp.float32) + b3_ref[...])      # (B, 128)
    lane = jax.lax.broadcasted_iota(jnp.int32, logits.shape, 1)
    logits = jnp.where(lane < num_classes, logits, -1e30)        # mask padded classes
    m = jnp.max(logits, axis=-1, keepdims=True)
    z = logits - m
    lse = jnp.log(jnp.sum(jnp.exp(z), axis=-1, keepdims=True))
    o_ref[...] = (z - lse).astype(o_ref.dtype)


def mlp_head(feat, params, num_classes=10):
    b, d = feat.shape
    d_pad = _round_up(d, 128)
    n_pad = _round_up(num_classes, 128)

    x = jnp.pad(feat, ((0, 0), (0, d_pad - d))).astype(jnp.bfloat16)
    w1 = jnp.pad(params["fc1_w"], ((0, d_pad - d), (0, 0))).astype(jnp.bfloat16)
    b1 = params["fc1_b"].reshape(1, -1)
    w2 = params["fc2_w"].astype(jnp.bfloat16)
    b2 = params["fc2_b"].reshape(1, -1)
    w3 = jnp.pad(params["fc3_w"],
                 ((0, 0), (0, n_pad - num_classes))).astype(jnp.bfloat16)
    b3 = jnp.pad(params["fc3_b"], (0, n_pad - num_classes)).reshape(1, -1)

    vmem = pl.BlockSpec(memory_space=pltpu.MemorySpace.VMEM)
    out = pl.pallas_call(
        functools.partial(_mlp_head_kernel, num_classes=num_classes),
        out_shape=jax.ShapeDtypeStruct((b, n_pad), jnp.float32),
        in_specs=[vmem] * 7,
        out_specs=vmem,
    )(x, w1, b1, w2, b2, w3, b3)
    return out[:, :num_classes]


# --------------------------------------------------------------------------
# Wrapper: im2col (layout plumbing) + per-layer Pallas calls
# --------------------------------------------------------------------------
def _im2col(x, k=3, s=2, p=1):
    """x: (B, H, W, C) -> (B*OH*OW, k*k*C) with rows ordered (kh, kw, cin)."""
    bsz, h, w, c = x.shape
    oh = (h + 2 * p - k) // s + 1
    ow = (w + 2 * p - k) // s + 1
    xp = jnp.pad(x, ((0, 0), (p, p), (p, p), (0, 0)))
    slabs = []
    for kh in range(k):
        for kw in range(k):
            slabs.append(xp[:, kh:kh + s * (oh - 1) + 1:s,
                            kw:kw + s * (ow - 1) + 1:s, :])
    patches = jnp.concatenate(slabs, axis=-1)            # (B, OH, OW, 9*C)
    return patches.reshape(bsz * oh * ow, k * k * c), (oh, ow)


def cnn_mlp_forward(img, qst, params):
    """img: (B, 3, H, W) f32 NCHW, qst: (B, 11) f32."""
    bsz = img.shape[0]
    eps = 1e-5
    x = jnp.transpose(img, (0, 2, 3, 1))                  # NHWC, channels on lanes
    for l in range(1, 5):
        patches, (oh, ow) = _im2col(x)
        w = params[f"conv{l}_w"]                          # (Cout, Cin, 3, 3), torch layout
        cout = w.shape[0]
        wm = jnp.transpose(w, (2, 3, 1, 0)).reshape(-1, cout)   # (9*Cin, Cout)
        # TODO(synk): BatchNorm2d training-mode batch statistics not implemented;
        # eval-mode running-stats affine is folded into scale/shift.
        scale = params[f"bn{l}_g"] / jnp.sqrt(params[f"bn{l}_v"] + eps)
        shift = params[f"bn{l}_b"] - params[f"bn{l}_m"] * scale
        y = conv_relu_bn(patches, wm, params[f"conv{l}_b"], scale, shift)
        x = y.reshape(bsz, oh, ow, cout)
    # torch's x.view(B, -1) flattens NCHW (channel-major): match that ordering.
    feat = jnp.transpose(x, (0, 3, 1, 2)).reshape(bsz, -1)
    feat = jnp.concatenate([feat, qst], axis=1)           # (B, 5*5*24 + 11)
    return mlp_head(feat, params)


# --------------------------------------------------------------------------
# Pure-JAX f32 reference (conv via lax.conv, same eval BN / eval dropout)
# --------------------------------------------------------------------------
def reference_forward(img, qst, params):
    eps = 1e-5
    x = img
    for l in range(1, 5):
        x = jax.lax.conv_general_dilated(
            x, params[f"conv{l}_w"], window_strides=(2, 2),
            padding=((1, 1), (1, 1)),
            dimension_numbers=("NCHW", "OIHW", "NCHW"))
        x = x + params[f"conv{l}_b"][None, :, None, None]
        x = jnp.maximum(x, 0.0)
        g = params[f"bn{l}_g"][None, :, None, None]
        b = params[f"bn{l}_b"][None, :, None, None]
        mu = params[f"bn{l}_m"][None, :, None, None]
        var = params[f"bn{l}_v"][None, :, None, None]
        x = g * (x - mu) / jnp.sqrt(var + eps) + b
    x = x.reshape(x.shape[0], -1)
    x = jnp.concatenate([x, qst], axis=1)
    x = jnp.maximum(x @ params["fc1_w"] + params["fc1_b"], 0.0)
    x = jnp.maximum(x @ params["fc2_w"] + params["fc2_b"], 0.0)
    logits = x @ params["fc3_w"] + params["fc3_b"]
    return jax.nn.log_softmax(logits, axis=-1)


if __name__ == "__main__":
    # 75x75 input -> 38 -> 19 -> 10 -> 5, matching fc1 = nn.Linear(5*5*24 + 11, 256)
    B, C_IN, H, W = 2, 3, 75, 75
    QST, HID, NCLS, CCONV = 11, 256, 10, 24

    key = jax.random.PRNGKey(0)
    ks = iter(jax.random.split(key, 40))

    img = jax.random.normal(next(ks), (B, C_IN, H, W), jnp.float32)
    qst = jax.random.normal(next(ks), (B, QST), jnp.float32)

    params = {}
    cin = C_IN
    for l in range(1, 5):
        bound = 1.0 / (cin * 9) ** 0.5
        params[f"conv{l}_w"] = jax.random.uniform(next(ks), (CCONV, cin, 3, 3),
                                                  jnp.float32, -bound, bound)
        params[f"conv{l}_b"] = jax.random.uniform(next(ks), (CCONV,),
                                                  jnp.float32, -bound, bound)
        params[f"bn{l}_g"] = jax.random.uniform(next(ks), (CCONV,), jnp.float32, 0.5, 1.5)
        params[f"bn{l}_b"] = jax.random.uniform(next(ks), (CCONV,), jnp.float32, -0.1, 0.1)
        params[f"bn{l}_m"] = 0.1 * jax.random.normal(next(ks), (CCONV,), jnp.float32)
        params[f"bn{l}_v"] = jax.random.uniform(next(ks), (CCONV,), jnp.float32, 0.5, 1.5)
        cin = CCONV

    def linear(k, din, dout):
        kw, kb = jax.random.split(k)
        bound = 1.0 / din ** 0.5
        return (jax.random.uniform(kw, (din, dout), jnp.float32, -bound, bound),
                jax.random.uniform(kb, (dout,), jnp.float32, -bound, bound))

    feat_dim = CCONV * 5 * 5 + QST                  # 611
    params["fc1_w"], params["fc1_b"] = linear(next(ks), feat_dim, HID)
    params["fc2_w"], params["fc2_b"] = linear(next(ks), HID, HID)
    params["fc3_w"], params["fc3_b"] = linear(next(ks), HID, NCLS)

    out = jax.jit(cnn_mlp_forward)(img, qst, params)
    out = jax.block_until_ready(out)
    assert out.shape == (B, NCLS), out.shape

    ref = reference_forward(img, qst, params)
    err = float(jnp.max(jnp.abs(out - ref)))
    # bf16 matmul inputs (f32 accumulation) vs. all-f32 reference.
    assert err < 1e-1, err

    print("KERNEL_OK")
</pallas_src>

<mosaic_0001>
module attributes {stable_mosaic.version = 11 : i64} {
  func.func @_conv_relu_bn_kernel(%arg0: i32, %arg1: memref<512x27xbf16, #tpu.memory_space<vmem>>, %arg2: memref<27x24xbf16, #tpu.memory_space<vmem>>, %arg3: memref<1x24xf32, #tpu.memory_space<vmem>>, %arg4: memref<1x24xf32, #tpu.memory_space<vmem>>, %arg5: memref<1x24xf32, #tpu.memory_space<vmem>>, %arg6: memref<512x24xf32, #tpu.memory_space<vmem>>) attributes {dimension_semantics = [#tpu.dimension_semantics<parallel>], iteration_bounds = array<i64: 6>, scalar_prefetch = 0 : i64, scratch_operands = 0 : i64, tpu.core_type = #tpu.core_type<tc>, window_params = [{transform_indices = @transform_0, window_bounds = array<i64: 512, 27>}, {pipeline_mode = #tpu.pipeline_mode<synchronous>, transform_indices = @transform_1, window_bounds = array<i64: 27, 24>}, {pipeline_mode = #tpu.pipeline_mode<synchronous>, transform_indices = @transform_2, window_bounds = array<i64: 1, 24>}, {pipeline_mode = #tpu.pipeline_mode<synchronous>, transform_indices = @transform_3, window_bounds = array<i64: 1, 24>}, {pipeline_mode = #tpu.pipeline_mode<synchronous>, transform_indices = @transform_4, window_bounds = array<i64: 1, 24>}, {transform_indices = @transform_5, window_bounds = array<i64: 512, 24>}]} {
    %c0 = arith.constant 0 : index
    %c0_0 = arith.constant 0 : index
    %0 = vector.load %arg1[%c0, %c0_0] : memref<512x27xbf16, #tpu.memory_space<vmem>>, vector<512x27xbf16>
    %c0_1 = arith.constant 0 : index
    %c0_2 = arith.constant 0 : index
    %1 = vector.load %arg2[%c0_1, %c0_2] : memref<27x24xbf16, #tpu.memory_space<vmem>>, vector<27x24xbf16>
    %cst = arith.constant dense<0.000000e+00> : vector<512x24xf32>
    %2 = tpu.matmul %0, %1, %cst {dimension_numbers = #tpu.dot_dimension_numbers<[1], [0], [0], [1], [0, 0, 1, 1], [], []>} : vector<512x27xbf16>, vector<27x24xbf16>, vector<512x24xf32> -> vector<512x24xf32>
    %c0_3 = arith.constant 0 : index
    %c0_4 = arith.constant 0 : index
    %3 = vector.load %arg3[%c0_3, %c0_4] : memref<1x24xf32, #tpu.memory_space<vmem>>, vector<1x24xf32>
    %4 = vector.broadcast %3 : vector<1x24xf32> to vector<512x24xf32>
    %5 = arith.addf %2, %4 : vector<512x24xf32>
    %cst_5 = arith.constant 0.000000e+00 : f32
    %6 = vector.broadcast %cst_5 : f32 to vector<512x24xf32>
    %7 = arith.maximumf %5, %6 : vector<512x24xf32>
    %c0_6 = arith.constant 0 : index
    %c0_7 = arith.constant 0 : index
    %8 = vector.load %arg4[%c0_6, %c0_7] : memref<1x24xf32, #tpu.memory_space<vmem>>, vector<1x24xf32>
    %9 = vector.broadcast %8 : vector<1x24xf32> to vector<512x24xf32>
    %10 = arith.mulf %7, %9 : vector<512x24xf32>
    %c0_8 = arith.constant 0 : index
    %c0_9 = arith.constant 0 : index
    %11 = vector.load %arg5[%c0_8, %c0_9] : memref<1x24xf32, #tpu.memory_space<vmem>>, vector<1x24xf32>
    %12 = vector.broadcast %11 : vector<1x24xf32> to vector<512x24xf32>
    %13 = arith.addf %10, %12 : vector<512x24xf32>
    %c0_10 = arith.constant 0 : index
    %c0_11 = arith.constant 0 : index
    %14 = vector.load %arg6[%c0_10, %c0_11] : memref<512x24xf32, #tpu.memory_space<vmem>>, vector<512x24xf32>
    tpu.vector_store %arg6[%c0_10, %c0_11], %13 {strides = array<i32>} : memref<512x24xf32, #tpu.memory_space<vmem>>, vector<512x24xf32>,
    return
  }
  func.func @transform_0(%arg0: i32) -> (i32, i32) {
    %c0_i32 = arith.constant 0 : i32
    %c0_i32_0 = arith.constant 0 : i32
    return %arg0, %c0_i32 : i32, i32
  }
  func.func @transform_1(%arg0: i32) -> (i32, i32) {
    %c0_i32 = arith.constant 0 : i32
    %c0_i32_0 = arith.constant 0 : i32
    %c0_i32_1 = arith.constant 0 : i32
    return %c0_i32, %c0_i32_0 : i32, i32
  }
  func.func @transform_2(%arg0: i32) -> (i32, i32) {
    %c0_i32 = arith.constant 0 : i32
    %c0_i32_0 = arith.constant 0 : i32
    %c0_i32_1 = arith.constant 0 : i32
    return %c0_i32, %c0_i32_0 : i32, i32
  }
  func.func @transform_3(%arg0: i32) -> (i32, i32) {
    %c0_i32 = arith.constant 0 : i32
    %c0_i32_0 = arith.constant 0 : i32
    %c0_i32_1 = arith.constant 0 : i32
    return %c0_i32, %c0_i32_0 : i32, i32
  }
  func.func @transform_4(%arg0: i32) -> (i32, i32) {
    %c0_i32 = arith.constant 0 : i32
    %c0_i32_0 = arith.constant 0 : i32
    %c0_i32_1 = arith.constant 0 : i32
    return %c0_i32, %c0_i32_0 : i32, i32
  }
  func.func @transform_5(%arg0: i32) -> (i32, i32) {
    %c0_i32 = arith.constant 0 : i32
    %c0_i32_0 = arith.constant 0 : i32
    return %arg0, %c0_i32 : i32, i32
  }
}

module attributes {stable_mosaic.version = 11 : i64} {
  func.func @_conv_relu_bn_kernel(%arg0: i32, %arg1: memref<512x216xbf16, #tpu.memory_space<vmem>>, %arg2: memref<216x24xbf16, #tpu.memory_space<vmem>>, %arg3: memref<1x24xf32, #tpu.memory_space<vmem>>, %arg4: memref<1x24xf32, #tpu.memory_space<vmem>>, %arg5: memref<1x24xf32, #tpu.memory_space<vmem>>, %arg6: memref<512x24xf32, #tpu.memory_space<vmem>>) attributes {dimension_semantics = [#tpu.dimension_semantics<parallel>], iteration_bounds = array<i64: 2>, scalar_prefetch = 0 : i64, scratch_operands = 0 : i64, tpu.core_type = #tpu.core_type<tc>, window_params = [{transform_indices = @transform_0, window_bounds = array<i64: 512, 216>}, {pipeline_mode = #tpu.pipeline_mode<synchronous>, transform_indices = @transform_1, window_bounds = array<i64: 216, 24>}, {pipeline_mode = #tpu.pipeline_mode<synchronous>, transform_indices = @transform_2, window_bounds = array<i64: 1, 24>}, {pipeline_mode = #tpu.pipeline_mode<synchronous>, transform_indices = @transform_3, window_bounds = array<i64: 1, 24>}, {pipeline_mode = #tpu.pipeline_mode<synchronous>, transform_indices = @transform_4, window_bounds = array<i64: 1, 24>}, {transform_indices = @transform_5, window_bounds = array<i64: 512, 24>}]} {
    %c0 = arith.constant 0 : index
    %c0_0 = arith.constant 0 : index
    %0 = vector.load %arg1[%c0, %c0_0] : memref<512x216xbf16, #tpu.memory_space<vmem>>, vector<512x216xbf16>
    %c0_1 = arith.constant 0 : index
    %c0_2 = arith.constant 0 : index
    %1 = vector.load %arg2[%c0_1, %c0_2] : memref<216x24xbf16, #tpu.memory_space<vmem>>, vector<216x24xbf16>
    %cst = arith.constant dense<0.000000e+00> : vector<512x24xf32>
    %2 = tpu.matmul %0, %1, %cst {dimension_numbers = #tpu.dot_dimension_numbers<[1], [0], [0], [1], [0, 0, 1, 1], [], []>} : vector<512x216xbf16>, vector<216x24xbf16>, vector<512x24xf32> -> vector<512x24xf32>
    %c0_3 = arith.constant 0 : index
    %c0_4 = arith.constant 0 : index
    %3 = vector.load %arg3[%c0_3, %c0_4] : memref<1x24xf32, #tpu.memory_space<vmem>>, vector<1x24xf32>
    %4 = vector.broadcast %3 : vector<1x24xf32> to vector<512x24xf32>
    %5 = arith.addf %2, %4 : vector<512x24xf32>
    %cst_5 = arith.constant 0.000000e+00 : f32
    %6 = vector.broadcast %cst_5 : f32 to vector<512x24xf32>
    %7 = arith.maximumf %5, %6 : vector<512x24xf32>
    %c0_6 = arith.constant 0 : index
    %c0_7 = arith.constant 0 : index
    %8 = vector.load %arg4[%c0_6, %c0_7] : memref<1x24xf32, #tpu.memory_space<vmem>>, vector<1x24xf32>
    %9 = vector.broadcast %8 : vector<1x24xf32> to vector<512x24xf32>
    %10 = arith.mulf %7, %9 : vector<512x24xf32>
    %c0_8 = arith.constant 0 : index
    %c0_9 = arith.constant 0 : index
    %11 = vector.load %arg5[%c0_8, %c0_9] : memref<1x24xf32, #tpu.memory_space<vmem>>, vector<1x24xf32>
    %12 = vector.broadcast %11 : vector<1x24xf32> to vector<512x24xf32>
    %13 = arith.addf %10, %12 : vector<512x24xf32>
    %c0_10 = arith.constant 0 : index
    %c0_11 = arith.constant 0 : index
    %14 = vector.load %arg6[%c0_10, %c0_11] : memref<512x24xf32, #tpu.memory_space<vmem>>, vector<512x24xf32>
    tpu.vector_store %arg6[%c0_10, %c0_11], %13 {strides = array<i32>} : memref<512x24xf32, #tpu.memory_space<vmem>>, vector<512x24xf32>,
    return
  }
  func.func @transform_0(%arg0: i32) -> (i32, i32) {
    %c0_i32 = arith.constant 0 : i32
    %c0_i32_0 = arith.constant 0 : i32
    return %arg0, %c0_i32 : i32, i32
  }
  func.func @transform_1(%arg0: i32) -> (i32, i32) {
    %c0_i32 = arith.constant 0 : i32
    %c0_i32_0 = arith.constant 0 : i32
    %c0_i32_1 = arith.constant 0 : i32
    return %c0_i32, %c0_i32_0 : i32, i32
  }
  func.func @transform_2(%arg0: i32) -> (i32, i32) {
    %c0_i32 = arith.constant 0 : i32
    %c0_i32_0 = arith.constant 0 : i32
    %c0_i32_1 = arith.constant 0 : i32
    return %c0_i32, %c0_i32_0 : i32, i32
  }
  func.func @transform_3(%arg0: i32) -> (i32, i32) {
    %c0_i32 = arith.constant 0 : i32
    %c0_i32_0 = arith.constant 0 : i32
    %c0_i32_1 = arith.constant 0 : i32
    return %c0_i32, %c0_i32_0 : i32, i32
  }
  func.func @transform_4(%arg0: i32) -> (i32, i32) {
    %c0_i32 = arith.constant 0 : i32
    %c0_i32_0 = arith.constant 0 : i32
    %c0_i32_1 = arith.constant 0 : i32
    return %c0_i32, %c0_i32_0 : i32, i32
  }
  func.func @transform_5(%arg0: i32) -> (i32, i32) {
    %c0_i32 = arith.constant 0 : i32
    %c0_i32_0 = arith.constant 0 : i32
    return %arg0, %c0_i32 : i32, i32
  }
}

module attributes {stable_mosaic.version = 11 : i64} {
  func.func @_conv_relu_bn_kernel(%arg0: i32, %arg1: memref<256x216xbf16, #tpu.memory_space<vmem>>, %arg2: memref<216x24xbf16, #tpu.memory_space<vmem>>, %arg3: memref<1x24xf32, #tpu.memory_space<vmem>>, %arg4: memref<1x24xf32, #tpu.memory_space<vmem>>, %arg5: memref<1x24xf32, #tpu.memory_space<vmem>>, %arg6: memref<256x24xf32, #tpu.memory_space<vmem>>) attributes {dimension_semantics = [#tpu.dimension_semantics<parallel>], iteration_bounds = array<i64: 1>, scalar_prefetch = 0 : i64, scratch_operands = 0 : i64, tpu.core_type = #tpu.core_type<tc>, window_params = [{transform_indices = @transform_0, window_bounds = array<i64: 256, 216>}, {pipeline_mode = #tpu.pipeline_mode<synchronous>, transform_indices = @transform_1, window_bounds = array<i64: 216, 24>}, {pipeline_mode = #tpu.pipeline_mode<synchronous>, transform_indices = @transform_2, window_bounds = array<i64: 1, 24>}, {pipeline_mode = #tpu.pipeline_mode<synchronous>, transform_indices = @transform_3, window_bounds = array<i64: 1, 24>}, {pipeline_mode = #tpu.pipeline_mode<synchronous>, transform_indices = @transform_4, window_bounds = array<i64: 1, 24>}, {transform_indices = @transform_5, window_bounds = array<i64: 256, 24>}]} {
    %c0 = arith.constant 0 : index
    %c0_0 = arith.constant 0 : index
    %0 = vector.load %arg1[%c0, %c0_0] : memref<256x216xbf16, #tpu.memory_space<vmem>>, vector<256x216xbf16>
    %c0_1 = arith.constant 0 : index
    %c0_2 = arith.constant 0 : index
    %1 = vector.load %arg2[%c0_1, %c0_2] : memref<216x24xbf16, #tpu.memory_space<vmem>>, vector<216x24xbf16>
    %cst = arith.constant dense<0.000000e+00> : vector<256x24xf32>
    %2 = tpu.matmul %0, %1, %cst {dimension_numbers = #tpu.dot_dimension_numbers<[1], [0], [0], [1], [0, 0, 1, 1], [], []>} : vector<256x216xbf16>, vector<216x24xbf16>, vector<256x24xf32> -> vector<256x24xf32>
    %c0_3 = arith.constant 0 : index
    %c0_4 = arith.constant 0 : index
    %3 = vector.load %arg3[%c0_3, %c0_4] : memref<1x24xf32, #tpu.memory_space<vmem>>, vector<1x24xf32>
    %4 = vector.broadcast %3 : vector<1x24xf32> to vector<256x24xf32>
    %5 = arith.addf %2, %4 : vector<256x24xf32>
    %cst_5 = arith.constant 0.000000e+00 : f32
    %6 = vector.broadcast %cst_5 : f32 to vector<256x24xf32>
    %7 = arith.maximumf %5, %6 : vector<256x24xf32>
    %c0_6 = arith.constant 0 : index
    %c0_7 = arith.constant 0 : index
    %8 = vector.load %arg4[%c0_6, %c0_7] : memref<1x24xf32, #tpu.memory_space<vmem>>, vector<1x24xf32>
    %9 = vector.broadcast %8 : vector<1x24xf32> to vector<256x24xf32>
    %10 = arith.mulf %7, %9 : vector<256x24xf32>
    %c0_8 = arith.constant 0 : index
    %c0_9 = arith.constant 0 : index
    %11 = vector.load %arg5[%c0_8, %c0_9] : memref<1x24xf32, #tpu.memory_space<vmem>>, vector<1x24xf32>
    %12 = vector.broadcast %11 : vector<1x24xf32> to vector<256x24xf32>
    %13 = arith.addf %10, %12 : vector<256x24xf32>
    %c0_10 = arith.constant 0 : index
    %c0_11 = arith.constant 0 : index
    %14 = vector.load %arg6[%c0_10, %c0_11] : memref<256x24xf32, #tpu.memory_space<vmem>>, vector<256x24xf32>
    tpu.vector_store %arg6[%c0_10, %c0_11], %13 {strides = array<i32>} : memref<256x24xf32, #tpu.memory_space<vmem>>, vector<256x24xf32>,
    return
  }
  func.func @transform_0(%arg0: i32) -> (i32, i32) {
    %c0_i32 = arith.constant 0 : i32
    %c0_i32_0 = arith.constant 0 : i32
    return %arg0, %c0_i32 : i32, i32
  }
  func.func @transform_1(%arg0: i32) -> (i32, i32) {
    %c0_i32 = arith.constant 0 : i32
    %c0_i32_0 = arith.constant 0 : i32
    %c0_i32_1 = arith.constant 0 : i32
    return %c0_i32, %c0_i32_0 : i32, i32
  }
  func.func @transform_2(%arg0: i32) -> (i32, i32) {
    %c0_i32 = arith.constant 0 : i32
    %c0_i32_0 = arith.constant 0 : i32
    %c0_i32_1 = arith.constant 0 : i32
    return %c0_i32, %c0_i32_0 : i32, i32
  }
  func.func @transform_3(%arg0: i32) -> (i32, i32) {
    %c0_i32 = arith.constant 0 : i32
    %c0_i32_0 = arith.constant 0 : i32
    %c0_i32_1 = arith.constant 0 : i32
    return %c0_i32, %c0_i32_0 : i32, i32
  }
  func.func @transform_4(%arg0: i32) -> (i32, i32) {
    %c0_i32 = arith.constant 0 : i32
    %c0_i32_0 = arith.constant 0 : i32
    %c0_i32_1 = arith.constant 0 : i32
    return %c0_i32, %c0_i32_0 : i32, i32
  }
  func.func @transform_5(%arg0: i32) -> (i32, i32) {
    %c0_i32 = arith.constant 0 : i32
    %c0_i32_0 = arith.constant 0 : i32
    return %arg0, %c0_i32 : i32, i32
  }
}

module attributes {stable_mosaic.version = 11 : i64} {
  func.func @_conv_relu_bn_kernel(%arg0: i32, %arg1: memref<64x216xbf16, #tpu.memory_space<vmem>>, %arg2: memref<216x24xbf16, #tpu.memory_space<vmem>>, %arg3: memref<1x24xf32, #tpu.memory_space<vmem>>, %arg4: memref<1x24xf32, #tpu.memory_space<vmem>>, %arg5: memref<1x24xf32, #tpu.memory_space<vmem>>, %arg6: memref<64x24xf32, #tpu.memory_space<vmem>>) attributes {dimension_semantics = [#tpu.dimension_semantics<parallel>], iteration_bounds = array<i64: 1>, scalar_prefetch = 0 : i64, scratch_operands = 0 : i64, tpu.core_type = #tpu.core_type<tc>, window_params = [{transform_indices = @transform_0, window_bounds = array<i64: 64, 216>}, {pipeline_mode = #tpu.pipeline_mode<synchronous>, transform_indices = @transform_1, window_bounds = array<i64: 216, 24>}, {pipeline_mode = #tpu.pipeline_mode<synchronous>, transform_indices = @transform_2, window_bounds = array<i64: 1, 24>}, {pipeline_mode = #tpu.pipeline_mode<synchronous>, transform_indices = @transform_3, window_bounds = array<i64: 1, 24>}, {pipeline_mode = #tpu.pipeline_mode<synchronous>, transform_indices = @transform_4, window_bounds = array<i64: 1, 24>}, {transform_indices = @transform_5, window_bounds = array<i64: 64, 24>}]} {
    %c0 = arith.constant 0 : index
    %c0_0 = arith.constant 0 : index
    %0 = vector.load %arg1[%c0, %c0_0] : memref<64x216xbf16, #tpu.memory_space<vmem>>, vector<64x216xbf16>
    %c0_1 = arith.constant 0 : index
    %c0_2 = arith.constant 0 : index
    %1 = vector.load %arg2[%c0_1, %c0_2] : memref<216x24xbf16, #tpu.memory_space<vmem>>, vector<216x24xbf16>
    %cst = arith.constant dense<0.000000e+00> : vector<64x24xf32>
    %2 = tpu.matmul %0, %1, %cst {dimension_numbers = #tpu.dot_dimension_numbers<[1], [0], [0], [1], [0, 0, 1, 1], [], []>} : vector<64x216xbf16>, vector<216x24xbf16>, vector<64x24xf32> -> vector<64x24xf32>
    %c0_3 = arith.constant 0 : index
    %c0_4 = arith.constant 0 : index
    %3 = vector.load %arg3[%c0_3, %c0_4] : memref<1x24xf32, #tpu.memory_space<vmem>>, vector<1x24xf32>
    %4 = vector.broadcast %3 : vector<1x24xf32> to vector<64x24xf32>
    %5 = arith.addf %2, %4 : vector<64x24xf32>
    %cst_5 = arith.constant 0.000000e+00 : f32
    %6 = vector.broadcast %cst_5 : f32 to vector<64x24xf32>
    %7 = arith.maximumf %5, %6 : vector<64x24xf32>
    %c0_6 = arith.constant 0 : index
    %c0_7 = arith.constant 0 : index
    %8 = vector.load %arg4[%c0_6, %c0_7] : memref<1x24xf32, #tpu.memory_space<vmem>>, vector<1x24xf32>
    %9 = vector.broadcast %8 : vector<1x24xf32> to vector<64x24xf32>
    %10 = arith.mulf %7, %9 : vector<64x24xf32>
    %c0_8 = arith.constant 0 : index
    %c0_9 = arith.constant 0 : index
    %11 = vector.load %arg5[%c0_8, %c0_9] : memref<1x24xf32, #tpu.memory_space<vmem>>, vector<1x24xf32>
    %12 = vector.broadcast %11 : vector<1x24xf32> to vector<64x24xf32>
    %13 = arith.addf %10, %12 : vector<64x24xf32>
    %c0_10 = arith.constant 0 : index
    %c0_11 = arith.constant 0 : index
    %14 = vector.load %arg6[%c0_10, %c0_11] : memref<64x24xf32, #tpu.memory_space<vmem>>, vector<64x24xf32>
    tpu.vector_store %arg6[%c0_10, %c0_11], %13 {strides = array<i32>} : memref<64x24xf32, #tpu.memory_space<vmem>>, vector<64x24xf32>,
    return
  }
  func.func @transform_0(%arg0: i32) -> (i32, i32) {
    %c0_i32 = arith.constant 0 : i32
    %c0_i32_0 = arith.constant 0 : i32
    return %arg0, %c0_i32 : i32, i32
  }
  func.func @transform_1(%arg0: i32) -> (i32, i32) {
    %c0_i32 = arith.constant 0 : i32
    %c0_i32_0 = arith.constant 0 : i32
    %c0_i32_1 = arith.constant 0 : i32
    return %c0_i32, %c0_i32_0 : i32, i32
  }
  func.func @transform_2(%arg0: i32) -> (i32, i32) {
    %c0_i32 = arith.constant 0 : i32
    %c0_i32_0 = arith.constant 0 : i32
    %c0_i32_1 = arith.constant 0 : i32
    return %c0_i32, %c0_i32_0 : i32, i32
  }
  func.func @transform_3(%arg0: i32) -> (i32, i32) {
    %c0_i32 = arith.constant 0 : i32
    %c0_i32_0 = arith.constant 0 : i32
    %c0_i32_1 = arith.constant 0 : i32
    return %c0_i32, %c0_i32_0 : i32, i32
  }
  func.func @transform_4(%arg0: i32) -> (i32, i32) {
    %c0_i32 = arith.constant 0 : i32
    %c0_i32_0 = arith.constant 0 : i32
    %c0_i32_1 = arith.constant 0 : i32
    return %c0_i32, %c0_i32_0 : i32, i32
  }
  func.func @transform_5(%arg0: i32) -> (i32, i32) {
    %c0_i32 = arith.constant 0 : i32
    %c0_i32_0 = arith.constant 0 : i32
    return %arg0, %c0_i32 : i32, i32
  }
}

module attributes {stable_mosaic.version = 11 : i64} {
  func.func @_mlp_head_kernel(%arg0: memref<2x640xbf16, #tpu.memory_space<vmem>>, %arg1: memref<640x256xbf16, #tpu.memory_space<vmem>>, %arg2: memref<1x256xf32, #tpu.memory_space<vmem>>, %arg3: memref<256x256xbf16, #tpu.memory_space<vmem>>, %arg4: memref<1x256xf32, #tpu.memory_space<vmem>>, %arg5: memref<256x128xbf16, #tpu.memory_space<vmem>>, %arg6: memref<1x128xf32, #tpu.memory_space<vmem>>, %arg7: memref<2x128xf32, #tpu.memory_space<vmem>>) attributes {dimension_semantics = [], scalar_prefetch = 0 : i64, scratch_operands = 0 : i64, tpu.core_type = #tpu.core_type<tc>} {
    %c0 = arith.constant 0 : index
    %c0_0 = arith.constant 0 : index
    %0 = vector.load %arg0[%c0, %c0_0] : memref<2x640xbf16, #tpu.memory_space<vmem>>, vector<2x640xbf16>
    %c0_1 = arith.constant 0 : index
    %c0_2 = arith.constant 0 : index
    %1 = vector.load %arg1[%c0_1, %c0_2] : memref<640x256xbf16, #tpu.memory_space<vmem>>, vector<640x256xbf16>
    %cst = arith.constant dense<0.000000e+00> : vector<2x256xf32>
    %2 = tpu.matmul %0, %1, %cst {dimension_numbers = #tpu.dot_dimension_numbers<[1], [0], [0], [1], [0, 0, 1, 1], [], []>} : vector<2x640xbf16>, vector<640x256xbf16>, vector<2x256xf32> -> vector<2x256xf32>
    %c0_3 = arith.constant 0 : index
    %c0_4 = arith.constant 0 : index
    %3 = vector.load %arg2[%c0_3, %c0_4] : memref<1x256xf32, #tpu.memory_space<vmem>>, vector<1x256xf32>
    %4 = vector.broadcast %3 : vector<1x256xf32> to vector<2x256xf32>
    %5 = arith.addf %2, %4 : vector<2x256xf32>
    %cst_5 = arith.constant 0.000000e+00 : f32
    %6 = vector.broadcast %cst_5 : f32 to vector<2x256xf32>
    %7 = arith.maximumf %5, %6 : vector<2x256xf32>
    %8 = arith.truncf %7 : vector<2x256xf32> to vector<2x256xbf16>
    %c0_6 = arith.constant 0 : index
    %c0_7 = arith.constant 0 : index
    %9 = vector.load %arg3[%c0_6, %c0_7] : memref<256x256xbf16, #tpu.memory_space<vmem>>, vector<256x256xbf16>
    %cst_8 = arith.constant dense<0.000000e+00> : vector<2x256xf32>
    %10 = tpu.matmul %8, %9, %cst_8 {dimension_numbers = #tpu.dot_dimension_numbers<[1], [0], [0], [1], [0, 0, 1, 1], [], []>} : vector<2x256xbf16>, vector<256x256xbf16>, vector<2x256xf32> -> vector<2x256xf32>
    %c0_9 = arith.constant 0 : index
    %c0_10 = arith.constant 0 : index
    %11 = vector.load %arg4[%c0_9, %c0_10] : memref<1x256xf32, #tpu.memory_space<vmem>>, vector<1x256xf32>
    %12 = vector.broadcast %11 : vector<1x256xf32> to vector<2x256xf32>
    %13 = arith.addf %10, %12 : vector<2x256xf32>
    %cst_11 = arith.constant 0.000000e+00 : f32
    %14 = vector.broadcast %cst_11 : f32 to vector<2x256xf32>
    %15 = arith.maximumf %13, %14 : vector<2x256xf32>
    %16 = arith.truncf %15 : vector<2x256xf32> to vector<2x256xbf16>
    %c0_12 = arith.constant 0 : index
    %c0_13 = arith.constant 0 : index
    %17 = vector.load %arg5[%c0_12, %c0_13] : memref<256x128xbf16, #tpu.memory_space<vmem>>, vector<256x128xbf16>
    %cst_14 = arith.constant dense<0.000000e+00> : vector<2x128xf32>
    %18 = tpu.matmul %16, %17, %cst_14 {dimension_numbers = #tpu.dot_dimension_numbers<[1], [0], [0], [1], [0, 0, 1, 1], [], []>} : vector<2x256xbf16>, vector<256x128xbf16>, vector<2x128xf32> -> vector<2x128xf32>
    %c0_15 = arith.constant 0 : index
    %c0_16 = arith.constant 0 : index
    %19 = vector.load %arg6[%c0_15, %c0_16] : memref<1x128xf32, #tpu.memory_space<vmem>>, vector<1x128xf32>
    %20 = vector.broadcast %19 : vector<1x128xf32> to vector<2x128xf32>
    %21 = arith.addf %18, %20 : vector<2x128xf32>
    %22 = tpu.iota {dimensions = array<i32: 1>} : vector<2x128xi32>
    %c10_i32 = arith.constant 10 : i32
    %23 = vector.broadcast %c10_i32 : i32 to vector<2x128xi32>
    %24 = arith.cmpi slt, %22, %23 : vector<2x128xi32>
    %cst_17 = arith.constant -1.000000e+30 : f32
    %25 = vector.broadcast %cst_17 : f32 to vector<2x128xf32>
    %26 = arith.select %24, %21, %25 : vector<2x128xi1>, vector<2x128xf32>
    %cst_18 = arith.constant dense<0xFF800000> : vector<2xf32>
    %27 = vector.multi_reduction <maximumf>, %26, %cst_18 [1] : vector<2x128xf32> to vector<2xf32>
    %28 = vector.shape_cast %27 : vector<2xf32> to vector<2x1xf32>
    %29 = vector.broadcast %28 : vector<2x1xf32> to vector<2x128xf32>
    %30 = arith.subf %26, %29 : vector<2x128xf32>
    %31 = math.exp %30 : vector<2x128xf32>
    %cst_19 = arith.constant dense<0.000000e+00> : vector<2xf32>
    %32 = vector.multi_reduction <add>, %31, %cst_19 [1] : vector<2x128xf32> to vector<2xf32>
    %33 = vector.shape_cast %32 : vector<2xf32> to vector<2x1xf32>
    %34 = math.log %33 : vector<2x1xf32>
    %35 = vector.broadcast %34 : vector<2x1xf32> to vector<2x128xf32>
    %36 = arith.subf %30, %35 : vector<2x128xf32>
    %c0_20 = arith.constant 0 : index
    %c0_21 = arith.constant 0 : index
    %37 = vector.load %arg7[%c0_20, %c0_21] : memref<2x128xf32, #tpu.memory_space<vmem>>, vector<2x128xf32>
    tpu.vector_store %arg7[%c0_20, %c0_21], %36 {strides = array<i32>} : memref<2x128xf32, #tpu.memory_space<vmem>>, vector<2x128xf32>,
    return
  }
}

</mosaic_0001>

<llo_original>
// kernel: cnn_mlp_forward.5
$region0: #{cnn_mlp_forward.5}
  #allocation0 [shape = 'u32[]', space=smem, size = 0x4, offset = 0x4, fixed_abs, tag = 'smem constant byte address 0x4 - core index']
  #allocation1 [shape = 'u32[72,128]{1,0:T(1,128)}', space=vmem, size = 0x9000, scoped, tag = 'internal scratch']
  %s0 = inlined_call_operand.vmem [shape: bf16[3072,27], index: 0, kind: input, shape index: {}]
  %s1 = inlined_call_operand.vmem [shape: bf16[27,24], index: 1, kind: input, shape index: {}]
  %s2 = inlined_call_operand.vmem [shape: f32[1,24], index: 2, kind: input, shape index: {}]
  %s3 = inlined_call_operand.vmem [shape: f32[1,24], index: 3, kind: input, shape index: {}]
  %s4 = inlined_call_operand.vmem [shape: f32[1,24], index: 4, kind: input, shape index: {}]
  %s5 = inlined_call_operand.vmem [shape: f32[3072,24], index: 5, kind: output, shape index: {}]
  %s6 = sld [smem:[#allocation0]]
  $region53: #{cnn_mlp_forward.5} parent=0
    _
  %s8 = ssub.s32 1, %s6
  %s9 = scalar_select 0, %s8, %s6
  loop: start=0, step=1, limit=8
  $region2: #{cnn_mlp_forward.5} parent=0 // loop_pre_header
    _
  $region3: #{cnn_mlp_forward.5} parent=0 // loop_header
    %s11 = sphi 0, %s15
    %p12 = scmp.ge.s32.totalorder %s11, 8
    %s21 = sphi 0, %s23
    %s24 = sphi 0, %s21
    %s25 = sphi 0, %s24
    %s41 = sphi 0, %s25
    %s45 = sphi 0, %s45
    %s47 = sphi 0, %s45
    %s48 = sphi 0, %s47
    %s62 = sphi 0, %s48
    %s66 = sphi 0, %s66
    %s68 = sphi 0, %s66
    %s69 = sphi 0, %s68
    %s83 = sphi 0, %s69
    %s87 = sphi 0, %s87
    %s89 = sphi 0, %s87
    %s90 = sphi 0, %s89
    %s104 = sphi 0, %s90
    %s108 = sphi 0, %s108
    %s110 = sphi 0, %s108
    %s111 = sphi 0, %s110
    %s125 = sphi 0, %s111
    %s131 = sphi 0, %s133
    %s134 = sphi 0, %s131
    %s135 = sphi 0, %s134
    %s151 = sphi 0, %s135
  $region4: #{cnn_mlp_forward.5} parent=0 // loop_header_branch
    %14 = sbr.rel (%p12) target = $region8
  $region5: #{cnn_mlp_forward.5} parent=0 // loop_body
    %s16 = ssub.s32 %s11, 1
    %s17 = ssub.s32 %s11, 2
    %s18 = sadd.s32 %s11, 1
    %s19 = ssub.s32 %s11, %s18
    %p20 = scmp.eq.s32.totalorder %s19, 0
    %s22 = sadd.s32 %s21, 1
    %s23 = scalar_select %p20, %s21, %s22
    %p26 = pneg %p20
    %p27 = scmp.eq.s32.totalorder %s11, 5
    %p28 = por %p26, %p27
    %p29 = scmp.ne.s32.totalorder %s21, %s24
    %p30 = scmp.eq.s32.totalorder %s11, 0
    %p31 = por %p29, %p30
    %p32 = scmp.ne.s32.totalorder %s21, %s24
    %p33 = scmp.eq.s32.totalorder %s16, 5
    %p34 = por %p32, %p33
    %p35 = scmp.ne.s32.totalorder %s24, %s25
    %p36 = scmp.eq.s32.totalorder %s16, 0
    %p37 = por %p35, %p36
    %p38 = scmp.ne.s32.totalorder %s24, %s25
    %p39 = scmp.eq.s32.totalorder %s17, 5
    %p40 = por %p38, %p39
    %p42 = scmp.ne.s32.totalorder %s25, %s41
    %p43 = scmp.eq.s32.totalorder %s17, 0
    %p44 = por %p42, %p43
    %s46 = sadd.s32 %s45, 1
    %p49 = scmp.eq.s32.totalorder %s11, 5
    %p50 = scmp.ne.s32.totalorder %s45, %s47
    %p51 = scmp.eq.s32.totalorder %s11, 0
    %p52 = por %p50, %p51
    %p53 = scmp.ne.s32.totalorder %s45, %s47
    %p54 = scmp.eq.s32.totalorder %s16, 5
    %p55 = por %p53, %p54
    %p56 = scmp.ne.s32.totalorder %s47, %s48
    %p57 = scmp.eq.s32.totalorder %s16, 0
    %p58 = por %p56, %p57
    %p59 = scmp.ne.s32.totalorder %s47, %s48
    %p60 = scmp.eq.s32.totalorder %s17, 5
    %p61 = por %p59, %p60
    %p63 = scmp.ne.s32.totalorder %s48, %s62
    %p64 = scmp.eq.s32.totalorder %s17, 0
    %p65 = por %p63, %p64
    %s67 = sadd.s32 %s66, 1
    %p70 = scmp.eq.s32.totalorder %s11, 5
    %p71 = scmp.ne.s32.totalorder %s66, %s68
    %p72 = scmp.eq.s32.totalorder %s11, 0
    %p73 = por %p71, %p72
    %p74 = scmp.ne.s32.totalorder %s66, %s68
    %p75 = scmp.eq.s32.totalorder %s16, 5
    %p76 = por %p74, %p75
    %p77 = scmp.ne.s32.totalorder %s68, %s69
    %p78 = scmp.eq.s32.totalorder %s16, 0
    %p79 = por %p77, %p78
    %p80 = scmp.ne.s32.totalorder %s68, %s69
    %p81 = scmp.eq.s32.totalorder %s17, 5
    %p82 = por %p80, %p81
    %p84 = scmp.ne.s32.totalorder %s69, %s83
    %p85 = scmp.eq.s32.totalorder %s17, 0
    %p86 = por %p84, %p85
    %s88 = sadd.s32 %s87, 1
    %p91 = scmp.eq.s32.totalorder %s11, 5
    %p92 = scmp.ne.s32.totalorder %s87, %s89
    %p93 = scmp.eq.s32.totalorder %s11, 0
    %p94 = por %p92, %p93
    %p95 = scmp.ne.s32.totalorder %s87, %s89
    %p96 = scmp.eq.s32.totalorder %s16, 5
    %p97 = por %p95, %p96
    %p98 = scmp.ne.s32.totalorder %s89, %s90
    %p99 = scmp.eq.s32.totalorder %s16, 0
    %p100 = por %p98, %p99
    %p101 = scmp.ne.s32.totalorder %s89, %s90
    %p102 = scmp.eq.s32.totalorder %s17, 5
    %p103 = por %p101, %p102
    %p105 = scmp.ne.s32.totalorder %s90, %s104
    %p106 = scmp.eq.s32.totalorder %s17, 0
    %p107 = por %p105, %p106
    %s109 = sadd.s32 %s108, 1
    %p112 = scmp.eq.s32.totalorder %s11, 5
    %p113 = scmp.ne.s32.totalorder %s108, %s110
    %p114 = scmp.eq.s32.totalorder %s11, 0
    %p115 = por %p113, %p114
    %p116 = scmp.ne.s32.totalorder %s108, %s110
    %p117 = scmp.eq.s32.totalorder %s16, 5
    %p118 = por %p116, %p117
    %p119 = scmp.ne.s32.totalorder %s110, %s111
    %p120 = scmp.eq.s32.totalorder %s16, 0
    %p121 = por %p119, %p120
    %p122 = scmp.ne.s32.totalorder %s110, %s111
    %p123 = scmp.eq.s32.totalorder %s17, 5
    %p124 = por %p122, %p123
    %p126 = scmp.ne.s32.totalorder %s111, %s125
    %p127 = scmp.eq.s32.totalorder %s17, 0
    %p128 = por %p126, %p127
    %s129 = ssub.s32 %s11, %s18
    %p130 = scmp.eq.s32.totalorder %s129, 0
    %s132 = sadd.s32 %s131, 1
    %s133 = scalar_select %p130, %s131, %s132
    %p136 = pneg %p130
    %p137 = scmp.eq.s32.totalorder %s11, 5
    %p138 = por %p136, %p137
    %p139 = scmp.ne.s32.totalorder %s131, %s134
    %p140 = scmp.eq.s32.totalorder %s11, 0
    %p141 = por %p139, %p140
    %p142 = scmp.ne.s32.totalorder %s131, %s134
    %p143 = scmp.eq.s32.totalorder %s16, 5
    %p144 = por %p142, %p143
    %p145 = scmp.ne.s32.totalorder %s134, %s135
    %p146 = scmp.eq.s32.totalorder %s16, 0
    %p147 = por %p145, %p146
    %p148 = scmp.ne.s32.totalorder %s134, %s135
    %p149 = scmp.eq.s32.totalorder %s17, 5
    %p150 = por %p148, %p149
    %p152 = scmp.ne.s32.totalorder %s135, %s151
    %p153 = scmp.eq.s32.totalorder %s17, 0
    %p154 = por %p152, %p153
    %p155 = scmp.le.s32.totalorder 1, %s11
    %p156 = scmp.lt.s32.totalorder %s11, 7
    %p157 = pnand %p155, %p156
    %p158 = pneg %p157
    // Predicated region
    $region9: #{cnn_mlp_forward.5} parent=5 // pred_check
      _
    $region10: #{cnn_mlp_forward.5} parent=5 // pred_check_branch
      %160 = sbr.rel (%p157) target = $region12
    $region11: #{cnn_mlp_forward.5} parent=5 // pred_region
      %s161 = ssub.s32 %s11, 1
      // Predicated region
      $region13: #{cnn_mlp_forward.5} parent=11 // pred_check
        %p162 = pneg %p58
      $region14: #{cnn_mlp_forward.5} parent=11 // pred_check_branch
        %164 = sbr.rel (%p162) target = $region16
      $region15: #{cnn_mlp_forward.5} parent=11 // pred_region
        _
      $region16: #{cnn_mlp_forward.5} parent=11 // pred_fallthru
        _
      // Predicated region
      $region17: #{cnn_mlp_forward.5} parent=11 // pred_check
        %p165 = pneg %p79
      $region18: #{cnn_mlp_forward.5} parent=11 // pred_check_branch
        %167 = sbr.rel (%p165) target = $region20
      $region19: #{cnn_mlp_forward.5} parent=11 // pred_region
        _
      $region20: #{cnn_mlp_forward.5} parent=11 // pred_fallthru
        _
      // Predicated region
      $region21: #{cnn_mlp_forward.5} parent=11 // pred_check
        %p168 = pneg %p100
      $region22: #{cnn_mlp_forward.5} parent=11 // pred_check_branch
        %170 = sbr.rel (%p168) target = $region24
      $region23: #{cnn_mlp_forward.5} parent=11 // pred_region
        _
      $region24: #{cnn_mlp_forward.5} parent=11 // pred_fallthru
        _
      // Predicated region
      $region25: #{cnn_mlp_forward.5} parent=11 // pred_check
        %p171 = pneg %p121
      $region26: #{cnn_mlp_forward.5} parent=11 // pred_check_branch
        %173 = sbr.rel (%p171) target = $region28
      $region27: #{cnn_mlp_forward.5} parent=11 // pred_region
        _
      $region28: #{cnn_mlp_forward.5} parent=11 // pred_fallthru
        _
    $region12: #{cnn_mlp_forward.5} parent=5 // pred_fallthru
      _
    %p174 = scmp.lt.s32.totalorder %s11, 6
    // Predicated region
    $region29: #{cnn_mlp_forward.5} parent=5 // pred_check
      %p175 = pneg %p174
    $region30: #{cnn_mlp_forward.5} parent=5 // pred_check_branch
      %177 = sbr.rel (%p175) target = $region32
    $region31: #{cnn_mlp_forward.5} parent=5 // pred_region
      // Predicated region
      $region33: #{cnn_mlp_forward.5} parent=31 // pred_check
        %p178 = pneg %p31
      $region34: #{cnn_mlp_forward.5} parent=31 // pred_check_branch
        %180 = sbr.rel (%p178) target = $region36
      $region35: #{cnn_mlp_forward.5} parent=31 // pred_region
        %s181 = smul.u32 64, %s11
        %p182 = scmp.lt.s32.totalorder %s181, 383
        %s183 = scalar_select %p182, %s181, 383
        %s184 = smul.addr %s183, 4
        %s185 = scalar_lea.vmem %s0, %s184
        %s186 = smul.u32 64, %s11
      $region36: #{cnn_mlp_forward.5} parent=31 // pred_fallthru
        _
    $region32: #{cnn_mlp_forward.5} parent=5 // pred_fallthru
      _
    %p187 = scmp.le.s32.totalorder 1, %s11
    %p188 = scmp.lt.s32.totalorder %s11, 7
    %p189 = pnand %p187, %p188
    %p190 = pneg %p189
    // Predicated region
    $region37: #{cnn_mlp_forward.5} parent=5 // pred_check
      _
    $region38: #{cnn_mlp_forward.5} parent=5 // pred_check_branch
      %192 = sbr.rel (%p189) target = $region40
    $region39: #{cnn_mlp_forward.5} parent=5 // pred_region
      %s193 = ssub.s32 %s11, 1
      %s194 = smul.u32 64, %s16
      %p195 = scmp.lt.s32.totalorder %s194, 383
      %s196 = scalar_select %p195, %s194, 383
      %s197 = smul.addr %s196, 4
      %s198 = scalar_lea.vmem %s0, %s197
      %p199 = pneg %p37
      %p200 = pneg %p34
      %p201 = pneg %p58
      %p202 = pneg %p55
      %p203 = pneg %p79
      %p204 = pneg %p76
      %p205 = pneg %p100
      %p206 = pneg %p97
      %p207 = pneg %p121
      %p208 = pneg %p118
      %p209 = pneg %p147
      %p210 = pneg %p144
      %s211 = smul.u32 64, %s16
      %p212 = scmp.lt.s32.totalorder %s211, 383
      %s213 = scalar_select %p212, %s211, 383
      %s214 = smul.addr %s213, 8
      %s215 = scalar_lea.vmem %s5, %s214
      %s216 = smul.u32 64, %s16
      %p217 = scmp.lt.s32.totalorder %s216, 383
      %s218 = scalar_select %p217, %s216, 383
      %s219 = smul.addr %s218, 4
      %s220 = scalar_lea.vmem %s0, %s219
      %s221 = smul.u32 64, %s16
      %s222 = smul.u32 64, %s16
      %p223 = scmp.lt.s32.totalorder %s222, 383
      %s224 = scalar_select %p223, %s222, 383
      %s225 = smul.addr %s224, 8
      %s226 = scalar_lea.vmem %s5, %s225
      %s227 = smul.u32 64, %s16
      %v229 = vld [vmem:[%s220] sm:$0xf]
      %v230 = vld [vmem:[%s220 + $0x4] sm:$0xf]
      %v231 = vld [vmem:[%s220 + $0x8] sm:$0xf]
      %v232 = vld [vmem:[%s220 + $0xc] sm:$0xf]
      %v233 = vld [vmem:[%s220 + $0x10] sm:$0xf]
      %v234 = vld [vmem:[%s220 + $0x14] sm:$0xf]
      %v235 = vld [vmem:[%s220 + $0x18] sm:$0xf]
      %v236 = vld [vmem:[%s220 + $0x1c] sm:$0xf]
      %v237 = vld [vmem:[%s220 + $0x20] sm:$0xf]
      %v238 = vld [vmem:[%s220 + $0x24] sm:$0xf]
      %v239 = vld [vmem:[%s220 + $0x28] sm:$0xf]
      %v240 = vld [vmem:[%s220 + $0x2c] sm:$0xf]
      %v241 = vld [vmem:[%s220 + $0x30] sm:$0xf]
      %v242 = vld [vmem:[%s220 + $0x34] sm:$0xf]
      %v243 = vld [vmem:[%s220 + $0x38] sm:$0xf]
      %v244 = vld [vmem:[%s220 + $0x3c] sm:$0xf]
      %v245 = vld [vmem:[%s220 + $0x40] sm:$0xf]
      %v246 = vld [vmem:[%s220 + $0x44] sm:$0xf]
      %v247 = vld [vmem:[%s220 + $0x48] sm:$0xf]
      %v248 = vld [vmem:[%s220 + $0x4c] sm:$0xf]
      %v249 = vld [vmem:[%s220 + $0x50] sm:$0xf]
      %v250 = vld [vmem:[%s220 + $0x54] sm:$0xf]
      %v251 = vld [vmem:[%s220 + $0x58] sm:$0xf]
      %v252 = vld [vmem:[%s220 + $0x5c] sm:$0xf]
      %v253 = vld [vmem:[%s220 + $0x60] sm:$0xf]
      %v254 = vld [vmem:[%s220 + $0x64] sm:$0xf]
      %v255 = vld [vmem:[%s220 + $0x68] sm:$0xf]
      %v256 = vld [vmem:[%s220 + $0x6c] sm:$0xf]
      %v257 = vld [vmem:[%s220 + $0x70] sm:$0xf]
      %v258 = vld [vmem:[%s220 + $0x74] sm:$0xf]
      %v259 = vld [vmem:[%s220 + $0x78] sm:$0xf]
      %v260 = vld [vmem:[%s220 + $0x7c] sm:$0xf]
      %v261 = vld [vmem:[%s220 + $0x80] sm:$0xf]
      %v262 = vld [vmem:[%s220 + $0x84] sm:$0xf]
      %v263 = vld [vmem:[%s220 + $0x88] sm:$0xf]
      %v264 = vld [vmem:[%s220 + $0x8c] sm:$0xf]
      %v265 = vld [vmem:[%s220 + $0x90] sm:$0xf]
      %v266 = vld [vmem:[%s220 + $0x94] sm:$0xf]
      %v267 = vld [vmem:[%s220 + $0x98] sm:$0xf]
      %v268 = vld [vmem:[%s220 + $0x9c] sm:$0xf]
      %v269 = vld [vmem:[%s220 + $0xa0] sm:$0xf]
      %v270 = vld [vmem:[%s220 + $0xa4] sm:$0xf]
      %v271 = vld [vmem:[%s220 + $0xa8] sm:$0xf]
      %v272 = vld [vmem:[%s220 + $0xac] sm:$0xf]
      %v273 = vld [vmem:[%s220 + $0xb0] sm:$0xf]
      %v274 = vld [vmem:[%s220 + $0xb4] sm:$0xf]
      %v275 = vld [vmem:[%s220 + $0xb8] sm:$0xf]
      %v276 = vld [vmem:[%s220 + $0xbc] sm:$0xf]
      %v277 = vld [vmem:[%s220 + $0xc0] sm:$0xf]
      %v278 = vld [vmem:[%s220 + $0xc4] sm:$0xf]
      %v279 = vld [vmem:[%s220 + $0xc8] sm:$0xf]
      %v280 = vld [vmem:[%s220 + $0xcc] sm:$0xf]
      %v281 = vld [vmem:[%s220 + $0xd0] sm:$0xf]
      %v282 = vld [vmem:[%s220 + $0xd4] sm:$0xf]
      %v283 = vld [vmem:[%s220 + $0xd8] sm:$0xf]
      %v284 = vld [vmem:[%s220 + $0xdc] sm:$0xf]
      %v285 = vld [vmem:[%s220 + $0xe0] sm:$0xf]
      %v286 = vld [vmem:[%s220 + $0xe4] sm:$0xf]
      %v287 = vld [vmem:[%s220 + $0xe8] sm:$0xf]
      %v288 = vld [vmem:[%s220 + $0xec] sm:$0xf]
      %v289 = vld [vmem:[%s220 + $0xf0] sm:$0xf]
      %v290 = vld [vmem:[%s220 + $0xf4] sm:$0xf]
      %v291 = vld [vmem:[%s220 + $0xf8] sm:$0xf]
      %v292 = vld [vmem:[%s220 + $0xfc] sm:$0xf]
      %v293 = vld [vmem:[%s1] sm:$0xf]
      %v294 = vld [vmem:[%s1 + $0x4] sm:$0xf]
      %v295 = vld [vmem:[%s1 + $0x8] sm:$0xf]
      %v296 = vld [vmem:[%s1 + $0xc] sm:$0x3]
      %v297 = vld [vmem:[%s2] sm:$0x1]
      %v299 = vperm.slane %v297, 0
      %v365 = vunpack.c.l.b16 %v229
      %v366 = vunpack.c.l.b16 %v230
      %v367 = vunpack.c.l.b16 %v231
      %v368 = vunpack.c.l.b16 %v232
      %v369 = vunpack.c.l.b16 %v233
      %v370 = vunpack.c.l.b16 %v234
      %v371 = vunpack.c.l.b16 %v235
      %v372 = vunpack.c.l.b16 %v236
      %v373 = vunpack.c.l.b16 %v237
      %v374 = vunpack.c.l.b16 %v238
      %v375 = vunpack.c.l.b16 %v239
      %v376 = vunpack.c.l.b16 %v240
      %v377 = vunpack.c.l.b16 %v241
      %v378 = vunpack.c.l.b16 %v242
      %v379 = vunpack.c.l.b16 %v243
      %v380 = vunpack.c.l.b16 %v244
      %v381 = vunpack.c.l.b16 %v245
      %v382 = vunpack.c.l.b16 %v246
      %v383 = vunpack.c.l.b16 %v247
      %v384 = vunpack.c.l.b16 %v248
      %v385 = vunpack.c.l.b16 %v249
      %v386 = vunpack.c.l.b16 %v250
      %v387 = vunpack.c.l.b16 %v251
      %v388 = vunpack.c.l.b16 %v252
      %v389 = vunpack.c.l.b16 %v253
      %v390 = vunpack.c.l.b16 %v254
      %v391 = vunpack.c.l.b16 %v255
      %v392 = vunpack.c.l.b16 %v256
      %v393 = vunpack.c.l.b16 %v257
      %v394 = vunpack.c.l.b16 %v258
      %v395 = vunpack.c.l.b16 %v259
      %v396 = vunpack.c.l.b16 %v260
      %v397 = vunpack.c.l.b16 %v261
      %v398 = vunpack.c.l.b16 %v262
      %v399 = vunpack.c.l.b16 %v263
      %v400 = vunpack.c.l.b16 %v264
      %v401 = vunpack.c.l.b16 %v265
      %v402 = vunpack.c.l.b16 %v266
      %v403 = vunpack.c.l.b16 %v267
      %v404 = vunpack.c.l.b16 %v268
      %v405 = vunpack.c.l.b16 %v269
      %v406 = vunpack.c.l.b16 %v270
      %v407 = vunpack.c.l.b16 %v271
      %v408 = vunpack.c.l.b16 %v272
      %v409 = vunpack.c.l.b16 %v273
      %v410 = vunpack.c.l.b16 %v274
      %v411 = vunpack.c.l.b16 %v275
      %v412 = vunpack.c.l.b16 %v276
      %v413 = vunpack.c.l.b16 %v277
      %v414 = vunpack.c.l.b16 %v278
      %v415 = vunpack.c.l.b16 %v279
      %v416 = vunpack.c.l.b16 %v280
      %v417 = vunpack.c.l.b16 %v281
      %v418 = vunpack.c.l.b16 %v282
      %v419 = vunpack.c.l.b16 %v283
      %v420 = vunpack.c.l.b16 %v284
      %v421 = vunpack.c.l.b16 %v285
      %v422 = vunpack.c.l.b16 %v286
      %v423 = vunpack.c.l.b16 %v287
      %v424 = vunpack.c.l.b16 %v288
      %v425 = vunpack.c.l.b16 %v289
      %v426 = vunpack.c.l.b16 %v290
      %v427 = vunpack.c.l.b16 %v291
      %v428 = vunpack.c.l.b16 %v292
      %v429 = vpack.c.b16 %v366, %v365
      %v430 = vpack.c.b16 %v368, %v367
      %v431 = vpack.c.b16 %v370, %v369
      %v432 = vpack.c.b16 %v372, %v371
      %v433 = vpack.c.b16 %v374, %v373
      %v434 = vpack.c.b16 %v376, %v375
      %v435 = vpack.c.b16 %v378, %v377
      %v436 = vpack.c.b16 %v380, %v379
      %v437 = vpack.c.b16 %v382, %v381
      %v438 = vpack.c.b16 %v384, %v383
      %v439 = vpack.c.b16 %v386, %v385
      %v440 = vpack.c.b16 %v388, %v387
      %v441 = vpack.c.b16 %v390, %v389
      %v442 = vpack.c.b16 %v392, %v391
      %v443 = vpack.c.b16 %v394, %v393
      %v444 = vpack.c.b16 %v396, %v395
      %v445 = vpack.c.b16 %v398, %v397
      %v446 = vpack.c.b16 %v400, %v399
      %v447 = vpack.c.b16 %v402, %v401
      %v448 = vpack.c.b16 %v404, %v403
      %v449 = vpack.c.b16 %v406, %v405
      %v450 = vpack.c.b16 %v408, %v407
      %v451 = vpack.c.b16 %v410, %v409
      %v452 = vpack.c.b16 %v412, %v411
      %v453 = vpack.c.b16 %v414, %v413
      %v454 = vpack.c.b16 %v416, %v415
      %v455 = vpack.c.b16 %v418, %v417
      %v456 = vpack.c.b16 %v420, %v419
      %v457 = vpack.c.b16 %v422, %v421
      %v458 = vpack.c.b16 %v424, %v423
      %v459 = vpack.c.b16 %v426, %v425
      %v460 = vpack.c.b16 %v428, %v427
      %v465 = vunpack.c.l.b16 %v293
      %v466 = vunpack.c.l.b16 %v294
      %v467 = vunpack.c.l.b16 %v295
      %v468 = vunpack.c.l.b16 %v296
      %v469 = vpack.c.b16 %v466, %v465
      %v470 = vpack.c.b16 %v468, %v467
      %vm472 = vcmask 220160
      %v474 = vsel %vm472, %v429, 0
      %v477 = vsel %vm472, %v430, 0
      %v480 = vsel %vm472, %v431, 0
      %v483 = vsel %vm472, %v432, 0
      %v486 = vsel %vm472, %v433, 0
      %v489 = vsel %vm472, %v434, 0
      %v492 = vsel %vm472, %v435, 0
      %v495 = vsel %vm472, %v436, 0
      %v498 = vsel %vm472, %v437, 0
      %v501 = vsel %vm472, %v438, 0
      %v504 = vsel %vm472, %v439, 0
      %v507 = vsel %vm472, %v440, 0
      %v510 = vsel %vm472, %v441, 0
      %v513 = vsel %vm472, %v442, 0
      %v516 = vsel %vm472, %v443, 0
      %v519 = vsel %vm472, %v444, 0
      %v522 = vsel %vm472, %v445, 0
      %v525 = vsel %vm472, %v446, 0
      %v528 = vsel %vm472, %v447, 0
      %v531 = vsel %vm472, %v448, 0
      %v534 = vsel %vm472, %v449, 0
      %v537 = vsel %vm472, %v450, 0
      %v540 = vsel %vm472, %v451, 0
      %v543 = vsel %vm472, %v452, 0
      %v546 = vsel %vm472, %v453, 0
      %v549 = vsel %vm472, %v454, 0
      %v552 = vsel %vm472, %v455, 0
      %v555 = vsel %vm472, %v456, 0
      %v558 = vsel %vm472, %v457, 0
      %v561 = vsel %vm472, %v458, 0
      %v564 = vsel %vm472, %v459, 0
      %v567 = vsel %vm472, %v460, 0
      %vm569 = vcmask 1044480
      %vm570 = vcmask 1045504
      %v571 = vsel %vm569, 4294967295, 65535
      %v572 = vsel %vm570, %v571, 0
      %v574 = vand.u32 %v470, %v572
      %576 = vmatpush.bf16.msra.mxu0 0
      %577 = vmatpush.bf16.msra.mxu0 0
      %578 = vmatpush.bf16.msra.mxu0 0
      %579 = vmatpush.bf16.msra.mxu0 0
      %580 = vmatpush.bf16.msra.mxu0 0
      %581 = vmatpush.bf16.msra.mxu0 0
      %582 = vmatpush.bf16.msra.mxu0 %v574
      %583 = vmatpush.bf16.msra.mxu0 %v469
      %584 = vmatmul.bf16.gmra.mxu0 %v474
      %v585 = vpop.f32.mrf.mxu0
      %v586 = vadd.f32 %v299, %v585
      %v587 = vpop.f32.mrf.mxu0
      %v588 = vadd.f32 %v299, %v587
      %589 = vmatmul.bf16.gmra.mxu0 %v477
      %v590 = vpop.f32.mrf.mxu0
      %v591 = vadd.f32 %v299, %v590
      %v592 = vpop.f32.mrf.mxu0
      %v593 = vadd.f32 %v299, %v592
      %594 = vmatmul.bf16.gmra.mxu0 %v480
      %v595 = vpop.f32.mrf.mxu0
      %v596 = vadd.f32 %v299, %v595
      %v597 = vpop.f32.mrf.mxu0
      %v598 = vadd.f32 %v299, %v597
      %599 = vmatmul.bf16.gmra.mxu0 %v483
      %v600 = vpop.f32.mrf.mxu0
      %v601 = vadd.f32 %v299, %v600
      %v602 = vpop.f32.mrf.mxu0
      %v603 = vadd.f32 %v299, %v602
      %604 = vmatmul.bf16.gmra.mxu0 %v486
      %v605 = vpop.f32.mrf.mxu0
      %v606 = vadd.f32 %v299, %v605
      %v607 = vpop.f32.mrf.mxu0
      %v608 = vadd.f32 %v299, %v607
      %609 = vmatmul.bf16.gmra.mxu0 %v489
      %v610 = vpop.f32.mrf.mxu0
      %v611 = vadd.f32 %v299, %v610
      %v612 = vpop.f32.mrf.mxu0
      %v613 = vadd.f32 %v299, %v612
      %614 = vmatmul.bf16.gmra.mxu0 %v492
      %v615 = vpop.f32.mrf.mxu0
      %v616 = vadd.f32 %v299, %v615
      %v617 = vpop.f32.mrf.mxu0
      %v618 = vadd.f32 %v299, %v617
      %619 = vmatmul.bf16.gmra.mxu0 %v495
      %v620 = vpop.f32.mrf.mxu0
      %v621 = vadd.f32 %v299, %v620
      %v622 = vpop.f32.mrf.mxu0
      %v623 = vadd.f32 %v299, %v622
      %624 = vmatmul.bf16.gmra.mxu0 %v498
      %v625 = vpop.f32.mrf.mxu0
      %v626 = vadd.f32 %v299, %v625
      %v627 = vpop.f32.mrf.mxu0
      %v628 = vadd.f32 %v299, %v627
      %629 = vmatmul.bf16.gmra.mxu0 %v501
      %v630 = vpop.f32.mrf.mxu0
      %v631 = vadd.f32 %v299, %v630
      %v632 = vpop.f32.mrf.mxu0
      %v633 = vadd.f32 %v299, %v632
      %634 = vmatmul.bf16.gmra.mxu0 %v504
      %v635 = vpop.f32.mrf.mxu0
      %v636 = vadd.f32 %v299, %v635
      %v637 = vpop.f32.mrf.mxu0
      %v638 = vadd.f32 %v299, %v637
      %639 = vmatmul.bf16.gmra.mxu0 %v507
      %v640 = vpop.f32.mrf.mxu0
      %v641 = vadd.f32 %v299, %v640
      %v642 = vpop.f32.mrf.mxu0
      %v643 = vadd.f32 %v299, %v642
      %644 = vmatmul.bf16.gmra.mxu0 %v510
      %v645 = vpop.f32.mrf.mxu0
      %v646 = vadd.f32 %v299, %v645
      %v647 = vpop.f32.mrf.mxu0
      %v648 = vadd.f32 %v299, %v647
      %649 = vmatmul.bf16.gmra.mxu0 %v513
      %v650 = vpop.f32.mrf.mxu0
      %v651 = vadd.f32 %v299, %v650
      %v652 = vpop.f32.mrf.mxu0
      %v653 = vadd.f32 %v299, %v652
      %654 = vmatmul.bf16.gmra.mxu0 %v516
      %v655 = vpop.f32.mrf.mxu0
      %v656 = vadd.f32 %v299, %v655
      %v657 = vpop.f32.mrf.mxu0
      %v658 = vadd.f32 %v299, %v657
      %659 = vmatmul.bf16.gmra.mxu0 %v519
      %v660 = vpop.f32.mrf.mxu0
      %v661 = vadd.f32 %v299, %v660
      %v662 = vpop.f32.mrf.mxu0
      %v663 = vadd.f32 %v299, %v662
      %664 = vmatmul.bf16.gmra.mxu0 %v522
      %v665 = vpop.f32.mrf.mxu0
      %v666 = vadd.f32 %v299, %v665
      %v667 = vpop.f32.mrf.mxu0
      %v668 = vadd.f32 %v299, %v667
      %669 = vmatmul.bf16.gmra.mxu0 %v525
      %v670 = vpop.f32.mrf.mxu0
      %v671 = vadd.f32 %v299, %v670
      %v672 = vpop.f32.mrf.mxu0
      %v673 = vadd.f32 %v299, %v672
      %674 = vmatmul.bf16.gmra.mxu0 %v528
      %v675 = vpop.f32.mrf.mxu0
      %v676 = vadd.f32 %v299, %v675
      %v677 = vpop.f32.mrf.mxu0
      %v678 = vadd.f32 %v299, %v677
      %679 = vmatmul.bf16.gmra.mxu0 %v531
      %v680 = vpop.f32.mrf.mxu0
      %v681 = vadd.f32 %v299, %v680
      %v682 = vpop.f32.mrf.mxu0
      %v683 = vadd.f32 %v299, %v682
      %684 = vmatmul.bf16.gmra.mxu0 %v534
      %v685 = vpop.f32.mrf.mxu0
      %v686 = vadd.f32 %v299, %v685
      %v687 = vpop.f32.mrf.mxu0
      %v688 = vadd.f32 %v299, %v687
      %689 = vmatmul.bf16.gmra.mxu0 %v537
      %v690 = vpop.f32.mrf.mxu0
      %v691 = vadd.f32 %v299, %v690
      %v692 = vpop.f32.mrf.mxu0
      %v693 = vadd.f32 %v299, %v692
      %694 = vmatmul.bf16.gmra.mxu0 %v540
      %v695 = vpop.f32.mrf.mxu0
      %v696 = vadd.f32 %v299, %v695
      %v697 = vpop.f32.mrf.mxu0
      %v698 = vadd.f32 %v299, %v697
      %699 = vmatmul.bf16.gmra.mxu0 %v543
      %v700 = vpop.f32.mrf.mxu0
      %v701 = vadd.f32 %v299, %v700
      %v702 = vpop.f32.mrf.mxu0
      %v703 = vadd.f32 %v299, %v702
      %704 = vmatmul.bf16.gmra.mxu0 %v546
      %v705 = vpop.f32.mrf.mxu0
      %v706 = vadd.f32 %v299, %v705
      %v707 = vpop.f32.mrf.mxu0
      %v708 = vadd.f32 %v299, %v707
      %709 = vmatmul.bf16.gmra.mxu0 %v549
      %v710 = vpop.f32.mrf.mxu0
      %v711 = vadd.f32 %v299, %v710
      %v712 = vpop.f32.mrf.mxu0
      %v713 = vadd.f32 %v299, %v712
      %714 = vmatmul.bf16.gmra.mxu0 %v552
      %v715 = vpop.f32.mrf.mxu0
      %v716 = vadd.f32 %v299, %v715
      %v717 = vpop.f32.mrf.mxu0
      %v718 = vadd.f32 %v299, %v717
      %719 = vmatmul.bf16.gmra.mxu0 %v555
      %v720 = vpop.f32.mrf.mxu0
      %v721 = vadd.f32 %v299, %v720
      %v722 = vpop.f32.mrf.mxu0
      %v723 = vadd.f32 %v299, %v722
      %724 = vmatmul.bf16.gmra.mxu0 %v558
      %v725 = vpop.f32.mrf.mxu0
      %v726 = vadd.f32 %v299, %v725
      %v727 = vpop.f32.mrf.mxu0
      %v728 = vadd.f32 %v299, %v727
      %729 = vmatmul.bf16.gmra.mxu0 %v561
      %v730 = vpop.f32.mrf.mxu0
      %v731 = vadd.f32 %v299, %v730
      %v732 = vpop.f32.mrf.mxu0
      %v733 = vadd.f32 %v299, %v732
      %734 = vmatmul.bf16.gmra.mxu0 %v564
      %v735 = vpop.f32.mrf.mxu0
      %v736 = vadd.f32 %v299, %v735
      %v737 = vpop.f32.mrf.mxu0
      %v738 = vadd.f32 %v299, %v737
      %739 = vmatmul.bf16.gmra.mxu0 %v567
      %v740 = vpop.f32.mrf.mxu0
      %v741 = vadd.f32 %v299, %v740
      %v742 = vpop.f32.mrf.mxu0
      %v743 = vadd.f32 %v299, %v742
      %744 = vdwg.mxu0
      %v745 = vmax.f32 %v586, 0.0
      %v746 = vmax.f32 %v588, 0.0
      %v747 = vmax.f32 %v591, 0.0
      %v748 = vmax.f32 %v593, 0.0
      %v749 = vmax.f32 %v596, 0.0
      %v750 = vmax.f32 %v598, 0.0
      %v751 = vmax.f32 %v601, 0.0
      %v752 = vmax.f32 %v603, 0.0
      %v753 = vmax.f32 %v606, 0.0
      %v754 = vmax.f32 %v608, 0.0
      %v755 = vmax.f32 %v611, 0.0
      %v756 = vmax.f32 %v613, 0.0
      %v757 = vmax.f32 %v616, 0.0
      %v758 = vmax.f32 %v618, 0.0
      %v759 = vmax.f32 %v621, 0.0
      %v760 = vmax.f32 %v623, 0.0
      %v761 = vmax.f32 %v626, 0.0
      %v762 = vmax.f32 %v628, 0.0
      %v763 = vmax.f32 %v631, 0.0
      %v764 = vmax.f32 %v633, 0.0
      %v765 = vmax.f32 %v636, 0.0
      %v766 = vmax.f32 %v638, 0.0
      %v767 = vmax.f32 %v641, 0.0
      %v768 = vmax.f32 %v643, 0.0
      %v769 = vmax.f32 %v646, 0.0
      %v770 = vmax.f32 %v648, 0.0
      %v771 = vmax.f32 %v651, 0.0
      %v772 = vmax.f32 %v653, 0.0
      %v773 = vmax.f32 %v656, 0.0
      %v774 = vmax.f32 %v658, 0.0
      %v775 = vmax.f32 %v661, 0.0
      %v776 = vmax.f32 %v663, 0.0
      %v777 = vmax.f32 %v666, 0.0
      %v778 = vmax.f32 %v668, 0.0
      %v779 = vmax.f32 %v671, 0.0
      %v780 = vmax.f32 %v673, 0.0
      %v781 = vmax.f32 %v676, 0.0
      %v782 = vmax.f32 %v678, 0.0
      %v783 = vmax.f32 %v681, 0.0
      %v784 = vmax.f32 %v683, 0.0
      %v785 = vmax.f32 %v686, 0.0
      %v786 = vmax.f32 %v688, 0.0
      %v787 = vmax.f32 %v691, 0.0
      %v788 = vmax.f32 %v693, 0.0
      %v789 = vmax.f32 %v696, 0.0
      %v790 = vmax.f32 %v698, 0.0
      %v791 = vmax.f32 %v701, 0.0
      %v792 = vmax.f32 %v703, 0.0
      %v793 = vmax.f32 %v706, 0.0
      %v794 = vmax.f32 %v708, 0.0
      %v795 = vmax.f32 %v711, 0.0
      %v796 = vmax.f32 %v713, 0.0
      %v797 = vmax.f32 %v716, 0.0
      %v798 = vmax.f32 %v718, 0.0
      %v799 = vmax.f32 %v721, 0.0
      %v800 = vmax.f32 %v723, 0.0
      %v801 = vmax.f32 %v726, 0.0
      %v802 = vmax.f32 %v728, 0.0
      %v803 = vmax.f32 %v731, 0.0
      %v804 = vmax.f32 %v733, 0.0
      %v805 = vmax.f32 %v736, 0.0
      %v806 = vmax.f32 %v738, 0.0
      %v807 = vmax.f32 %v741, 0.0
      %v808 = vmax.f32 %v743, 0.0
      %v809 = vld [vmem:[%s3] sm:$0x1]
      %v811 = vperm.slane %v809, 0
      %v813 = vmul.f32 %v745, %v811
      %v814 = vmul.f32 %v746, %v811
      %v815 = vmul.f32 %v747, %v811
      %v816 = vmul.f32 %v748, %v811
      %v817 = vmul.f32 %v749, %v811
      %v818 = vmul.f32 %v750, %v811
      %v819 = vmul.f32 %v751, %v811
      %v820 = vmul.f32 %v752, %v811
      %v821 = vmul.f32 %v753, %v811
      %v822 = vmul.f32 %v754, %v811
      %v823 = vmul.f32 %v755, %v811
      %v824 = vmul.f32 %v756, %v811
      %v825 = vmul.f32 %v757, %v811
      %v826 = vmul.f32 %v758, %v811
      %v827 = vmul.f32 %v759, %v811
      %v828 = vmul.f32 %v760, %v811
      %v829 = vmul.f32 %v761, %v811
      %v830 = vmul.f32 %v762, %v811
      %v831 = vmul.f32 %v763, %v811
      %v832 = vmul.f32 %v764, %v811
      %v833 = vmul.f32 %v765, %v811
      %v834 = vmul.f32 %v766, %v811
      %v835 = vmul.f32 %v767, %v811
      %v836 = vmul.f32 %v768, %v811
      %v837 = vmul.f32 %v769, %v811
      %v838 = vmul.f32 %v770, %v811
      %v839 = vmul.f32 %v771, %v811
      %v840 = vmul.f32 %v772, %v811
      %v841 = vmul.f32 %v773, %v811
      %v842 = vmul.f32 %v774, %v811
      %v843 = vmul.f32 %v775, %v811
      %v844 = vmul.f32 %v776, %v811
      %v845 = vmul.f32 %v777, %v811
      %v846 = vmul.f32 %v778, %v811
      %v847 = vmul.f32 %v779, %v811
      %v848 = vmul.f32 %v780, %v811
      %v849 = vmul.f32 %v781, %v811
      %v850 = vmul.f32 %v782, %v811
      %v851 = vmul.f32 %v783, %v811
      %v852 = vmul.f32 %v784, %v811
      %v853 = vmul.f32 %v785, %v811
      %v854 = vmul.f32 %v786, %v811
      %v855 = vmul.f32 %v787, %v811
      %v856 = vmul.f32 %v788, %v811
      %v857 = vmul.f32 %v789, %v811
      %v858 = vmul.f32 %v790, %v811
      %v859 = vmul.f32 %v791, %v811
      %v860 = vmul.f32 %v792, %v811
      %v861 = vmul.f32 %v793, %v811
      %v862 = vmul.f32 %v794, %v811
      %v863 = vmul.f32 %v795, %v811
      %v864 = vmul.f32 %v796, %v811
      %v865 = vmul.f32 %v797, %v811
      %v866 = vmul.f32 %v798, %v811
      %v867 = vmul.f32 %v799, %v811
      %v868 = vmul.f32 %v800, %v811
      %v869 = vmul.f32 %v801, %v811
      %v870 = vmul.f32 %v802, %v811
      %v871 = vmul.f32 %v803, %v811
      %v872 = vmul.f32 %v804, %v811
      %v873 = vmul.f32 %v805, %v811
      %v874 = vmul.f32 %v806, %v811
      %v875 = vmul.f32 %v807, %v811
      %v876 = vmul.f32 %v808, %v811
      %v877 = vld [vmem:[%s4] sm:$0x1]
      %v879 = vperm.slane %v877, 0
      %v881 = vadd.f32 %v813, %v879
      %v882 = vadd.f32 %v814, %v879
      %v883 = vadd.f32 %v815, %v879
      %v884 = vadd.f32 %v816, %v879
      %v885 = vadd.f32 %v817, %v879
      %v886 = vadd.f32 %v818, %v879
      %v887 = vadd.f32 %v819, %v879
      %v888 = vadd.f32 %v820, %v879
      %v889 = vadd.f32 %v821, %v879
      %v890 = vadd.f32 %v822, %v879
      %v891 = vadd.f32 %v823, %v879
      %v892 = vadd.f32 %v824, %v879
      %v893 = vadd.f32 %v825, %v879
      %v894 = vadd.f32 %v826, %v879
      %v895 = vadd.f32 %v827, %v879
      %v896 = vadd.f32 %v828, %v879
      %v897 = vadd.f32 %v829, %v879
      %v898 = vadd.f32 %v830, %v879
      %v899 = vadd.f32 %v831, %v879
      %v900 = vadd.f32 %v832, %v879
      %v901 = vadd.f32 %v833, %v879
      %v902 = vadd.f32 %v834, %v879
      %v903 = vadd.f32 %v835, %v879
      %v904 = vadd.f32 %v836, %v879
      %v905 = vadd.f32 %v837, %v879
      %v906 = vadd.f32 %v838, %v879
      %v907 = vadd.f32 %v839, %v879
      %v908 = vadd.f32 %v840, %v879
      %v909 = vadd.f32 %v841, %v879
      %v910 = vadd.f32 %v842, %v879
      %v911 = vadd.f32 %v843, %v879
      %v912 = vadd.f32 %v844, %v879
      %v913 = vadd.f32 %v845, %v879
      %v914 = vadd.f32 %v846, %v879
      %v915 = vadd.f32 %v847, %v879
      %v916 = vadd.f32 %v848, %v879
      %v917 = vadd.f32 %v849, %v879
      %v918 = vadd.f32 %v850, %v879
      %v919 = vadd.f32 %v851, %v879
      %v920 = vadd.f32 %v852, %v879
      %v921 = vadd.f32 %v853, %v879
      %v922 = vadd.f32 %v854, %v879
      %v923 = vadd.f32 %v855, %v879
      %v924 = vadd.f32 %v856, %v879
      %v925 = vadd.f32 %v857, %v879
      %v926 = vadd.f32 %v858, %v879
      %v927 = vadd.f32 %v859, %v879
      %v928 = vadd.f32 %v860, %v879
      %v929 = vadd.f32 %v861, %v879
      %v930 = vadd.f32 %v862, %v879
      %v931 = vadd.f32 %v863, %v879
      %v932 = vadd.f32 %v864, %v879
      %v933 = vadd.f32 %v865, %v879
      %v934 = vadd.f32 %v866, %v879
      %v935 = vadd.f32 %v867, %v879
      %v936 = vadd.f32 %v868, %v879
      %v937 = vadd.f32 %v869, %v879
      %v938 = vadd.f32 %v870, %v879
      %v939 = vadd.f32 %v871, %v879
      %v940 = vadd.f32 %v872, %v879
      %v941 = vadd.f32 %v873, %v879
      %v942 = vadd.f32 %v874, %v879
      %v943 = vadd.f32 %v875, %v879
      %v944 = vadd.f32 %v876, %v879
      %vm945 = vcmask 195584
      %946 = vst.msk [vmem:[%s226] sm:$0xff] %vm945, %v881
      %947 = vst.msk [vmem:[%s226 + $0x8] sm:$0xff] %vm945, %v882
      %948 = vst.msk [vmem:[%s226 + $0x10] sm:$0xff] %vm945, %v883
      %949 = vst.msk [vmem:[%s226 + $0x18] sm:$0xff] %vm945, %v884
      %950 = vst.msk [vmem:[%s226 + $0x20] sm:$0xff] %vm945, %v885
      %951 = vst.msk [vmem:[%s226 + $0x28] sm:$0xff] %vm945, %v886
      %952 = vst.msk [vmem:[%s226 + $0x30] sm:$0xff] %vm945, %v887
      %953 = vst.msk [vmem:[%s226 + $0x38] sm:$0xff] %vm945, %v888
      %954 = vst.msk [vmem:[%s226 + $0x40] sm:$0xff] %vm945, %v889
      %955 = vst.msk [vmem:[%s226 + $0x48] sm:$0xff] %vm945, %v890
      %956 = vst.msk [vmem:[%s226 + $0x50] sm:$0xff] %vm945, %v891
      %957 = vst.msk [vmem:[%s226 + $0x58] sm:$0xff] %vm945, %v892
      %958 = vst.msk [vmem:[%s226 + $0x60] sm:$0xff] %vm945, %v893
      %959 = vst.msk [vmem:[%s226 + $0x68] sm:$0xff] %vm945, %v894
      %960 = vst.msk [vmem:[%s226 + $0x70] sm:$0xff] %vm945, %v895
      %961 = vst.msk [vmem:[%s226 + $0x78] sm:$0xff] %vm945, %v896
      %962 = vst.msk [vmem:[%s226 + $0x80] sm:$0xff] %vm945, %v897
      %963 = vst.msk [vmem:[%s226 + $0x88] sm:$0xff] %vm945, %v898
      %964 = vst.msk [vmem:[%s226 + $0x90] sm:$0xff] %vm945, %v899
      %965 = vst.msk [vmem:[%s226 + $0x98] sm:$0xff] %vm945, %v900
      %966 = vst.msk [vmem:[%s226 + $0xa0] sm:$0xff] %vm945, %v901
      %967 = vst.msk [vmem:[%s226 + $0xa8] sm:$0xff] %vm945, %v902
      %968 = vst.msk [vmem:[%s226 + $0xb0] sm:$0xff] %vm945, %v903
      %969 = vst.msk [vmem:[%s226 + $0xb8] sm:$0xff] %vm945, %v904
      %970 = vst.msk [vmem:[%s226 + $0xc0] sm:$0xff] %vm945, %v905
      %971 = vst.msk [vmem:[%s226 + $0xc8] sm:$0xff] %vm945, %v906
      %972 = vst.msk [vmem:[%s226 + $0xd0] sm:$0xff] %vm945, %v907
      %973 = vst.msk [vmem:[%s226 + $0xd8] sm:$0xff] %vm945, %v908
      %974 = vst.msk [vmem:[%s226 + $0xe0] sm:$0xff] %vm945, %v909
      %975 = vst.msk [vmem:[%s226 + $0xe8] sm:$0xff] %vm945, %v910
      %976 = vst.msk [vmem:[%s226 + $0xf0] sm:$0xff] %vm945, %v911
      %977 = vst.msk [vmem:[%s226 + $0xf8] sm:$0xff] %vm945, %v912
      %978 = vst.msk [vmem:[%s226 + $0x100] sm:$0xff] %vm945, %v913
      %979 = vst.msk [vmem:[%s226 + $0x108] sm:$0xff] %vm945, %v914
      %980 = vst.msk [vmem:[%s226 + $0x110] sm:$0xff] %vm945, %v915
      %981 = vst.msk [vmem:[%s226 + $0x118] sm:$0xff] %vm945, %v916
      %982 = vst.msk [vmem:[%s226 + $0x120] sm:$0xff] %vm945, %v917
      %983 = vst.msk [vmem:[%s226 + $0x128] sm:$0xff] %vm945, %v918
      %984 = vst.msk [vmem:[%s226 + $0x130] sm:$0xff] %vm945, %v919
      %985 = vst.msk [vmem:[%s226 + $0x138] sm:$0xff] %vm945, %v920
      %986 = vst.msk [vmem:[%s226 + $0x140] sm:$0xff] %vm945, %v921
      %987 = vst.msk [vmem:[%s226 + $0x148] sm:$0xff] %vm945, %v922
      %988 = vst.msk [vmem:[%s226 + $0x150] sm:$0xff] %vm945, %v923
      %989 = vst.msk [vmem:[%s226 + $0x158] sm:$0xff] %vm945, %v924
      %990 = vst.msk [vmem:[%s226 + $0x160] sm:$0xff] %vm945, %v925
      %991 = vst.msk [vmem:[%s226 + $0x168] sm:$0xff] %vm945, %v926
      %992 = vst.msk [vmem:[%s226 + $0x170] sm:$0xff] %vm945, %v927
      %993 = vst.msk [vmem:[%s226 + $0x178] sm:$0xff] %vm945, %v928
      %994 = vst.msk [vmem:[%s226 + $0x180] sm:$0xff] %vm945, %v929
      %995 = vst.msk [vmem:[%s226 + $0x188] sm:$0xff] %vm945, %v930
      %996 = vst.msk [vmem:[%s226 + $0x190] sm:$0xff] %vm945, %v931
      %997 = vst.msk [vmem:[%s226 + $0x198] sm:$0xff] %vm945, %v932
      %998 = vst.msk [vmem:[%s226 + $0x1a0] sm:$0xff] %vm945, %v933
      %999 = vst.msk [vmem:[%s226 + $0x1a8] sm:$0xff] %vm945, %v934
      %1000 = vst.msk [vmem:[%s226 + $0x1b0] sm:$0xff] %vm945, %v935
      %1001 = vst.msk [vmem:[%s226 + $0x1b8] sm:$0xff] %vm945, %v936
      %1002 = vst.msk [vmem:[%s226 + $0x1c0] sm:$0xff] %vm945, %v937
      %1003 = vst.msk [vmem:[%s226 + $0x1c8] sm:$0xff] %vm945, %v938
      %1004 = vst.msk [vmem:[%s226 + $0x1d0] sm:$0xff] %vm945, %v939
      %1005 = vst.msk [vmem:[%s226 + $0x1d8] sm:$0xff] %vm945, %v940
      %1006 = vst.msk [vmem:[%s226 + $0x1e0] sm:$0xff] %vm945, %v941
      %1007 = vst.msk [vmem:[%s226 + $0x1e8] sm:$0xff] %vm945, %v942
      %1008 = vst.msk [vmem:[%s226 + $0x1f0] sm:$0xff] %vm945, %v943
      %1009 = vst.msk [vmem:[%s226 + $0x1f8] sm:$0xff] %vm945, %v944
      %s1010 = smul.u32 64, %s16
      %p1011 = scmp.lt.s32.totalorder %s1010, 383
      %s1012 = scalar_select %p1011, %s1010, 383
      %s1013 = smul.addr %s1012, 8
      %s1014 = scalar_lea.vmem %s5, %s1013
      // Predicated region
      $region41: #{cnn_mlp_forward.5} parent=39 // pred_check
        %p1015 = pneg %p144
      $region42: #{cnn_mlp_forward.5} parent=39 // pred_check_branch
        %1017 = sbr.rel (%p1015) target = $region44
      $region43: #{cnn_mlp_forward.5} parent=39 // pred_region
        %s1018 = smul.u32 64, %s16
      $region44: #{cnn_mlp_forward.5} parent=39 // pred_fallthru
        _
    $region40: #{cnn_mlp_forward.5} parent=5 // pred_fallthru
      _
    %p1019 = scmp.le.s32.totalorder 2, %s11
    // Predicated region
    $region45: #{cnn_mlp_forward.5} parent=5 // pred_check
      %p1020 = pneg %p1019
    $region46: #{cnn_mlp_forward.5} parent=5 // pred_check_branch
      %1022 = sbr.rel (%p1020) target = $region48
    $region47: #{cnn_mlp_forward.5} parent=5 // pred_region
      %s1023 = ssub.s32 %s11, 2
      // Predicated region
      $region49: #{cnn_mlp_forward.5} parent=47 // pred_check
        %p1024 = pneg %p150
      $region50: #{cnn_mlp_forward.5} parent=47 // pred_check_branch
        %1026 = sbr.rel (%p1024) target = $region52
      $region51: #{cnn_mlp_forward.5} parent=47 // pred_region
        %s1027 = smul.u32 64, %s17
        %p1028 = scmp.lt.s32.totalorder %s1027, 383
        %s1029 = scalar_select %p1028, %s1027, 383
        %s1030 = smul.addr %s1029, 8
        %s1031 = scalar_lea.vmem %s5, %s1030
      $region52: #{cnn_mlp_forward.5} parent=47 // pred_fallthru
        _
    $region48: #{cnn_mlp_forward.5} parent=5 // pred_fallthru
      _
  $region6: #{cnn_mlp_forward.5} parent=0 // loop_footer
    %s15 = sadd.s32 1, %s11
  $region7: #{cnn_mlp_forward.5} parent=0 // loop_footer_branch
    %10 = sbr.rel target = $region3
  $region8: #{cnn_mlp_forward.5} parent=0 // loop_exit
    _

// kernel: cnn_mlp_forward.6
$region0: #{cnn_mlp_forward.6}
  #allocation0 [shape = 'u32[]', space=smem, size = 0x4, offset = 0x4, fixed_abs, tag = 'smem constant byte address 0x4 - core index']
  #allocation1 [shape = 'u32[72,128]{1,0:T(1,128)}', space=vmem, size = 0x9000, scoped, tag = 'internal scratch']
  %s0 = inlined_call_operand.vmem [shape: bf16[1024,216], index: 0, kind: input, shape index: {}]
  %s1 = inlined_call_operand.vmem [shape: bf16[216,24], index: 1, kind: input, shape index: {}]
  %s2 = inlined_call_operand.vmem [shape: f32[1,24], index: 2, kind: input, shape index: {}]
  %s3 = inlined_call_operand.vmem [shape: f32[1,24], index: 3, kind: input, shape index: {}]
  %s4 = inlined_call_operand.vmem [shape: f32[1,24], index: 4, kind: input, shape index: {}]
  %s5 = inlined_call_operand.vmem [shape: f32[1024,24], index: 5, kind: output, shape index: {}]
  %s6 = sld [smem:[#allocation0]]
  $region53: #{cnn_mlp_forward.6} parent=0
    _
  %s8 = ssub.s32 1, %s6
  %s9 = scalar_select 0, %s8, %s6
  loop: start=0, step=1, limit=4
  $region2: #{cnn_mlp_forward.6} parent=0 // loop_pre_header
    _
  $region3: #{cnn_mlp_forward.6} parent=0 // loop_header
    %s11 = sphi 0, %s15
    %p12 = scmp.ge.s32.totalorder %s11, 4
    %s21 = sphi 0, %s23
    %s24 = sphi 0, %s21
    %s25 = sphi 0, %s24
    %s41 = sphi 0, %s25
    %s45 = sphi 0, %s45
    %s47 = sphi 0, %s45
    %s48 = sphi 0, %s47
    %s62 = sphi 0, %s48
    %s66 = sphi 0, %s66
    %s68 = sphi 0, %s66
    %s69 = sphi 0, %s68
    %s83 = sphi 0, %s69
    %s87 = sphi 0, %s87
    %s89 = sphi 0, %s87
    %s90 = sphi 0, %s89
    %s104 = sphi 0, %s90
    %s108 = sphi 0, %s108
    %s110 = sphi 0, %s108
    %s111 = sphi 0, %s110
    %s125 = sphi 0, %s111
    %s131 = sphi 0, %s133
    %s134 = sphi 0, %s131
    %s135 = sphi 0, %s134
    %s151 = sphi 0, %s135
  $region4: #{cnn_mlp_forward.6} parent=0 // loop_header_branch
    %14 = sbr.rel (%p12) target = $region8
  $region5: #{cnn_mlp_forward.6} parent=0 // loop_body
    %s16 = ssub.s32 %s11, 1
    %s17 = ssub.s32 %s11, 2
    %s18 = sadd.s32 %s11, 1
    %s19 = ssub.s32 %s11, %s18
    %p20 = scmp.eq.s32.totalorder %s19, 0
    %s22 = sadd.s32 %s21, 1
    %s23 = scalar_select %p20, %s21, %s22
    %p26 = pneg %p20
    %p27 = scmp.eq.s32.totalorder %s11, 1
    %p28 = por %p26, %p27
    %p29 = scmp.ne.s32.totalorder %s21, %s24
    %p30 = scmp.eq.s32.totalorder %s11, 0
    %p31 = por %p29, %p30
    %p32 = scmp.ne.s32.totalorder %s21, %s24
    %p33 = scmp.eq.s32.totalorder %s16, 1
    %p34 = por %p32, %p33
    %p35 = scmp.ne.s32.totalorder %s24, %s25
    %p36 = scmp.eq.s32.totalorder %s16, 0
    %p37 = por %p35, %p36
    %p38 = scmp.ne.s32.totalorder %s24, %s25
    %p39 = scmp.eq.s32.totalorder %s17, 1
    %p40 = por %p38, %p39
    %p42 = scmp.ne.s32.totalorder %s25, %s41
    %p43 = scmp.eq.s32.totalorder %s17, 0
    %p44 = por %p42, %p43
    %s46 = sadd.s32 %s45, 1
    %p49 = scmp.eq.s32.totalorder %s11, 1
    %p50 = scmp.ne.s32.totalorder %s45, %s47
    %p51 = scmp.eq.s32.totalorder %s11, 0
    %p52 = por %p50, %p51
    %p53 = scmp.ne.s32.totalorder %s45, %s47
    %p54 = scmp.eq.s32.totalorder %s16, 1
    %p55 = por %p53, %p54
    %p56 = scmp.ne.s32.totalorder %s47, %s48
    %p57 = scmp.eq.s32.totalorder %s16, 0
    %p58 = por %p56, %p57
    %p59 = scmp.ne.s32.totalorder %s47, %s48
    %p60 = scmp.eq.s32.totalorder %s17, 1
    %p61 = por %p59, %p60
    %p63 = scmp.ne.s32.totalorder %s48, %s62
    %p64 = scmp.eq.s32.totalorder %s17, 0
    %p65 = por %p63, %p64
    %s67 = sadd.s32 %s66, 1
    %p70 = scmp.eq.s32.totalorder %s11, 1
    %p71 = scmp.ne.s32.totalorder %s66, %s68
    %p72 = scmp.eq.s32.totalorder %s11, 0
    %p73 = por %p71, %p72
    %p74 = scmp.ne.s32.totalorder %s66, %s68
    %p75 = scmp.eq.s32.totalorder %s16, 1
    %p76 = por %p74, %p75
    %p77 = scmp.ne.s32.totalorder %s68, %s69
    %p78 = scmp.eq.s32.totalorder %s16, 0
    %p79 = por %p77, %p78
    %p80 = scmp.ne.s32.totalorder %s68, %s69
    %p81 = scmp.eq.s32.totalorder %s17, 1
    %p82 = por %p80, %p81
    %p84 = scmp.ne.s32.totalorder %s69, %s83
    %p85 = scmp.eq.s32.totalorder %s17, 0
    %p86 = por %p84, %p85
    %s88 = sadd.s32 %s87, 1
    %p91 = scmp.eq.s32.totalorder %s11, 1
    %p92 = scmp.ne.s32.totalorder %s87, %s89
    %p93 = scmp.eq.s32.totalorder %s11, 0
    %p94 = por %p92, %p93
    %p95 = scmp.ne.s32.totalorder %s87, %s89
    %p96 = scmp.eq.s32.totalorder %s16, 1
    %p97 = por %p95, %p96
    %p98 = scmp.ne.s32.totalorder %s89, %s90
    %p99 = scmp.eq.s32.totalorder %s16, 0
    %p100 = por %p98, %p99
    %p101 = scmp.ne.s32.totalorder %s89, %s90
    %p102 = scmp.eq.s32.totalorder %s17, 1
    %p103 = por %p101, %p102
    %p105 = scmp.ne.s32.totalorder %s90, %s104
    %p106 = scmp.eq.s32.totalorder %s17, 0
    %p107 = por %p105, %p106
    %s109 = sadd.s32 %s108, 1
    %p112 = scmp.eq.s32.totalorder %s11, 1
    %p113 = scmp.ne.s32.totalorder %s108, %s110
    %p114 = scmp.eq.s32.totalorder %s11, 0
    %p115 = por %p113, %p114
    %p116 = scmp.ne.s32.totalorder %s108, %s110
    %p117 = scmp.eq.s32.totalorder %s16, 1
    %p118 = por %p116, %p117
    %p119 = scmp.ne.s32.totalorder %s110, %s111
    %p120 = scmp.eq.s32.totalorder %s16, 0
    %p121 = por %p119, %p120
    %p122 = scmp.ne.s32.totalorder %s110, %s111
    %p123 = scmp.eq.s32.totalorder %s17, 1
    %p124 = por %p122, %p123
    %p126 = scmp.ne.s32.totalorder %s111, %s125
    %p127 = scmp.eq.s32.totalorder %s17, 0
    %p128 = por %p126, %p127
    %s129 = ssub.s32 %s11, %s18
    %p130 = scmp.eq.s32.totalorder %s129, 0
    %s132 = sadd.s32 %s131, 1
    %s133 = scalar_select %p130, %s131, %s132
    %p136 = pneg %p130
    %p137 = scmp.eq.s32.totalorder %s11, 1
    %p138 = por %p136, %p137
    %p139 = scmp.ne.s32.totalorder %s131, %s134
    %p140 = scmp.eq.s32.totalorder %s11, 0
    %p141 = por %p139, %p140
    %p142 = scmp.ne.s32.totalorder %s131, %s134
    %p143 = scmp.eq.s32.totalorder %s16, 1
    %p144 = por %p142, %p143
    %p145 = scmp.ne.s32.totalorder %s134, %s135
    %p146 = scmp.eq.s32.totalorder %s16, 0
    %p147 = por %p145, %p146
    %p148 = scmp.ne.s32.totalorder %s134, %s135
    %p149 = scmp.eq.s32.totalorder %s17, 1
    %p150 = por %p148, %p149
    %p152 = scmp.ne.s32.totalorder %s135, %s151
    %p153 = scmp.eq.s32.totalorder %s17, 0
    %p154 = por %p152, %p153
    %p155 = scmp.le.s32.totalorder 1, %s11
    %p156 = scmp.lt.s32.totalorder %s11, 3
    %p157 = pnand %p155, %p156
    %p158 = pneg %p157
    // Predicated region
    $region9: #{cnn_mlp_forward.6} parent=5 // pred_check
      _
    $region10: #{cnn_mlp_forward.6} parent=5 // pred_check_branch
      %160 = sbr.rel (%p157) target = $region12
    $region11: #{cnn_mlp_forward.6} parent=5 // pred_region
      %s161 = ssub.s32 %s11, 1
      // Predicated region
      $region13: #{cnn_mlp_forward.6} parent=11 // pred_check
        %p162 = pneg %p58
      $region14: #{cnn_mlp_forward.6} parent=11 // pred_check_branch
        %164 = sbr.rel (%p162) target = $region16
      $region15: #{cnn_mlp_forward.6} parent=11 // pred_region
        _
      $region16: #{cnn_mlp_forward.6} parent=11 // pred_fallthru
        _
      // Predicated region
      $region17: #{cnn_mlp_forward.6} parent=11 // pred_check
        %p165 = pneg %p79
      $region18: #{cnn_mlp_forward.6} parent=11 // pred_check_branch
        %167 = sbr.rel (%p165) target = $region20
      $region19: #{cnn_mlp_forward.6} parent=11 // pred_region
        _
      $region20: #{cnn_mlp_forward.6} parent=11 // pred_fallthru
        _
      // Predicated region
      $region21: #{cnn_mlp_forward.6} parent=11 // pred_check
        %p168 = pneg %p100
      $region22: #{cnn_mlp_forward.6} parent=11 // pred_check_branch
        %170 = sbr.rel (%p168) target = $region24
      $region23: #{cnn_mlp_forward.6} parent=11 // pred_region
        _
      $region24: #{cnn_mlp_forward.6} parent=11 // pred_fallthru
        _
      // Predicated region
      $region25: #{cnn_mlp_forward.6} parent=11 // pred_check
        %p171 = pneg %p121
      $region26: #{cnn_mlp_forward.6} parent=11 // pred_check_branch
        %173 = sbr.rel (%p171) target = $region28
      $region27: #{cnn_mlp_forward.6} parent=11 // pred_region
        _
      $region28: #{cnn_mlp_forward.6} parent=11 // pred_fallthru
        _
    $region12: #{cnn_mlp_forward.6} parent=5 // pred_fallthru
      _
    %p174 = scmp.lt.s32.totalorder %s11, 2
    // Predicated region
    $region29: #{cnn_mlp_forward.6} parent=5 // pred_check
      %p175 = pneg %p174
    $region30: #{cnn_mlp_forward.6} parent=5 // pred_check_branch
      %177 = sbr.rel (%p175) target = $region32
    $region31: #{cnn_mlp_forward.6} parent=5 // pred_region
      // Predicated region
      $region33: #{cnn_mlp_forward.6} parent=31 // pred_check
        %p178 = pneg %p31
      $region34: #{cnn_mlp_forward.6} parent=31 // pred_check_branch
        %180 = sbr.rel (%p178) target = $region36
      $region35: #{cnn_mlp_forward.6} parent=31 // pred_region
        %s181 = smul.u32 64, %s11
        %p182 = scmp.lt.s32.totalorder %s181, 127
        %s183 = scalar_select %p182, %s181, 127
        %s184 = smul.addr %s183, 2
        %s185 = smul.addr %s184, 4
        %s186 = scalar_lea.vmem %s0, %s185
        %s187 = smul.u32 64, %s11
      $region36: #{cnn_mlp_forward.6} parent=31 // pred_fallthru
        _
    $region32: #{cnn_mlp_forward.6} parent=5 // pred_fallthru
      _
    %p188 = scmp.le.s32.totalorder 1, %s11
    %p189 = scmp.lt.s32.totalorder %s11, 3
    %p190 = pnand %p188, %p189
    %p191 = pneg %p190
    // Predicated region
    $region37: #{cnn_mlp_forward.6} parent=5 // pred_check
      _
    $region38: #{cnn_mlp_forward.6} parent=5 // pred_check_branch
      %193 = sbr.rel (%p190) target = $region40
    $region39: #{cnn_mlp_forward.6} parent=5 // pred_region
      %s194 = ssub.s32 %s11, 1
      %s195 = smul.u32 64, %s16
      %p196 = scmp.lt.s32.totalorder %s195, 127
      %s197 = scalar_select %p196, %s195, 127
      %s198 = smul.addr %s197, 2
      %s199 = smul.addr %s198, 4
      %s200 = scalar_lea.vmem %s0, %s199
      %p201 = pneg %p37
      %p202 = pneg %p34
      %p203 = pneg %p58
      %p204 = pneg %p55
      %p205 = pneg %p79
      %p206 = pneg %p76
      %p207 = pneg %p100
      %p208 = pneg %p97
      %p209 = pneg %p121
      %p210 = pneg %p118
      %p211 = pneg %p147
      %p212 = pneg %p144
      %s213 = smul.u32 64, %s16
      %p214 = scmp.lt.s32.totalorder %s213, 127
      %s215 = scalar_select %p214, %s213, 127
      %s216 = smul.addr %s215, 8
      %s217 = scalar_lea.vmem %s5, %s216
      %s218 = smul.u32 64, %s16
      %p219 = scmp.lt.s32.totalorder %s218, 127
      %s220 = scalar_select %p219, %s218, 127
      %s221 = smul.addr %s220, 2
      %s222 = smul.addr %s221, 4
      %s223 = scalar_lea.vmem %s0, %s222
      %s224 = smul.u32 64, %s16
      %s225 = smul.u32 64, %s16
      %p226 = scmp.lt.s32.totalorder %s225, 127
      %s227 = scalar_select %p226, %s225, 127
      %s228 = smul.addr %s227, 8
      %s229 = scalar_lea.vmem %s5, %s228
      %s230 = smul.u32 64, %s16
      %v232 = vld [vmem:[%s223] sm:$0xff]
      %v233 = vld [vmem:[%s223 + $0x8] sm:$0xff]
      %v234 = vld [vmem:[%s223 + $0x10] sm:$0xff]
      %v235 = vld [vmem:[%s223 + $0x18] sm:$0xff]
      %v236 = vld [vmem:[%s223 + $0x20] sm:$0xff]
      %v237 = vld [vmem:[%s223 + $0x28] sm:$0xff]
      %v238 = vld [vmem:[%s223 + $0x30] sm:$0xff]
      %v239 = vld [vmem:[%s223 + $0x38] sm:$0xff]
      %v240 = vld [vmem:[%s223 + $0x40] sm:$0xff]
      %v241 = vld [vmem:[%s223 + $0x48] sm:$0xff]
      %v242 = vld [vmem:[%s223 + $0x50] sm:$0xff]
      %v243 = vld [vmem:[%s223 + $0x58] sm:$0xff]
      %v244 = vld [vmem:[%s223 + $0x60] sm:$0xff]
      %v245 = vld [vmem:[%s223 + $0x68] sm:$0xff]
      %v246 = vld [vmem:[%s223 + $0x70] sm:$0xff]
      %v247 = vld [vmem:[%s223 + $0x78] sm:$0xff]
      %v248 = vld [vmem:[%s223 + $0x80] sm:$0xff]
      %v249 = vld [vmem:[%s223 + $0x88] sm:$0xff]
      %v250 = vld [vmem:[%s223 + $0x90] sm:$0xff]
      %v251 = vld [vmem:[%s223 + $0x98] sm:$0xff]
      %v252 = vld [vmem:[%s223 + $0xa0] sm:$0xff]
      %v253 = vld [vmem:[%s223 + $0xa8] sm:$0xff]
      %v254 = vld [vmem:[%s223 + $0xb0] sm:$0xff]
      %v255 = vld [vmem:[%s223 + $0xb8] sm:$0xff]
      %v256 = vld [vmem:[%s223 + $0xc0] sm:$0xff]
      %v257 = vld [vmem:[%s223 + $0xc8] sm:$0xff]
      %v258 = vld [vmem:[%s223 + $0xd0] sm:$0xff]
      %v259 = vld [vmem:[%s223 + $0xd8] sm:$0xff]
      %v260 = vld [vmem:[%s223 + $0xe0] sm:$0xff]
      %v261 = vld [vmem:[%s223 + $0xe8] sm:$0xff]
      %v262 = vld [vmem:[%s223 + $0xf0] sm:$0xff]
      %v263 = vld [vmem:[%s223 + $0xf8] sm:$0xff]
      %v264 = vld [vmem:[%s223 + $0x100] sm:$0xff]
      %v265 = vld [vmem:[%s223 + $0x108] sm:$0xff]
      %v266 = vld [vmem:[%s223 + $0x110] sm:$0xff]
      %v267 = vld [vmem:[%s223 + $0x118] sm:$0xff]
      %v268 = vld [vmem:[%s223 + $0x120] sm:$0xff]
      %v269 = vld [vmem:[%s223 + $0x128] sm:$0xff]
      %v270 = vld [vmem:[%s223 + $0x130] sm:$0xff]
      %v271 = vld [vmem:[%s223 + $0x138] sm:$0xff]
      %v272 = vld [vmem:[%s223 + $0x140] sm:$0xff]
      %v273 = vld [vmem:[%s223 + $0x148] sm:$0xff]
      %v274 = vld [vmem:[%s223 + $0x150] sm:$0xff]
      %v275 = vld [vmem:[%s223 + $0x158] sm:$0xff]
      %v276 = vld [vmem:[%s223 + $0x160] sm:$0xff]
      %v277 = vld [vmem:[%s223 + $0x168] sm:$0xff]
      %v278 = vld [vmem:[%s223 + $0x170] sm:$0xff]
      %v279 = vld [vmem:[%s223 + $0x178] sm:$0xff]
      %v280 = vld [vmem:[%s223 + $0x180] sm:$0xff]
      %v281 = vld [vmem:[%s223 + $0x188] sm:$0xff]
      %v282 = vld [vmem:[%s223 + $0x190] sm:$0xff]
      %v283 = vld [vmem:[%s223 + $0x198] sm:$0xff]
      %v284 = vld [vmem:[%s223 + $0x1a0] sm:$0xff]
      %v285 = vld [vmem:[%s223 + $0x1a8] sm:$0xff]
      %v286 = vld [vmem:[%s223 + $0x1b0] sm:$0xff]
      %v287 = vld [vmem:[%s223 + $0x1b8] sm:$0xff]
      %v288 = vld [vmem:[%s223 + $0x1c0] sm:$0xff]
      %v289 = vld [vmem:[%s223 + $0x1c8] sm:$0xff]
      %v290 = vld [vmem:[%s223 + $0x1d0] sm:$0xff]
      %v291 = vld [vmem:[%s223 + $0x1d8] sm:$0xff]
      %v292 = vld [vmem:[%s223 + $0x1e0] sm:$0xff]
      %v293 = vld [vmem:[%s223 + $0x1e8] sm:$0xff]
      %v294 = vld [vmem:[%s223 + $0x1f0] sm:$0xff]
      %v295 = vld [vmem:[%s223 + $0x1f8] sm:$0xff]
      %v296 = vld [vmem:[%s1] sm:$0xf]
      %v297 = vld [vmem:[%s1 + $0x4] sm:$0xf]
      %v298 = vld [vmem:[%s1 + $0x8] sm:$0xf]
      %v299 = vld [vmem:[%s1 + $0xc] sm:$0xf]
      %v300 = vld [vmem:[%s1 + $0x10] sm:$0xf]
      %v301 = vld [vmem:[%s1 + $0x14] sm:$0xf]
      %v302 = vld [vmem:[%s1 + $0x18] sm:$0xf]
      %v303 = vld [vmem:[%s1 + $0x1c] sm:$0xf]
      %v304 = vld [vmem:[%s1 + $0x20] sm:$0xf]
      %v305 = vld [vmem:[%s1 + $0x24] sm:$0xf]
      %v306 = vld [vmem:[%s1 + $0x28] sm:$0xf]
      %v307 = vld [vmem:[%s1 + $0x2c] sm:$0xf]
      %v308 = vld [vmem:[%s1 + $0x30] sm:$0xf]
      %v309 = vld [vmem:[%s1 + $0x34] sm:$0xf]
      %v310 = vld [vmem:[%s1 + $0x38] sm:$0xf]
      %v311 = vld [vmem:[%s1 + $0x3c] sm:$0xf]
      %v312 = vld [vmem:[%s1 + $0x40] sm:$0xf]
      %v313 = vld [vmem:[%s1 + $0x44] sm:$0xf]
      %v314 = vld [vmem:[%s1 + $0x48] sm:$0xf]
      %v315 = vld [vmem:[%s1 + $0x4c] sm:$0xf]
      %v316 = vld [vmem:[%s1 + $0x50] sm:$0xf]
      %v317 = vld [vmem:[%s1 + $0x54] sm:$0xf]
      %v318 = vld [vmem:[%s1 + $0x58] sm:$0xf]
      %v319 = vld [vmem:[%s1 + $0x5c] sm:$0xf]
      %v320 = vld [vmem:[%s1 + $0x60] sm:$0xf]
      %v321 = vld [vmem:[%s1 + $0x64] sm:$0xf]
      %v322 = vld [vmem:[%s1 + $0x68] sm:$0xf]
      %v323 = vld [vmem:[%s2] sm:$0x1]
      %v325 = vperm.slane %v323, 0
      %v391 = vunpack.c.l.b16 %v232
      %v392 = vunpack.c.h.b16 %v232
      %v393 = vunpack.c.l.b16 %v233
      %v394 = vunpack.c.h.b16 %v233
      %v395 = vunpack.c.l.b16 %v234
      %v396 = vunpack.c.h.b16 %v234
      %v397 = vunpack.c.l.b16 %v235
      %v398 = vunpack.c.h.b16 %v235
      %v399 = vunpack.c.l.b16 %v236
      %v400 = vunpack.c.h.b16 %v236
      %v401 = vunpack.c.l.b16 %v237
      %v402 = vunpack.c.h.b16 %v237
      %v403 = vunpack.c.l.b16 %v238
      %v404 = vunpack.c.h.b16 %v238
      %v405 = vunpack.c.l.b16 %v239
      %v406 = vunpack.c.h.b16 %v239
      %v407 = vunpack.c.l.b16 %v240
      %v408 = vunpack.c.h.b16 %v240
      %v409 = vunpack.c.l.b16 %v241
      %v410 = vunpack.c.h.b16 %v241
      %v411 = vunpack.c.l.b16 %v242
      %v412 = vunpack.c.h.b16 %v242
      %v413 = vunpack.c.l.b16 %v243
      %v414 = vunpack.c.h.b16 %v243
      %v415 = vunpack.c.l.b16 %v244
      %v416 = vunpack.c.h.b16 %v244
      %v417 = vunpack.c.l.b16 %v245
      %v418 = vunpack.c.h.b16 %v245
      %v419 = vunpack.c.l.b16 %v246
      %v420 = vunpack.c.h.b16 %v246
      %v421 = vunpack.c.l.b16 %v247
      %v422 = vunpack.c.h.b16 %v247
      %v423 = vunpack.c.l.b16 %v248
      %v424 = vunpack.c.h.b16 %v248
      %v425 = vunpack.c.l.b16 %v249
      %v426 = vunpack.c.h.b16 %v249
      %v427 = vunpack.c.l.b16 %v250
      %v428 = vunpack.c.h.b16 %v250
      %v429 = vunpack.c.l.b16 %v251
      %v430 = vunpack.c.h.b16 %v251
      %v431 = vunpack.c.l.b16 %v252
      %v432 = vunpack.c.h.b16 %v252
      %v433 = vunpack.c.l.b16 %v253
      %v434 = vunpack.c.h.b16 %v253
      %v435 = vunpack.c.l.b16 %v254
      %v436 = vunpack.c.h.b16 %v254
      %v437 = vunpack.c.l.b16 %v255
      %v438 = vunpack.c.h.b16 %v255
      %v439 = vunpack.c.l.b16 %v256
      %v440 = vunpack.c.h.b16 %v256
      %v441 = vunpack.c.l.b16 %v257
      %v442 = vunpack.c.h.b16 %v257
      %v443 = vunpack.c.l.b16 %v258
      %v444 = vunpack.c.h.b16 %v258
      %v445 = vunpack.c.l.b16 %v259
      %v446 = vunpack.c.h.b16 %v259
      %v447 = vunpack.c.l.b16 %v260
      %v448 = vunpack.c.h.b16 %v260
      %v449 = vunpack.c.l.b16 %v261
      %v450 = vunpack.c.h.b16 %v261
      %v451 = vunpack.c.l.b16 %v262
      %v452 = vunpack.c.h.b16 %v262
      %v453 = vunpack.c.l.b16 %v263
      %v454 = vunpack.c.h.b16 %v263
      %v455 = vunpack.c.l.b16 %v264
      %v456 = vunpack.c.h.b16 %v264
      %v457 = vunpack.c.l.b16 %v265
      %v458 = vunpack.c.h.b16 %v265
      %v459 = vunpack.c.l.b16 %v266
      %v460 = vunpack.c.h.b16 %v266
      %v461 = vunpack.c.l.b16 %v267
      %v462 = vunpack.c.h.b16 %v267
      %v463 = vunpack.c.l.b16 %v268
      %v464 = vunpack.c.h.b16 %v268
      %v465 = vunpack.c.l.b16 %v269
      %v466 = vunpack.c.h.b16 %v269
      %v467 = vunpack.c.l.b16 %v270
      %v468 = vunpack.c.h.b16 %v270
      %v469 = vunpack.c.l.b16 %v271
      %v470 = vunpack.c.h.b16 %v271
      %v471 = vunpack.c.l.b16 %v272
      %v472 = vunpack.c.h.b16 %v272
      %v473 = vunpack.c.l.b16 %v273
      %v474 = vunpack.c.h.b16 %v273
      %v475 = vunpack.c.l.b16 %v274
      %v476 = vunpack.c.h.b16 %v274
      %v477 = vunpack.c.l.b16 %v275
      %v478 = vunpack.c.h.b16 %v275
      %v479 = vunpack.c.l.b16 %v276
      %v480 = vunpack.c.h.b16 %v276
      %v481 = vunpack.c.l.b16 %v277
      %v482 = vunpack.c.h.b16 %v277
      %v483 = vunpack.c.l.b16 %v278
      %v484 = vunpack.c.h.b16 %v278
      %v485 = vunpack.c.l.b16 %v279
      %v486 = vunpack.c.h.b16 %v279
      %v487 = vunpack.c.l.b16 %v280
      %v488 = vunpack.c.h.b16 %v280
      %v489 = vunpack.c.l.b16 %v281
      %v490 = vunpack.c.h.b16 %v281
      %v491 = vunpack.c.l.b16 %v282
      %v492 = vunpack.c.h.b16 %v282
      %v493 = vunpack.c.l.b16 %v283
      %v494 = vunpack.c.h.b16 %v283
      %v495 = vunpack.c.l.b16 %v284
      %v496 = vunpack.c.h.b16 %v284
      %v497 = vunpack.c.l.b16 %v285
      %v498 = vunpack.c.h.b16 %v285
      %v499 = vunpack.c.l.b16 %v286
      %v500 = vunpack.c.h.b16 %v286
      %v501 = vunpack.c.l.b16 %v287
      %v502 = vunpack.c.h.b16 %v287
      %v503 = vunpack.c.l.b16 %v288
      %v504 = vunpack.c.h.b16 %v288
      %v505 = vunpack.c.l.b16 %v289
      %v506 = vunpack.c.h.b16 %v289
      %v507 = vunpack.c.l.b16 %v290
      %v508 = vunpack.c.h.b16 %v290
      %v509 = vunpack.c.l.b16 %v291
      %v510 = vunpack.c.h.b16 %v291
      %v511 = vunpack.c.l.b16 %v292
      %v512 = vunpack.c.h.b16 %v292
      %v513 = vunpack.c.l.b16 %v293
      %v514 = vunpack.c.h.b16 %v293
      %v515 = vunpack.c.l.b16 %v294
      %v516 = vunpack.c.h.b16 %v294
      %v517 = vunpack.c.l.b16 %v295
      %v518 = vunpack.c.h.b16 %v295
      %v519 = vpack.c.b16 %v393, %v391
      %v520 = vpack.c.b16 %v394, %v392
      %v521 = vpack.c.b16 %v397, %v395
      %v522 = vpack.c.b16 %v398, %v396
      %v523 = vpack.c.b16 %v401, %v399
      %v524 = vpack.c.b16 %v402, %v400
      %v525 = vpack.c.b16 %v405, %v403
      %v526 = vpack.c.b16 %v406, %v404
      %v527 = vpack.c.b16 %v409, %v407
      %v528 = vpack.c.b16 %v410, %v408
      %v529 = vpack.c.b16 %v413, %v411
      %v530 = vpack.c.b16 %v414, %v412
      %v531 = vpack.c.b16 %v417, %v415
      %v532 = vpack.c.b16 %v418, %v416
      %v533 = vpack.c.b16 %v421, %v419
      %v534 = vpack.c.b16 %v422, %v420
      %v535 = vpack.c.b16 %v425, %v423
      %v536 = vpack.c.b16 %v426, %v424
      %v537 = vpack.c.b16 %v429, %v427
      %v538 = vpack.c.b16 %v430, %v428
      %v539 = vpack.c.b16 %v433, %v431
      %v540 = vpack.c.b16 %v434, %v432
      %v541 = vpack.c.b16 %v437, %v435
      %v542 = vpack.c.b16 %v438, %v436
      %v543 = vpack.c.b16 %v441, %v439
      %v544 = vpack.c.b16 %v442, %v440
      %v545 = vpack.c.b16 %v445, %v443
      %v546 = vpack.c.b16 %v446, %v444
      %v547 = vpack.c.b16 %v449, %v447
      %v548 = vpack.c.b16 %v450, %v448
      %v549 = vpack.c.b16 %v453, %v451
      %v550 = vpack.c.b16 %v454, %v452
      %v551 = vpack.c.b16 %v457, %v455
      %v552 = vpack.c.b16 %v458, %v456
      %v553 = vpack.c.b16 %v461, %v459
      %v554 = vpack.c.b16 %v462, %v460
      %v555 = vpack.c.b16 %v465, %v463
      %v556 = vpack.c.b16 %v466, %v464
      %v557 = vpack.c.b16 %v469, %v467
      %v558 = vpack.c.b16 %v470, %v468
      %v559 = vpack.c.b16 %v473, %v471
      %v560 = vpack.c.b16 %v474, %v472
      %v561 = vpack.c.b16 %v477, %v475
      %v562 = vpack.c.b16 %v478, %v476
      %v563 = vpack.c.b16 %v481, %v479
      %v564 = vpack.c.b16 %v482, %v480
      %v565 = vpack.c.b16 %v485, %v483
      %v566 = vpack.c.b16 %v486, %v484
      %v567 = vpack.c.b16 %v489, %v487
      %v568 = vpack.c.b16 %v490, %v488
      %v569 = vpack.c.b16 %v493, %v491
      %v570 = vpack.c.b16 %v494, %v492
      %v571 = vpack.c.b16 %v497, %v495
      %v572 = vpack.c.b16 %v498, %v496
      %v573 = vpack.c.b16 %v501, %v499
      %v574 = vpack.c.b16 %v502, %v500
      %v575 = vpack.c.b16 %v505, %v503
      %v576 = vpack.c.b16 %v506, %v504
      %v577 = vpack.c.b16 %v509, %v507
      %v578 = vpack.c.b16 %v510, %v508
      %v579 = vpack.c.b16 %v513, %v511
      %v580 = vpack.c.b16 %v514, %v512
      %v581 = vpack.c.b16 %v517, %v515
      %v582 = vpack.c.b16 %v518, %v516
      %v642 = vunpack.c.l.b16 %v296
      %v643 = vunpack.c.l.b16 %v297
      %v644 = vunpack.c.l.b16 %v298
      %v645 = vunpack.c.l.b16 %v299
      %v646 = vunpack.c.l.b16 %v300
      %v647 = vunpack.c.l.b16 %v301
      %v648 = vunpack.c.l.b16 %v302
      %v649 = vunpack.c.l.b16 %v303
      %v650 = vunpack.c.l.b16 %v304
      %v651 = vunpack.c.l.b16 %v305
      %v652 = vunpack.c.l.b16 %v306
      %v653 = vunpack.c.l.b16 %v307
      %v654 = vunpack.c.l.b16 %v308
      %v655 = vunpack.c.l.b16 %v309
      %v656 = vunpack.c.l.b16 %v310
      %v657 = vunpack.c.l.b16 %v311
      %v658 = vunpack.c.l.b16 %v312
      %v659 = vunpack.c.l.b16 %v313
      %v660 = vunpack.c.l.b16 %v314
      %v661 = vunpack.c.l.b16 %v315
      %v662 = vunpack.c.l.b16 %v316
      %v663 = vunpack.c.l.b16 %v317
      %v664 = vunpack.c.l.b16 %v318
      %v665 = vunpack.c.l.b16 %v319
      %v666 = vunpack.c.l.b16 %v320
      %v667 = vunpack.c.l.b16 %v321
      %v668 = vunpack.c.l.b16 %v322
      %v669 = vpack.c.b16 %v643, %v642
      %v670 = vpack.c.b16 %v645, %v644
      %v671 = vpack.c.b16 %v647, %v646
      %v672 = vpack.c.b16 %v649, %v648
      %v673 = vpack.c.b16 %v651, %v650
      %v674 = vpack.c.b16 %v653, %v652
      %v675 = vpack.c.b16 %v655, %v654
      %v676 = vpack.c.b16 %v657, %v656
      %v677 = vpack.c.b16 %v659, %v658
      %v678 = vpack.c.b16 %v661, %v660
      %v679 = vpack.c.b16 %v663, %v662
      %v680 = vpack.c.b16 %v665, %v664
      %v681 = vpack.c.b16 %v667, %v666
      %v682 = vpack.c.b16 %v668, %v668
      %vm696 = vcmask 719872
      %v698 = vsel %vm696, %v520, 0
      %v701 = vsel %vm696, %v522, 0
      %v704 = vsel %vm696, %v524, 0
      %v707 = vsel %vm696, %v526, 0
      %v710 = vsel %vm696, %v528, 0
      %v713 = vsel %vm696, %v530, 0
      %v716 = vsel %vm696, %v532, 0
      %v719 = vsel %vm696, %v534, 0
      %v722 = vsel %vm696, %v536, 0
      %v725 = vsel %vm696, %v538, 0
      %v728 = vsel %vm696, %v540, 0
      %v731 = vsel %vm696, %v542, 0
      %v734 = vsel %vm696, %v544, 0
      %v737 = vsel %vm696, %v546, 0
      %v740 = vsel %vm696, %v548, 0
      %v743 = vsel %vm696, %v550, 0
      %v746 = vsel %vm696, %v552, 0
      %v749 = vsel %vm696, %v554, 0
      %v752 = vsel %vm696, %v556, 0
      %v755 = vsel %vm696, %v558, 0
      %v758 = vsel %vm696, %v560, 0
      %v761 = vsel %vm696, %v562, 0
      %v764 = vsel %vm696, %v564, 0
      %v767 = vsel %vm696, %v566, 0
      %v770 = vsel %vm696, %v568, 0
      %v773 = vsel %vm696, %v570, 0
      %v776 = vsel %vm696, %v572, 0
      %v779 = vsel %vm696, %v574, 0
      %v782 = vsel %vm696, %v576, 0
      %v785 = vsel %vm696, %v578, 0
      %v788 = vsel %vm696, %v580, 0
      %v791 = vsel %vm696, %v582, 0
      %vm793 = vcmask 1043456
      %v795 = vsel %vm793, %v682, 0
      %797 = vmatpush.bf16.msra.mxu0 %v676
      %798 = vmatpush.bf16.msra.mxu0 %v675
      %799 = vmatpush.bf16.msra.mxu0 %v674
      %800 = vmatpush.bf16.msra.mxu0 %v673
      %801 = vmatpush.bf16.msra.mxu0 %v672
      %802 = vmatpush.bf16.msra.mxu0 %v671
      %803 = vmatpush.bf16.msra.mxu0 %v670
      %804 = vmatpush.bf16.msra.mxu0 %v669
      %805 = vmatmul.bf16.gmra.mxu0 %v519
      %v806 = vpop.f32.mrf.mxu0
      %v807 = vadd.f32 %v325, %v806
      %v808 = vpop.f32.mrf.mxu0
      %v809 = vadd.f32 %v325, %v808
      %810 = vmatmul.bf16.gmra.mxu0 %v521
      %v811 = vpop.f32.mrf.mxu0
      %v812 = vadd.f32 %v325, %v811
      %v813 = vpop.f32.mrf.mxu0
      %v814 = vadd.f32 %v325, %v813
      %815 = vmatmul.bf16.gmra.mxu0 %v523
      %v816 = vpop.f32.mrf.mxu0
      %v817 = vadd.f32 %v325, %v816
      %v818 = vpop.f32.mrf.mxu0
      %v819 = vadd.f32 %v325, %v818
      %820 = vmatmul.bf16.gmra.mxu0 %v525
      %v821 = vpop.f32.mrf.mxu0
      %v822 = vadd.f32 %v325, %v821
      %v823 = vpop.f32.mrf.mxu0
      %v824 = vadd.f32 %v325, %v823
      %825 = vmatmul.bf16.gmra.mxu0 %v527
      %v826 = vpop.f32.mrf.mxu0
      %v827 = vadd.f32 %v325, %v826
      %v828 = vpop.f32.mrf.mxu0
      %v829 = vadd.f32 %v325, %v828
      %830 = vmatmul.bf16.gmra.mxu0 %v529
      %v831 = vpop.f32.mrf.mxu0
      %v832 = vadd.f32 %v325, %v831
      %v833 = vpop.f32.mrf.mxu0
      %v834 = vadd.f32 %v325, %v833
      %835 = vmatmul.bf16.gmra.mxu0 %v531
      %v836 = vpop.f32.mrf.mxu0
      %v837 = vadd.f32 %v325, %v836
      %v838 = vpop.f32.mrf.mxu0
      %v839 = vadd.f32 %v325, %v838
      %840 = vmatmul.bf16.gmra.mxu0 %v533
      %v841 = vpop.f32.mrf.mxu0
      %v842 = vadd.f32 %v325, %v841
      %v843 = vpop.f32.mrf.mxu0
      %v844 = vadd.f32 %v325, %v843
      %845 = vmatmul.bf16.gmra.mxu0 %v535
      %v846 = vpop.f32.mrf.mxu0
      %v847 = vadd.f32 %v325, %v846
      %v848 = vpop.f32.mrf.mxu0
      %v849 = vadd.f32 %v325, %v848
      %850 = vmatmul.bf16.gmra.mxu0 %v537
      %v851 = vpop.f32.mrf.mxu0
      %v852 = vadd.f32 %v325, %v851
      %v853 = vpop.f32.mrf.mxu0
      %v854 = vadd.f32 %v325, %v853
      %855 = vmatmul.bf16.gmra.mxu0 %v539
      %v856 = vpop.f32.mrf.mxu0
      %v857 = vadd.f32 %v325, %v856
      %v858 = vpop.f32.mrf.mxu0
      %v859 = vadd.f32 %v325, %v858
      %860 = vmatmul.bf16.gmra.mxu0 %v541
      %v861 = vpop.f32.mrf.mxu0
      %v862 = vadd.f32 %v325, %v861
      %v863 = vpop.f32.mrf.mxu0
      %v864 = vadd.f32 %v325, %v863
      %865 = vmatmul.bf16.gmra.mxu0 %v543
      %v866 = vpop.f32.mrf.mxu0
      %v867 = vadd.f32 %v325, %v866
      %v868 = vpop.f32.mrf.mxu0
      %v869 = vadd.f32 %v325, %v868
      %870 = vmatmul.bf16.gmra.mxu0 %v545
      %v871 = vpop.f32.mrf.mxu0
      %v872 = vadd.f32 %v325, %v871
      %v873 = vpop.f32.mrf.mxu0
      %v874 = vadd.f32 %v325, %v873
      %875 = vmatmul.bf16.gmra.mxu0 %v547
      %v876 = vpop.f32.mrf.mxu0
      %v877 = vadd.f32 %v325, %v876
      %v878 = vpop.f32.mrf.mxu0
      %v879 = vadd.f32 %v325, %v878
      %880 = vmatmul.bf16.gmra.mxu0 %v549
      %v881 = vpop.f32.mrf.mxu0
      %v882 = vadd.f32 %v325, %v881
      %v883 = vpop.f32.mrf.mxu0
      %v884 = vadd.f32 %v325, %v883
      %885 = vmatmul.bf16.gmra.mxu0 %v551
      %v886 = vpop.f32.mrf.mxu0
      %v887 = vadd.f32 %v325, %v886
      %v888 = vpop.f32.mrf.mxu0
      %v889 = vadd.f32 %v325, %v888
      %890 = vmatmul.bf16.gmra.mxu0 %v553
      %v891 = vpop.f32.mrf.mxu0
      %v892 = vadd.f32 %v325, %v891
      %v893 = vpop.f32.mrf.mxu0
      %v894 = vadd.f32 %v325, %v893
      %895 = vmatmul.bf16.gmra.mxu0 %v555
      %v896 = vpop.f32.mrf.mxu0
      %v897 = vadd.f32 %v325, %v896
      %v898 = vpop.f32.mrf.mxu0
      %v899 = vadd.f32 %v325, %v898
      %900 = vmatmul.bf16.gmra.mxu0 %v557
      %v901 = vpop.f32.mrf.mxu0
      %v902 = vadd.f32 %v325, %v901
      %v903 = vpop.f32.mrf.mxu0
      %v904 = vadd.f32 %v325, %v903
      %905 = vmatmul.bf16.gmra.mxu0 %v559
      %v906 = vpop.f32.mrf.mxu0
      %v907 = vadd.f32 %v325, %v906
      %v908 = vpop.f32.mrf.mxu0
      %v909 = vadd.f32 %v325, %v908
      %910 = vmatmul.bf16.gmra.mxu0 %v561
      %v911 = vpop.f32.mrf.mxu0
      %v912 = vadd.f32 %v325, %v911
      %v913 = vpop.f32.mrf.mxu0
      %v914 = vadd.f32 %v325, %v913
      %915 = vmatmul.bf16.gmra.mxu0 %v563
      %v916 = vpop.f32.mrf.mxu0
      %v917 = vadd.f32 %v325, %v916
      %v918 = vpop.f32.mrf.mxu0
      %v919 = vadd.f32 %v325, %v918
      %920 = vmatmul.bf16.gmra.mxu0 %v565
      %v921 = vpop.f32.mrf.mxu0
      %v922 = vadd.f32 %v325, %v921
      %v923 = vpop.f32.mrf.mxu0
      %v924 = vadd.f32 %v325, %v923
      %925 = vmatmul.bf16.gmra.mxu0 %v567
      %v926 = vpop.f32.mrf.mxu0
      %v927 = vadd.f32 %v325, %v926
      %v928 = vpop.f32.mrf.mxu0
      %v929 = vadd.f32 %v325, %v928
      %930 = vmatmul.bf16.gmra.mxu0 %v569
      %v931 = vpop.f32.mrf.mxu0
      %v932 = vadd.f32 %v325, %v931
      %v933 = vpop.f32.mrf.mxu0
      %v934 = vadd.f32 %v325, %v933
      %935 = vmatmul.bf16.gmra.mxu0 %v571
      %v936 = vpop.f32.mrf.mxu0
      %v937 = vadd.f32 %v325, %v936
      %v938 = vpop.f32.mrf.mxu0
      %v939 = vadd.f32 %v325, %v938
      %940 = vmatmul.bf16.gmra.mxu0 %v573
      %v941 = vpop.f32.mrf.mxu0
      %v942 = vadd.f32 %v325, %v941
      %v943 = vpop.f32.mrf.mxu0
      %v944 = vadd.f32 %v325, %v943
      %945 = vmatmul.bf16.gmra.mxu0 %v575
      %v946 = vpop.f32.mrf.mxu0
      %v947 = vadd.f32 %v325, %v946
      %v948 = vpop.f32.mrf.mxu0
      %v949 = vadd.f32 %v325, %v948
      %950 = vmatmul.bf16.gmra.mxu0 %v577
      %v951 = vpop.f32.mrf.mxu0
      %v952 = vadd.f32 %v325, %v951
      %v953 = vpop.f32.mrf.mxu0
      %v954 = vadd.f32 %v325, %v953
      %955 = vmatmul.bf16.gmra.mxu0 %v579
      %v956 = vpop.f32.mrf.mxu0
      %v957 = vadd.f32 %v325, %v956
      %v958 = vpop.f32.mrf.mxu0
      %v959 = vadd.f32 %v325, %v958
      %960 = vmatmul.bf16.gmra.mxu0 %v581
      %v961 = vpop.f32.mrf.mxu0
      %v962 = vadd.f32 %v325, %v961
      %v963 = vpop.f32.mrf.mxu0
      %v964 = vadd.f32 %v325, %v963
      %965 = vdwg.mxu0
      %966 = vmatpush.bf16.msra.mxu0 0
      %967 = vmatpush.bf16.msra.mxu0 0
      %968 = vmatpush.bf16.msra.mxu0 %v795
      %969 = vmatpush.bf16.msra.mxu0 %v681
      %970 = vmatpush.bf16.msra.mxu0 %v680
      %971 = vmatpush.bf16.msra.mxu0 %v679
      %972 = vmatpush.bf16.msra.mxu0 %v678
      %973 = vmatpush.bf16.msra.mxu0 %v677
      %974 = vmatmul.bf16.gmra.mxu0 %v698
      %v975 = vpop.f32.mrf.mxu0
      %v976 = vadd.f32 %v807, %v975
      %v977 = vpop.f32.mrf.mxu0
      %v978 = vadd.f32 %v809, %v977
      %979 = vmatmul.bf16.gmra.mxu0 %v701
      %v980 = vpop.f32.mrf.mxu0
      %v981 = vadd.f32 %v812, %v980
      %v982 = vpop.f32.mrf.mxu0
      %v983 = vadd.f32 %v814, %v982
      %984 = vmatmul.bf16.gmra.mxu0 %v704
      %v985 = vpop.f32.mrf.mxu0
      %v986 = vadd.f32 %v817, %v985
      %v987 = vpop.f32.mrf.mxu0
      %v988 = vadd.f32 %v819, %v987
      %989 = vmatmul.bf16.gmra.mxu0 %v707
      %v990 = vpop.f32.mrf.mxu0
      %v991 = vadd.f32 %v822, %v990
      %v992 = vpop.f32.mrf.mxu0
      %v993 = vadd.f32 %v824, %v992
      %994 = vmatmul.bf16.gmra.mxu0 %v710
      %v995 = vpop.f32.mrf.mxu0
      %v996 = vadd.f32 %v827, %v995
      %v997 = vpop.f32.mrf.mxu0
      %v998 = vadd.f32 %v829, %v997
      %999 = vmatmul.bf16.gmra.mxu0 %v713
      %v1000 = vpop.f32.mrf.mxu0
      %v1001 = vadd.f32 %v832, %v1000
      %v1002 = vpop.f32.mrf.mxu0
      %v1003 = vadd.f32 %v834, %v1002
      %1004 = vmatmul.bf16.gmra.mxu0 %v716
      %v1005 = vpop.f32.mrf.mxu0
      %v1006 = vadd.f32 %v837, %v1005
      %v1007 = vpop.f32.mrf.mxu0
      %v1008 = vadd.f32 %v839, %v1007
      %1009 = vmatmul.bf16.gmra.mxu0 %v719
      %v1010 = vpop.f32.mrf.mxu0
      %v1011 = vadd.f32 %v842, %v1010
      %v1012 = vpop.f32.mrf.mxu0
      %v1013 = vadd.f32 %v844, %v1012
      %1014 = vmatmul.bf16.gmra.mxu0 %v722
      %v1015 = vpop.f32.mrf.mxu0
      %v1016 = vadd.f32 %v847, %v1015
      %v1017 = vpop.f32.mrf.mxu0
      %v1018 = vadd.f32 %v849, %v1017
      %1019 = vmatmul.bf16.gmra.mxu0 %v725
      %v1020 = vpop.f32.mrf.mxu0
      %v1021 = vadd.f32 %v852, %v1020
      %v1022 = vpop.f32.mrf.mxu0
      %v1023 = vadd.f32 %v854, %v1022
      %1024 = vmatmul.bf16.gmra.mxu0 %v728
      %v1025 = vpop.f32.mrf.mxu0
      %v1026 = vadd.f32 %v857, %v1025
      %v1027 = vpop.f32.mrf.mxu0
      %v1028 = vadd.f32 %v859, %v1027
      %1029 = vmatmul.bf16.gmra.mxu0 %v731
      %v1030 = vpop.f32.mrf.mxu0
      %v1031 = vadd.f32 %v862, %v1030
      %v1032 = vpop.f32.mrf.mxu0
      %v1033 = vadd.f32 %v864, %v1032
      %1034 = vmatmul.bf16.gmra.mxu0 %v734
      %v1035 = vpop.f32.mrf.mxu0
      %v1036 = vadd.f32 %v867, %v1035
      %v1037 = vpop.f32.mrf.mxu0
      %v1038 = vadd.f32 %v869, %v1037
      %1039 = vmatmul.bf16.gmra.mxu0 %v737
      %v1040 = vpop.f32.mrf.mxu0
      %v1041 = vadd.f32 %v872, %v1040
      %v1042 = vpop.f32.mrf.mxu0
      %v1043 = vadd.f32 %v874, %v1042
      %1044 = vmatmul.bf16.gmra.mxu0 %v740
      %v1045 = vpop.f32.mrf.mxu0
      %v1046 = vadd.f32 %v877, %v1045
      %v1047 = vpop.f32.mrf.mxu0
      %v1048 = vadd.f32 %v879, %v1047
      %1049 = vmatmul.bf16.gmra.mxu0 %v743
      %v1050 = vpop.f32.mrf.mxu0
      %v1051 = vadd.f32 %v882, %v1050
      %v1052 = vpop.f32.mrf.mxu0
      %v1053 = vadd.f32 %v884, %v1052
      %1054 = vmatmul.bf16.gmra.mxu0 %v746
      %v1055 = vpop.f32.mrf.mxu0
      %v1056 = vadd.f32 %v887, %v1055
      %v1057 = vpop.f32.mrf.mxu0
      %v1058 = vadd.f32 %v889, %v1057
      %1059 = vmatmul.bf16.gmra.mxu0 %v749
      %v1060 = vpop.f32.mrf.mxu0
      %v1061 = vadd.f32 %v892, %v1060
      %v1062 = vpop.f32.mrf.mxu0
      %v1063 = vadd.f32 %v894, %v1062
      %1064 = vmatmul.bf16.gmra.mxu0 %v752
      %v1065 = vpop.f32.mrf.mxu0
      %v1066 = vadd.f32 %v897, %v1065
      %v1067 = vpop.f32.mrf.mxu0
      %v1068 = vadd.f32 %v899, %v1067
      %1069 = vmatmul.bf16.gmra.mxu0 %v755
      %v1070 = vpop.f32.mrf.mxu0
      %v1071 = vadd.f32 %v902, %v1070
      %v1072 = vpop.f32.mrf.mxu0
      %v1073 = vadd.f32 %v904, %v1072
      %1074 = vmatmul.bf16.gmra.mxu0 %v758
      %v1075 = vpop.f32.mrf.mxu0
      %v1076 = vadd.f32 %v907, %v1075
      %v1077 = vpop.f32.mrf.mxu0
      %v1078 = vadd.f32 %v909, %v1077
      %1079 = vmatmul.bf16.gmra.mxu0 %v761
      %v1080 = vpop.f32.mrf.mxu0
      %v1081 = vadd.f32 %v912, %v1080
      %v1082 = vpop.f32.mrf.mxu0
      %v1083 = vadd.f32 %v914, %v1082
      %1084 = vmatmul.bf16.gmra.mxu0 %v764
      %v1085 = vpop.f32.mrf.mxu0
      %v1086 = vadd.f32 %v917, %v1085
      %v1087 = vpop.f32.mrf.mxu0
      %v1088 = vadd.f32 %v919, %v1087
      %1089 = vmatmul.bf16.gmra.mxu0 %v767
      %v1090 = vpop.f32.mrf.mxu0
      %v1091 = vadd.f32 %v922, %v1090
      %v1092 = vpop.f32.mrf.mxu0
      %v1093 = vadd.f32 %v924, %v1092
      %1094 = vmatmul.bf16.gmra.mxu0 %v770
      %v1095 = vpop.f32.mrf.mxu0
      %v1096 = vadd.f32 %v927, %v1095
      %v1097 = vpop.f32.mrf.mxu0
      %v1098 = vadd.f32 %v929, %v1097
      %1099 = vmatmul.bf16.gmra.mxu0 %v773
      %v1100 = vpop.f32.mrf.mxu0
      %v1101 = vadd.f32 %v932, %v1100
      %v1102 = vpop.f32.mrf.mxu0
      %v1103 = vadd.f32 %v934, %v1102
      %1104 = vmatmul.bf16.gmra.mxu0 %v776
      %v1105 = vpop.f32.mrf.mxu0
      %v1106 = vadd.f32 %v937, %v1105
      %v1107 = vpop.f32.mrf.mxu0
      %v1108 = vadd.f32 %v939, %v1107
      %1109 = vmatmul.bf16.gmra.mxu0 %v779
      %v1110 = vpop.f32.mrf.mxu0
      %v1111 = vadd.f32 %v942, %v1110
      %v1112 = vpop.f32.mrf.mxu0
      %v1113 = vadd.f32 %v944, %v1112
      %1114 = vmatmul.bf16.gmra.mxu0 %v782
      %v1115 = vpop.f32.mrf.mxu0
      %v1116 = vadd.f32 %v947, %v1115
      %v1117 = vpop.f32.mrf.mxu0
      %v1118 = vadd.f32 %v949, %v1117
      %1119 = vmatmul.bf16.gmra.mxu0 %v785
      %v1120 = vpop.f32.mrf.mxu0
      %v1121 = vadd.f32 %v952, %v1120
      %v1122 = vpop.f32.mrf.mxu0
      %v1123 = vadd.f32 %v954, %v1122
      %1124 = vmatmul.bf16.gmra.mxu0 %v788
      %v1125 = vpop.f32.mrf.mxu0
      %v1126 = vadd.f32 %v957, %v1125
      %v1127 = vpop.f32.mrf.mxu0
      %v1128 = vadd.f32 %v959, %v1127
      %1129 = vmatmul.bf16.gmra.mxu0 %v791
      %v1130 = vpop.f32.mrf.mxu0
      %v1131 = vadd.f32 %v962, %v1130
      %v1132 = vpop.f32.mrf.mxu0
      %v1133 = vadd.f32 %v964, %v1132
      %1134 = vdwg.mxu0
      %v1135 = vmax.f32 %v976, 0.0
      %v1136 = vmax.f32 %v978, 0.0
      %v1137 = vmax.f32 %v981, 0.0
      %v1138 = vmax.f32 %v983, 0.0
      %v1139 = vmax.f32 %v986, 0.0
      %v1140 = vmax.f32 %v988, 0.0
      %v1141 = vmax.f32 %v991, 0.0
      %v1142 = vmax.f32 %v993, 0.0
      %v1143 = vmax.f32 %v996, 0.0
      %v1144 = vmax.f32 %v998, 0.0
      %v1145 = vmax.f32 %v1001, 0.0
      %v1146 = vmax.f32 %v1003, 0.0
      %v1147 = vmax.f32 %v1006, 0.0
      %v1148 = vmax.f32 %v1008, 0.0
      %v1149 = vmax.f32 %v1011, 0.0
      %v1150 = vmax.f32 %v1013, 0.0
      %v1151 = vmax.f32 %v1016, 0.0
      %v1152 = vmax.f32 %v1018, 0.0
      %v1153 = vmax.f32 %v1021, 0.0
      %v1154 = vmax.f32 %v1023, 0.0
      %v1155 = vmax.f32 %v1026, 0.0
      %v1156 = vmax.f32 %v1028, 0.0
      %v1157 = vmax.f32 %v1031, 0.0
      %v1158 = vmax.f32 %v1033, 0.0
      %v1159 = vmax.f32 %v1036, 0.0
      %v1160 = vmax.f32 %v1038, 0.0
      %v1161 = vmax.f32 %v1041, 0.0
      %v1162 = vmax.f32 %v1043, 0.0
      %v1163 = vmax.f32 %v1046, 0.0
      %v1164 = vmax.f32 %v1048, 0.0
      %v1165 = vmax.f32 %v1051, 0.0
      %v1166 = vmax.f32 %v1053, 0.0
      %v1167 = vmax.f32 %v1056, 0.0
      %v1168 = vmax.f32 %v1058, 0.0
      %v1169 = vmax.f32 %v1061, 0.0
      %v1170 = vmax.f32 %v1063, 0.0
      %v1171 = vmax.f32 %v1066, 0.0
      %v1172 = vmax.f32 %v1068, 0.0
      %v1173 = vmax.f32 %v1071, 0.0
      %v1174 = vmax.f32 %v1073, 0.0
      %v1175 = vmax.f32 %v1076, 0.0
      %v1176 = vmax.f32 %v1078, 0.0
      %v1177 = vmax.f32 %v1081, 0.0
      %v1178 = vmax.f32 %v1083, 0.0
      %v1179 = vmax.f32 %v1086, 0.0
      %v1180 = vmax.f32 %v1088, 0.0
      %v1181 = vmax.f32 %v1091, 0.0
      %v1182 = vmax.f32 %v1093, 0.0
      %v1183 = vmax.f32 %v1096, 0.0
      %v1184 = vmax.f32 %v1098, 0.0
      %v1185 = vmax.f32 %v1101, 0.0
      %v1186 = vmax.f32 %v1103, 0.0
      %v1187 = vmax.f32 %v1106, 0.0
      %v1188 = vmax.f32 %v1108, 0.0
      %v1189 = vmax.f32 %v1111, 0.0
      %v1190 = vmax.f32 %v1113, 0.0
      %v1191 = vmax.f32 %v1116, 0.0
      %v1192 = vmax.f32 %v1118, 0.0
      %v1193 = vmax.f32 %v1121, 0.0
      %v1194 = vmax.f32 %v1123, 0.0
      %v1195 = vmax.f32 %v1126, 0.0
      %v1196 = vmax.f32 %v1128, 0.0
      %v1197 = vmax.f32 %v1131, 0.0
      %v1198 = vmax.f32 %v1133, 0.0
      %v1199 = vld [vmem:[%s3] sm:$0x1]
      %v1201 = vperm.slane %v1199, 0
      %v1203 = vmul.f32 %v1135, %v1201
      %v1204 = vmul.f32 %v1136, %v1201
      %v1205 = vmul.f32 %v1137, %v1201
      %v1206 = vmul.f32 %v1138, %v1201
      %v1207 = vmul.f32 %v1139, %v1201
      %v1208 = vmul.f32 %v1140, %v1201
      %v1209 = vmul.f32 %v1141, %v1201
      %v1210 = vmul.f32 %v1142, %v1201
      %v1211 = vmul.f32 %v1143, %v1201
      %v1212 = vmul.f32 %v1144, %v1201
      %v1213 = vmul.f32 %v1145, %v1201
      %v1214 = vmul.f32 %v1146, %v1201
      %v1215 = vmul.f32 %v1147, %v1201
      %v1216 = vmul.f32 %v1148, %v1201
      %v1217 = vmul.f32 %v1149, %v1201
      %v1218 = vmul.f32 %v1150, %v1201
      %v1219 = vmul.f32 %v1151, %v1201
      %v1220 = vmul.f32 %v1152, %v1201
      %v1221 = vmul.f32 %v1153, %v1201
      %v1222 = vmul.f32 %v1154, %v1201
      %v1223 = vmul.f32 %v1155, %v1201
      %v1224 = vmul.f32 %v1156, %v1201
      %v1225 = vmul.f32 %v1157, %v1201
      %v1226 = vmul.f32 %v1158, %v1201
      %v1227 = vmul.f32 %v1159, %v1201
      %v1228 = vmul.f32 %v1160, %v1201
      %v1229 = vmul.f32 %v1161, %v1201
      %v1230 = vmul.f32 %v1162, %v1201
      %v1231 = vmul.f32 %v1163, %v1201
      %v1232 = vmul.f32 %v1164, %v1201
      %v1233 = vmul.f32 %v1165, %v1201
      %v1234 = vmul.f32 %v1166, %v1201
      %v1235 = vmul.f32 %v1167, %v1201
      %v1236 = vmul.f32 %v1168, %v1201
      %v1237 = vmul.f32 %v1169, %v1201
      %v1238 = vmul.f32 %v1170, %v1201
      %v1239 = vmul.f32 %v1171, %v1201
      %v1240 = vmul.f32 %v1172, %v1201
      %v1241 = vmul.f32 %v1173, %v1201
      %v1242 = vmul.f32 %v1174, %v1201
      %v1243 = vmul.f32 %v1175, %v1201
      %v1244 = vmul.f32 %v1176, %v1201
      %v1245 = vmul.f32 %v1177, %v1201
      %v1246 = vmul.f32 %v1178, %v1201
      %v1247 = vmul.f32 %v1179, %v1201
      %v1248 = vmul.f32 %v1180, %v1201
      %v1249 = vmul.f32 %v1181, %v1201
      %v1250 = vmul.f32 %v1182, %v1201
      %v1251 = vmul.f32 %v1183, %v1201
      %v1252 = vmul.f32 %v1184, %v1201
      %v1253 = vmul.f32 %v1185, %v1201
      %v1254 = vmul.f32 %v1186, %v1201
      %v1255 = vmul.f32 %v1187, %v1201
      %v1256 = vmul.f32 %v1188, %v1201
      %v1257 = vmul.f32 %v1189, %v1201
      %v1258 = vmul.f32 %v1190, %v1201
      %v1259 = vmul.f32 %v1191, %v1201
      %v1260 = vmul.f32 %v1192, %v1201
      %v1261 = vmul.f32 %v1193, %v1201
      %v1262 = vmul.f32 %v1194, %v1201
      %v1263 = vmul.f32 %v1195, %v1201
      %v1264 = vmul.f32 %v1196, %v1201
      %v1265 = vmul.f32 %v1197, %v1201
      %v1266 = vmul.f32 %v1198, %v1201
      %v1267 = vld [vmem:[%s4] sm:$0x1]
      %v1269 = vperm.slane %v1267, 0
      %v1271 = vadd.f32 %v1203, %v1269
      %v1272 = vadd.f32 %v1204, %v1269
      %v1273 = vadd.f32 %v1205, %v1269
      %v1274 = vadd.f32 %v1206, %v1269
      %v1275 = vadd.f32 %v1207, %v1269
      %v1276 = vadd.f32 %v1208, %v1269
      %v1277 = vadd.f32 %v1209, %v1269
      %v1278 = vadd.f32 %v1210, %v1269
      %v1279 = vadd.f32 %v1211, %v1269
      %v1280 = vadd.f32 %v1212, %v1269
      %v1281 = vadd.f32 %v1213, %v1269
      %v1282 = vadd.f32 %v1214, %v1269
      %v1283 = vadd.f32 %v1215, %v1269
      %v1284 = vadd.f32 %v1216, %v1269
      %v1285 = vadd.f32 %v1217, %v1269
      %v1286 = vadd.f32 %v1218, %v1269
      %v1287 = vadd.f32 %v1219, %v1269
      %v1288 = vadd.f32 %v1220, %v1269
      %v1289 = vadd.f32 %v1221, %v1269
      %v1290 = vadd.f32 %v1222, %v1269
      %v1291 = vadd.f32 %v1223, %v1269
      %v1292 = vadd.f32 %v1224, %v1269
      %v1293 = vadd.f32 %v1225, %v1269
      %v1294 = vadd.f32 %v1226, %v1269
      %v1295 = vadd.f32 %v1227, %v1269
      %v1296 = vadd.f32 %v1228, %v1269
      %v1297 = vadd.f32 %v1229, %v1269
      %v1298 = vadd.f32 %v1230, %v1269
      %v1299 = vadd.f32 %v1231, %v1269
      %v1300 = vadd.f32 %v1232, %v1269
      %v1301 = vadd.f32 %v1233, %v1269
      %v1302 = vadd.f32 %v1234, %v1269
      %v1303 = vadd.f32 %v1235, %v1269
      %v1304 = vadd.f32 %v1236, %v1269
      %v1305 = vadd.f32 %v1237, %v1269
      %v1306 = vadd.f32 %v1238, %v1269
      %v1307 = vadd.f32 %v1239, %v1269
      %v1308 = vadd.f32 %v1240, %v1269
      %v1309 = vadd.f32 %v1241, %v1269
      %v1310 = vadd.f32 %v1242, %v1269
      %v1311 = vadd.f32 %v1243, %v1269
      %v1312 = vadd.f32 %v1244, %v1269
      %v1313 = vadd.f32 %v1245, %v1269
      %v1314 = vadd.f32 %v1246, %v1269
      %v1315 = vadd.f32 %v1247, %v1269
      %v1316 = vadd.f32 %v1248, %v1269
      %v1317 = vadd.f32 %v1249, %v1269
      %v1318 = vadd.f32 %v1250, %v1269
      %v1319 = vadd.f32 %v1251, %v1269
      %v1320 = vadd.f32 %v1252, %v1269
      %v1321 = vadd.f32 %v1253, %v1269
      %v1322 = vadd.f32 %v1254, %v1269
      %v1323 = vadd.f32 %v1255, %v1269
      %v1324 = vadd.f32 %v1256, %v1269
      %v1325 = vadd.f32 %v1257, %v1269
      %v1326 = vadd.f32 %v1258, %v1269
      %v1327 = vadd.f32 %v1259, %v1269
      %v1328 = vadd.f32 %v1260, %v1269
      %v1329 = vadd.f32 %v1261, %v1269
      %v1330 = vadd.f32 %v1262, %v1269
      %v1331 = vadd.f32 %v1263, %v1269
      %v1332 = vadd.f32 %v1264, %v1269
      %v1333 = vadd.f32 %v1265, %v1269
      %v1334 = vadd.f32 %v1266, %v1269
      %vm1335 = vcmask 195584
      %1336 = vst.msk [vmem:[%s229] sm:$0xff] %vm1335, %v1271
      %1337 = vst.msk [vmem:[%s229 + $0x8] sm:$0xff] %vm1335, %v1272
      %1338 = vst.msk [vmem:[%s229 + $0x10] sm:$0xff] %vm1335, %v1273
      %1339 = vst.msk [vmem:[%s229 + $0x18] sm:$0xff] %vm1335, %v1274
      %1340 = vst.msk [vmem:[%s229 + $0x20] sm:$0xff] %vm1335, %v1275
      %1341 = vst.msk [vmem:[%s229 + $0x28] sm:$0xff] %vm1335, %v1276
      %1342 = vst.msk [vmem:[%s229 + $0x30] sm:$0xff] %vm1335, %v1277
      %1343 = vst.msk [vmem:[%s229 + $0x38] sm:$0xff] %vm1335, %v1278
      %1344 = vst.msk [vmem:[%s229 + $0x40] sm:$0xff] %vm1335, %v1279
      %1345 = vst.msk [vmem:[%s229 + $0x48] sm:$0xff] %vm1335, %v1280
      %1346 = vst.msk [vmem:[%s229 + $0x50] sm:$0xff] %vm1335, %v1281
      %1347 = vst.msk [vmem:[%s229 + $0x58] sm:$0xff] %vm1335, %v1282
      %1348 = vst.msk [vmem:[%s229 + $0x60] sm:$0xff] %vm1335, %v1283
      %1349 = vst.msk [vmem:[%s229 + $0x68] sm:$0xff] %vm1335, %v1284
      %1350 = vst.msk [vmem:[%s229 + $0x70] sm:$0xff] %vm1335, %v1285
      %1351 = vst.msk [vmem:[%s229 + $0x78] sm:$0xff] %vm1335, %v1286
      %1352 = vst.msk [vmem:[%s229 + $0x80] sm:$0xff] %vm1335, %v1287
      %1353 = vst.msk [vmem:[%s229 + $0x88] sm:$0xff] %vm1335, %v1288
      %1354 = vst.msk [vmem:[%s229 + $0x90] sm:$0xff] %vm1335, %v1289
      %1355 = vst.msk [vmem:[%s229 + $0x98] sm:$0xff] %vm1335, %v1290
      %1356 = vst.msk [vmem:[%s229 + $0xa0] sm:$0xff] %vm1335, %v1291
      %1357 = vst.msk [vmem:[%s229 + $0xa8] sm:$0xff] %vm1335, %v1292
      %1358 = vst.msk [vmem:[%s229 + $0xb0] sm:$0xff] %vm1335, %v1293
      %1359 = vst.msk [vmem:[%s229 + $0xb8] sm:$0xff] %vm1335, %v1294
      %1360 = vst.msk [vmem:[%s229 + $0xc0] sm:$0xff] %vm1335, %v1295
      %1361 = vst.msk [vmem:[%s229 + $0xc8] sm:$0xff] %vm1335, %v1296
      %1362 = vst.msk [vmem:[%s229 + $0xd0] sm:$0xff] %vm1335, %v1297
      %1363 = vst.msk [vmem:[%s229 + $0xd8] sm:$0xff] %vm1335, %v1298
      %1364 = vst.msk [vmem:[%s229 + $0xe0] sm:$0xff] %vm1335, %v1299
      %1365 = vst.msk [vmem:[%s229 + $0xe8] sm:$0xff] %vm1335, %v1300
      %1366 = vst.msk [vmem:[%s229 + $0xf0] sm:$0xff] %vm1335, %v1301
      %1367 = vst.msk [vmem:[%s229 + $0xf8] sm:$0xff] %vm1335, %v1302
      %1368 = vst.msk [vmem:[%s229 + $0x100] sm:$0xff] %vm1335, %v1303
      %1369 = vst.msk [vmem:[%s229 + $0x108] sm:$0xff] %vm1335, %v1304
      %1370 = vst.msk [vmem:[%s229 + $0x110] sm:$0xff] %vm1335, %v1305
      %1371 = vst.msk [vmem:[%s229 + $0x118] sm:$0xff] %vm1335, %v1306
      %1372 = vst.msk [vmem:[%s229 + $0x120] sm:$0xff] %vm1335, %v1307
      %1373 = vst.msk [vmem:[%s229 + $0x128] sm:$0xff] %vm1335, %v1308
      %1374 = vst.msk [vmem:[%s229 + $0x130] sm:$0xff] %vm1335, %v1309
      %1375 = vst.msk [vmem:[%s229 + $0x138] sm:$0xff] %vm1335, %v1310
      %1376 = vst.msk [vmem:[%s229 + $0x140] sm:$0xff] %vm1335, %v1311
      %1377 = vst.msk [vmem:[%s229 + $0x148] sm:$0xff] %vm1335, %v1312
      %1378 = vst.msk [vmem:[%s229 + $0x150] sm:$0xff] %vm1335, %v1313
      %1379 = vst.msk [vmem:[%s229 + $0x158] sm:$0xff] %vm1335, %v1314
      %1380 = vst.msk [vmem:[%s229 + $0x160] sm:$0xff] %vm1335, %v1315
      %1381 = vst.msk [vmem:[%s229 + $0x168] sm:$0xff] %vm1335, %v1316
      %1382 = vst.msk [vmem:[%s229 + $0x170] sm:$0xff] %vm1335, %v1317
      %1383 = vst.msk [vmem:[%s229 + $0x178] sm:$0xff] %vm1335, %v1318
      %1384 = vst.msk [vmem:[%s229 + $0x180] sm:$0xff] %vm1335, %v1319
      %1385 = vst.msk [vmem:[%s229 + $0x188] sm:$0xff] %vm1335, %v1320
      %1386 = vst.msk [vmem:[%s229 + $0x190] sm:$0xff] %vm1335, %v1321
      %1387 = vst.msk [vmem:[%s229 + $0x198] sm:$0xff] %vm1335, %v1322
      %1388 = vst.msk [vmem:[%s229 + $0x1a0] sm:$0xff] %vm1335, %v1323
      %1389 = vst.msk [vmem:[%s229 + $0x1a8] sm:$0xff] %vm1335, %v1324
      %1390 = vst.msk [vmem:[%s229 + $0x1b0] sm:$0xff] %vm1335, %v1325
      %1391 = vst.msk [vmem:[%s229 + $0x1b8] sm:$0xff] %vm1335, %v1326
      %1392 = vst.msk [vmem:[%s229 + $0x1c0] sm:$0xff] %vm1335, %v1327
      %1393 = vst.msk [vmem:[%s229 + $0x1c8] sm:$0xff] %vm1335, %v1328
      %1394 = vst.msk [vmem:[%s229 + $0x1d0] sm:$0xff] %vm1335, %v1329
      %1395 = vst.msk [vmem:[%s229 + $0x1d8] sm:$0xff] %vm1335, %v1330
      %1396 = vst.msk [vmem:[%s229 + $0x1e0] sm:$0xff] %vm1335, %v1331
      %1397 = vst.msk [vmem:[%s229 + $0x1e8] sm:$0xff] %vm1335, %v1332
      %1398 = vst.msk [vmem:[%s229 + $0x1f0] sm:$0xff] %vm1335, %v1333
      %1399 = vst.msk [vmem:[%s229 + $0x1f8] sm:$0xff] %vm1335, %v1334
      %s1400 = smul.u32 64, %s16
      %p1401 = scmp.lt.s32.totalorder %s1400, 127
      %s1402 = scalar_select %p1401, %s1400, 127
      %s1403 = smul.addr %s1402, 8
      %s1404 = scalar_lea.vmem %s5, %s1403
      // Predicated region
      $region41: #{cnn_mlp_forward.6} parent=39 // pred_check
        %p1405 = pneg %p144
      $region42: #{cnn_mlp_forward.6} parent=39 // pred_check_branch
        %1407 = sbr.rel (%p1405) target = $region44
      $region43: #{cnn_mlp_forward.6} parent=39 // pred_region
        %s1408 = smul.u32 64, %s16
      $region44: #{cnn_mlp_forward.6} parent=39 // pred_fallthru
        _
    $region40: #{cnn_mlp_forward.6} parent=5 // pred_fallthru
      _
    %p1409 = scmp.le.s32.totalorder 2, %s11
    // Predicated region
    $region45: #{cnn_mlp_forward.6} parent=5 // pred_check
      %p1410 = pneg %p1409
    $region46: #{cnn_mlp_forward.6} parent=5 // pred_check_branch
      %1412 = sbr.rel (%p1410) target = $region48
    $region47: #{cnn_mlp_forward.6} parent=5 // pred_region
      %s1413 = ssub.s32 %s11, 2
      // Predicated region
      $region49: #{cnn_mlp_forward.6} parent=47 // pred_check
        %p1414 = pneg %p150
      $region50: #{cnn_mlp_forward.6} parent=47 // pred_check_branch
        %1416 = sbr.rel (%p1414) target = $region52
      $region51: #{cnn_mlp_forward.6} parent=47 // pred_region
        %s1417 = smul.u32 64, %s17
        %p1418 = scmp.lt.s32.totalorder %s1417, 127
        %s1419 = scalar_select %p1418, %s1417, 127
        %s1420 = smul.addr %s1419, 8
        %s1421 = scalar_lea.vmem %s5, %s1420
      $region52: #{cnn_mlp_forward.6} parent=47 // pred_fallthru
        _
    $region48: #{cnn_mlp_forward.6} parent=5 // pred_fallthru
      _
  $region6: #{cnn_mlp_forward.6} parent=0 // loop_footer
    %s15 = sadd.s32 1, %s11
  $region7: #{cnn_mlp_forward.6} parent=0 // loop_footer_branch
    %10 = sbr.rel target = $region3
  $region8: #{cnn_mlp_forward.6} parent=0 // loop_exit
    _

// kernel: cnn_mlp_forward.7
$region0: #{cnn_mlp_forward.7}
  #allocation0 [shape = 'u32[]', space=smem, size = 0x4, offset = 0x4, fixed_abs, tag = 'smem constant byte address 0x4 - core index']
  #allocation1 [shape = 'u32[72,128]{1,0:T(1,128)}', space=vmem, size = 0x9000, scoped, tag = 'internal scratch']
  %s0 = inlined_call_operand.vmem [shape: bf16[256,216], index: 0, kind: input, shape index: {}]
  %s1 = inlined_call_operand.vmem [shape: bf16[216,24], index: 1, kind: input, shape index: {}]
  %s2 = inlined_call_operand.vmem [shape: f32[1,24], index: 2, kind: input, shape index: {}]
  %s3 = inlined_call_operand.vmem [shape: f32[1,24], index: 3, kind: input, shape index: {}]
  %s4 = inlined_call_operand.vmem [shape: f32[1,24], index: 4, kind: input, shape index: {}]
  %s5 = inlined_call_operand.vmem [shape: f32[256,24], index: 5, kind: output, shape index: {}]
  %s6 = sld [smem:[#allocation0]]
  $region30: #{cnn_mlp_forward.7} parent=0
    _
  %s8 = ssub.s32 1, %s6
  %s9 = scalar_select 0, %s8, %s6
  // Predicated region
  $region2: #{cnn_mlp_forward.7} parent=0 // pred_check
    _
  $region3: #{cnn_mlp_forward.7} parent=0 // pred_check_branch
    %11 = sbr.rel (0) target = $region5
  $region4: #{cnn_mlp_forward.7} parent=0 // pred_region
    _
  $region5: #{cnn_mlp_forward.7} parent=0 // pred_fallthru
    _
  // Predicated region
  $region6: #{cnn_mlp_forward.7} parent=0 // pred_check
    _
  $region7: #{cnn_mlp_forward.7} parent=0 // pred_check_branch
    %13 = sbr.rel (0) target = $region9
  $region8: #{cnn_mlp_forward.7} parent=0 // pred_region
    _
  $region9: #{cnn_mlp_forward.7} parent=0 // pred_fallthru
    _
  // Predicated region
  $region10: #{cnn_mlp_forward.7} parent=0 // pred_check
    _
  $region11: #{cnn_mlp_forward.7} parent=0 // pred_check_branch
    %15 = sbr.rel (0) target = $region13
  $region12: #{cnn_mlp_forward.7} parent=0 // pred_region
    _
  $region13: #{cnn_mlp_forward.7} parent=0 // pred_fallthru
    _
  // Predicated region
  $region14: #{cnn_mlp_forward.7} parent=0 // pred_check
    _
  $region15: #{cnn_mlp_forward.7} parent=0 // pred_check_branch
    %17 = sbr.rel (0) target = $region17
  $region16: #{cnn_mlp_forward.7} parent=0 // pred_region
    _
  $region17: #{cnn_mlp_forward.7} parent=0 // pred_fallthru
    _
  // Predicated region
  $region18: #{cnn_mlp_forward.7} parent=0 // pred_check
    _
  $region19: #{cnn_mlp_forward.7} parent=0 // pred_check_branch
    %19 = sbr.rel (0) target = $region21
  $region20: #{cnn_mlp_forward.7} parent=0 // pred_region
    _
  $region21: #{cnn_mlp_forward.7} parent=0 // pred_fallthru
    _
  %v21 = vld [vmem:[%s0] sm:$0xff]
  %v22 = vld [vmem:[%s0 + $0x8] sm:$0xff]
  %v23 = vld [vmem:[%s0 + $0x10] sm:$0xff]
  %v24 = vld [vmem:[%s0 + $0x18] sm:$0xff]
  %v25 = vld [vmem:[%s0 + $0x20] sm:$0xff]
  %v26 = vld [vmem:[%s0 + $0x28] sm:$0xff]
  %v27 = vld [vmem:[%s0 + $0x30] sm:$0xff]
  %v28 = vld [vmem:[%s0 + $0x38] sm:$0xff]
  %v29 = vld [vmem:[%s0 + $0x40] sm:$0xff]
  %v30 = vld [vmem:[%s0 + $0x48] sm:$0xff]
  %v31 = vld [vmem:[%s0 + $0x50] sm:$0xff]
  %v32 = vld [vmem:[%s0 + $0x58] sm:$0xff]
  %v33 = vld [vmem:[%s0 + $0x60] sm:$0xff]
  %v34 = vld [vmem:[%s0 + $0x68] sm:$0xff]
  %v35 = vld [vmem:[%s0 + $0x70] sm:$0xff]
  %v36 = vld [vmem:[%s0 + $0x78] sm:$0xff]
  %v37 = vld [vmem:[%s0 + $0x80] sm:$0xff]
  %v38 = vld [vmem:[%s0 + $0x88] sm:$0xff]
  %v39 = vld [vmem:[%s0 + $0x90] sm:$0xff]
  %v40 = vld [vmem:[%s0 + $0x98] sm:$0xff]
  %v41 = vld [vmem:[%s0 + $0xa0] sm:$0xff]
  %v42 = vld [vmem:[%s0 + $0xa8] sm:$0xff]
  %v43 = vld [vmem:[%s0 + $0xb0] sm:$0xff]
  %v44 = vld [vmem:[%s0 + $0xb8] sm:$0xff]
  %v45 = vld [vmem:[%s0 + $0xc0] sm:$0xff]
  %v46 = vld [vmem:[%s0 + $0xc8] sm:$0xff]
  %v47 = vld [vmem:[%s0 + $0xd0] sm:$0xff]
  %v48 = vld [vmem:[%s0 + $0xd8] sm:$0xff]
  %v49 = vld [vmem:[%s0 + $0xe0] sm:$0xff]
  %v50 = vld [vmem:[%s0 + $0xe8] sm:$0xff]
  %v51 = vld [vmem:[%s0 + $0xf0] sm:$0xff]
  %v52 = vld [vmem:[%s0 + $0xf8] sm:$0xff]
  %v53 = vld [vmem:[%s1] sm:$0xf]
  %v54 = vld [vmem:[%s1 + $0x4] sm:$0xf]
  %v55 = vld [vmem:[%s1 + $0x8] sm:$0xf]
  %v56 = vld [vmem:[%s1 + $0xc] sm:$0xf]
  %v57 = vld [vmem:[%s1 + $0x10] sm:$0xf]
  %v58 = vld [vmem:[%s1 + $0x14] sm:$0xf]
  %v59 = vld [vmem:[%s1 + $0x18] sm:$0xf]
  %v60 = vld [vmem:[%s1 + $0x1c] sm:$0xf]
  %v61 = vld [vmem:[%s1 + $0x20] sm:$0xf]
  %v62 = vld [vmem:[%s1 + $0x24] sm:$0xf]
  %v63 = vld [vmem:[%s1 + $0x28] sm:$0xf]
  %v64 = vld [vmem:[%s1 + $0x2c] sm:$0xf]
  %v65 = vld [vmem:[%s1 + $0x30] sm:$0xf]
  %v66 = vld [vmem:[%s1 + $0x34] sm:$0xf]
  %v67 = vld [vmem:[%s1 + $0x38] sm:$0xf]
  %v68 = vld [vmem:[%s1 + $0x3c] sm:$0xf]
  %v69 = vld [vmem:[%s1 + $0x40] sm:$0xf]
  %v70 = vld [vmem:[%s1 + $0x44] sm:$0xf]
  %v71 = vld [vmem:[%s1 + $0x48] sm:$0xf]
  %v72 = vld [vmem:[%s1 + $0x4c] sm:$0xf]
  %v73 = vld [vmem:[%s1 + $0x50] sm:$0xf]
  %v74 = vld [vmem:[%s1 + $0x54] sm:$0xf]
  %v75 = vld [vmem:[%s1 + $0x58] sm:$0xf]
  %v76 = vld [vmem:[%s1 + $0x5c] sm:$0xf]
  %v77 = vld [vmem:[%s1 + $0x60] sm:$0xf]
  %v78 = vld [vmem:[%s1 + $0x64] sm:$0xf]
  %v79 = vld [vmem:[%s1 + $0x68] sm:$0xf]
  %v80 = vld [vmem:[%s2] sm:$0x1]
  %v82 = vperm.slane %v80, 0
  %v116 = vunpack.c.l.b16 %v21
  %v117 = vunpack.c.h.b16 %v21
  %v118 = vunpack.c.l.b16 %v22
  %v119 = vunpack.c.h.b16 %v22
  %v120 = vunpack.c.l.b16 %v23
  %v121 = vunpack.c.h.b16 %v23
  %v122 = vunpack.c.l.b16 %v24
  %v123 = vunpack.c.h.b16 %v24
  %v124 = vunpack.c.l.b16 %v25
  %v125 = vunpack.c.h.b16 %v25
  %v126 = vunpack.c.l.b16 %v26
  %v127 = vunpack.c.h.b16 %v26
  %v128 = vunpack.c.l.b16 %v27
  %v129 = vunpack.c.h.b16 %v27
  %v130 = vunpack.c.l.b16 %v28
  %v131 = vunpack.c.h.b16 %v28
  %v132 = vunpack.c.l.b16 %v29
  %v133 = vunpack.c.h.b16 %v29
  %v134 = vunpack.c.l.b16 %v30
  %v135 = vunpack.c.h.b16 %v30
  %v136 = vunpack.c.l.b16 %v31
  %v137 = vunpack.c.h.b16 %v31
  %v138 = vunpack.c.l.b16 %v32
  %v139 = vunpack.c.h.b16 %v32
  %v140 = vunpack.c.l.b16 %v33
  %v141 = vunpack.c.h.b16 %v33
  %v142 = vunpack.c.l.b16 %v34
  %v143 = vunpack.c.h.b16 %v34
  %v144 = vunpack.c.l.b16 %v35
  %v145 = vunpack.c.h.b16 %v35
  %v146 = vunpack.c.l.b16 %v36
  %v147 = vunpack.c.h.b16 %v36
  %v148 = vunpack.c.l.b16 %v37
  %v149 = vunpack.c.h.b16 %v37
  %v150 = vunpack.c.l.b16 %v38
  %v151 = vunpack.c.h.b16 %v38
  %v152 = vunpack.c.l.b16 %v39
  %v153 = vunpack.c.h.b16 %v39
  %v154 = vunpack.c.l.b16 %v40
  %v155 = vunpack.c.h.b16 %v40
  %v156 = vunpack.c.l.b16 %v41
  %v157 = vunpack.c.h.b16 %v41
  %v158 = vunpack.c.l.b16 %v42
  %v159 = vunpack.c.h.b16 %v42
  %v160 = vunpack.c.l.b16 %v43
  %v161 = vunpack.c.h.b16 %v43
  %v162 = vunpack.c.l.b16 %v44
  %v163 = vunpack.c.h.b16 %v44
  %v164 = vunpack.c.l.b16 %v45
  %v165 = vunpack.c.h.b16 %v45
  %v166 = vunpack.c.l.b16 %v46
  %v167 = vunpack.c.h.b16 %v46
  %v168 = vunpack.c.l.b16 %v47
  %v169 = vunpack.c.h.b16 %v47
  %v170 = vunpack.c.l.b16 %v48
  %v171 = vunpack.c.h.b16 %v48
  %v172 = vunpack.c.l.b16 %v49
  %v173 = vunpack.c.h.b16 %v49
  %v174 = vunpack.c.l.b16 %v50
  %v175 = vunpack.c.h.b16 %v50
  %v176 = vunpack.c.l.b16 %v51
  %v177 = vunpack.c.h.b16 %v51
  %v178 = vunpack.c.l.b16 %v52
  %v179 = vunpack.c.h.b16 %v52
  %v180 = vpack.c.b16 %v118, %v116
  %v181 = vpack.c.b16 %v119, %v117
  %v182 = vpack.c.b16 %v122, %v120
  %v183 = vpack.c.b16 %v123, %v121
  %v184 = vpack.c.b16 %v126, %v124
  %v185 = vpack.c.b16 %v127, %v125
  %v186 = vpack.c.b16 %v130, %v128
  %v187 = vpack.c.b16 %v131, %v129
  %v188 = vpack.c.b16 %v134, %v132
  %v189 = vpack.c.b16 %v135, %v133
  %v190 = vpack.c.b16 %v138, %v136
  %v191 = vpack.c.b16 %v139, %v137
  %v192 = vpack.c.b16 %v142, %v140
  %v193 = vpack.c.b16 %v143, %v141
  %v194 = vpack.c.b16 %v146, %v144
  %v195 = vpack.c.b16 %v147, %v145
  %v196 = vpack.c.b16 %v150, %v148
  %v197 = vpack.c.b16 %v151, %v149
  %v198 = vpack.c.b16 %v154, %v152
  %v199 = vpack.c.b16 %v155, %v153
  %v200 = vpack.c.b16 %v158, %v156
  %v201 = vpack.c.b16 %v159, %v157
  %v202 = vpack.c.b16 %v162, %v160
  %v203 = vpack.c.b16 %v163, %v161
  %v204 = vpack.c.b16 %v166, %v164
  %v205 = vpack.c.b16 %v167, %v165
  %v206 = vpack.c.b16 %v170, %v168
  %v207 = vpack.c.b16 %v171, %v169
  %v208 = vpack.c.b16 %v174, %v172
  %v209 = vpack.c.b16 %v175, %v173
  %v210 = vpack.c.b16 %v178, %v176
  %v211 = vpack.c.b16 %v179, %v177
  %v255 = vunpack.c.l.b16 %v53
  %v256 = vunpack.c.l.b16 %v54
  %v257 = vunpack.c.l.b16 %v55
  %v258 = vunpack.c.l.b16 %v56
  %v259 = vunpack.c.l.b16 %v57
  %v260 = vunpack.c.l.b16 %v58
  %v261 = vunpack.c.l.b16 %v59
  %v262 = vunpack.c.l.b16 %v60
  %v263 = vunpack.c.l.b16 %v61
  %v264 = vunpack.c.l.b16 %v62
  %v265 = vunpack.c.l.b16 %v63
  %v266 = vunpack.c.l.b16 %v64
  %v267 = vunpack.c.l.b16 %v65
  %v268 = vunpack.c.l.b16 %v66
  %v269 = vunpack.c.l.b16 %v67
  %v270 = vunpack.c.l.b16 %v68
  %v271 = vunpack.c.l.b16 %v69
  %v272 = vunpack.c.l.b16 %v70
  %v273 = vunpack.c.l.b16 %v71
  %v274 = vunpack.c.l.b16 %v72
  %v275 = vunpack.c.l.b16 %v73
  %v276 = vunpack.c.l.b16 %v74
  %v277 = vunpack.c.l.b16 %v75
  %v278 = vunpack.c.l.b16 %v76
  %v279 = vunpack.c.l.b16 %v77
  %v280 = vunpack.c.l.b16 %v78
  %v281 = vunpack.c.l.b16 %v79
  %v282 = vpack.c.b16 %v256, %v255
  %v283 = vpack.c.b16 %v258, %v257
  %v284 = vpack.c.b16 %v260, %v259
  %v285 = vpack.c.b16 %v262, %v261
  %v286 = vpack.c.b16 %v264, %v263
  %v287 = vpack.c.b16 %v266, %v265
  %v288 = vpack.c.b16 %v268, %v267
  %v289 = vpack.c.b16 %v270, %v269
  %v290 = vpack.c.b16 %v272, %v271
  %v291 = vpack.c.b16 %v274, %v273
  %v292 = vpack.c.b16 %v276, %v275
  %v293 = vpack.c.b16 %v278, %v277
  %v294 = vpack.c.b16 %v280, %v279
  %v295 = vpack.c.b16 %v281, %v281
  %vm309 = vcmask 719872
  %v311 = vsel %vm309, %v181, 0
  %v314 = vsel %vm309, %v183, 0
  %v317 = vsel %vm309, %v185, 0
  %v320 = vsel %vm309, %v187, 0
  %v323 = vsel %vm309, %v189, 0
  %v326 = vsel %vm309, %v191, 0
  %v329 = vsel %vm309, %v193, 0
  %v332 = vsel %vm309, %v195, 0
  %v335 = vsel %vm309, %v197, 0
  %v338 = vsel %vm309, %v199, 0
  %v341 = vsel %vm309, %v201, 0
  %v344 = vsel %vm309, %v203, 0
  %v347 = vsel %vm309, %v205, 0
  %v350 = vsel %vm309, %v207, 0
  %v353 = vsel %vm309, %v209, 0
  %v356 = vsel %vm309, %v211, 0
  %vm358 = vcmask 1043456
  %v360 = vsel %vm358, %v295, 0
  %362 = vmatpush.bf16.msra.mxu0 %v289
  %363 = vmatpush.bf16.msra.mxu0 %v288
  %364 = vmatpush.bf16.msra.mxu0 %v287
  %365 = vmatpush.bf16.msra.mxu0 %v286
  %366 = vmatpush.bf16.msra.mxu0 %v285
  %367 = vmatpush.bf16.msra.mxu0 %v284
  %368 = vmatpush.bf16.msra.mxu0 %v283
  %369 = vmatpush.bf16.msra.mxu0 %v282
  %370 = vmatmul.bf16.gmra.mxu0 %v180
  %v371 = vpop.f32.mrf.mxu0
  %v372 = vadd.f32 %v82, %v371
  %v373 = vpop.f32.mrf.mxu0
  %v374 = vadd.f32 %v82, %v373
  %375 = vmatmul.bf16.gmra.mxu0 %v182
  %v376 = vpop.f32.mrf.mxu0
  %v377 = vadd.f32 %v82, %v376
  %v378 = vpop.f32.mrf.mxu0
  %v379 = vadd.f32 %v82, %v378
  %380 = vmatmul.bf16.gmra.mxu0 %v184
  %v381 = vpop.f32.mrf.mxu0
  %v382 = vadd.f32 %v82, %v381
  %v383 = vpop.f32.mrf.mxu0
  %v384 = vadd.f32 %v82, %v383
  %385 = vmatmul.bf16.gmra.mxu0 %v186
  %v386 = vpop.f32.mrf.mxu0
  %v387 = vadd.f32 %v82, %v386
  %v388 = vpop.f32.mrf.mxu0
  %v389 = vadd.f32 %v82, %v388
  %390 = vmatmul.bf16.gmra.mxu0 %v188
  %v391 = vpop.f32.mrf.mxu0
  %v392 = vadd.f32 %v82, %v391
  %v393 = vpop.f32.mrf.mxu0
  %v394 = vadd.f32 %v82, %v393
  %395 = vmatmul.bf16.gmra.mxu0 %v190
  %v396 = vpop.f32.mrf.mxu0
  %v397 = vadd.f32 %v82, %v396
  %v398 = vpop.f32.mrf.mxu0
  %v399 = vadd.f32 %v82, %v398
  %400 = vmatmul.bf16.gmra.mxu0 %v192
  %v401 = vpop.f32.mrf.mxu0
  %v402 = vadd.f32 %v82, %v401
  %v403 = vpop.f32.mrf.mxu0
  %v404 = vadd.f32 %v82, %v403
  %405 = vmatmul.bf16.gmra.mxu0 %v194
  %v406 = vpop.f32.mrf.mxu0
  %v407 = vadd.f32 %v82, %v406
  %v408 = vpop.f32.mrf.mxu0
  %v409 = vadd.f32 %v82, %v408
  %410 = vmatmul.bf16.gmra.mxu0 %v196
  %v411 = vpop.f32.mrf.mxu0
  %v412 = vadd.f32 %v82, %v411
  %v413 = vpop.f32.mrf.mxu0
  %v414 = vadd.f32 %v82, %v413
  %415 = vmatmul.bf16.gmra.mxu0 %v198
  %v416 = vpop.f32.mrf.mxu0
  %v417 = vadd.f32 %v82, %v416
  %v418 = vpop.f32.mrf.mxu0
  %v419 = vadd.f32 %v82, %v418
  %420 = vmatmul.bf16.gmra.mxu0 %v200
  %v421 = vpop.f32.mrf.mxu0
  %v422 = vadd.f32 %v82, %v421
  %v423 = vpop.f32.mrf.mxu0
  %v424 = vadd.f32 %v82, %v423
  %425 = vmatmul.bf16.gmra.mxu0 %v202
  %v426 = vpop.f32.mrf.mxu0
  %v427 = vadd.f32 %v82, %v426
  %v428 = vpop.f32.mrf.mxu0
  %v429 = vadd.f32 %v82, %v428
  %430 = vmatmul.bf16.gmra.mxu0 %v204
  %v431 = vpop.f32.mrf.mxu0
  %v432 = vadd.f32 %v82, %v431
  %v433 = vpop.f32.mrf.mxu0
  %v434 = vadd.f32 %v82, %v433
  %435 = vmatmul.bf16.gmra.mxu0 %v206
  %v436 = vpop.f32.mrf.mxu0
  %v437 = vadd.f32 %v82, %v436
  %v438 = vpop.f32.mrf.mxu0
  %v439 = vadd.f32 %v82, %v438
  %440 = vmatmul.bf16.gmra.mxu0 %v208
  %v441 = vpop.f32.mrf.mxu0
  %v442 = vadd.f32 %v82, %v441
  %v443 = vpop.f32.mrf.mxu0
  %v444 = vadd.f32 %v82, %v443
  %445 = vmatmul.bf16.gmra.mxu0 %v210
  %v446 = vpop.f32.mrf.mxu0
  %v447 = vadd.f32 %v82, %v446
  %v448 = vpop.f32.mrf.mxu0
  %v449 = vadd.f32 %v82, %v448
  %450 = vdwg.mxu0
  %451 = vmatpush.bf16.msra.mxu0 0
  %452 = vmatpush.bf16.msra.mxu0 0
  %453 = vmatpush.bf16.msra.mxu0 %v360
  %454 = vmatpush.bf16.msra.mxu0 %v294
  %455 = vmatpush.bf16.msra.mxu0 %v293
  %456 = vmatpush.bf16.msra.mxu0 %v292
  %457 = vmatpush.bf16.msra.mxu0 %v291
  %458 = vmatpush.bf16.msra.mxu0 %v290
  %459 = vmatmul.bf16.gmra.mxu0 %v311
  %v460 = vpop.f32.mrf.mxu0
  %v461 = vadd.f32 %v372, %v460
  %v462 = vpop.f32.mrf.mxu0
  %v463 = vadd.f32 %v374, %v462
  %464 = vmatmul.bf16.gmra.mxu0 %v314
  %v465 = vpop.f32.mrf.mxu0
  %v466 = vadd.f32 %v377, %v465
  %v467 = vpop.f32.mrf.mxu0
  %v468 = vadd.f32 %v379, %v467
  %469 = vmatmul.bf16.gmra.mxu0 %v317
  %v470 = vpop.f32.mrf.mxu0
  %v471 = vadd.f32 %v382, %v470
  %v472 = vpop.f32.mrf.mxu0
  %v473 = vadd.f32 %v384, %v472
  %474 = vmatmul.bf16.gmra.mxu0 %v320
  %v475 = vpop.f32.mrf.mxu0
  %v476 = vadd.f32 %v387, %v475
  %v477 = vpop.f32.mrf.mxu0
  %v478 = vadd.f32 %v389, %v477
  %479 = vmatmul.bf16.gmra.mxu0 %v323
  %v480 = vpop.f32.mrf.mxu0
  %v481 = vadd.f32 %v392, %v480
  %v482 = vpop.f32.mrf.mxu0
  %v483 = vadd.f32 %v394, %v482
  %484 = vmatmul.bf16.gmra.mxu0 %v326
  %v485 = vpop.f32.mrf.mxu0
  %v486 = vadd.f32 %v397, %v485
  %v487 = vpop.f32.mrf.mxu0
  %v488 = vadd.f32 %v399, %v487
  %489 = vmatmul.bf16.gmra.mxu0 %v329
  %v490 = vpop.f32.mrf.mxu0
  %v491 = vadd.f32 %v402, %v490
  %v492 = vpop.f32.mrf.mxu0
  %v493 = vadd.f32 %v404, %v492
  %494 = vmatmul.bf16.gmra.mxu0 %v332
  %v495 = vpop.f32.mrf.mxu0
  %v496 = vadd.f32 %v407, %v495
  %v497 = vpop.f32.mrf.mxu0
  %v498 = vadd.f32 %v409, %v497
  %499 = vmatmul.bf16.gmra.mxu0 %v335
  %v500 = vpop.f32.mrf.mxu0
  %v501 = vadd.f32 %v412, %v500
  %v502 = vpop.f32.mrf.mxu0
  %v503 = vadd.f32 %v414, %v502
  %504 = vmatmul.bf16.gmra.mxu0 %v338
  %v505 = vpop.f32.mrf.mxu0
  %v506 = vadd.f32 %v417, %v505
  %v507 = vpop.f32.mrf.mxu0
  %v508 = vadd.f32 %v419, %v507
  %509 = vmatmul.bf16.gmra.mxu0 %v341
  %v510 = vpop.f32.mrf.mxu0
  %v511 = vadd.f32 %v422, %v510
  %v512 = vpop.f32.mrf.mxu0
  %v513 = vadd.f32 %v424, %v512
  %514 = vmatmul.bf16.gmra.mxu0 %v344
  %v515 = vpop.f32.mrf.mxu0
  %v516 = vadd.f32 %v427, %v515
  %v517 = vpop.f32.mrf.mxu0
  %v518 = vadd.f32 %v429, %v517
  %519 = vmatmul.bf16.gmra.mxu0 %v347
  %v520 = vpop.f32.mrf.mxu0
  %v521 = vadd.f32 %v432, %v520
  %v522 = vpop.f32.mrf.mxu0
  %v523 = vadd.f32 %v434, %v522
  %524 = vmatmul.bf16.gmra.mxu0 %v350
  %v525 = vpop.f32.mrf.mxu0
  %v526 = vadd.f32 %v437, %v525
  %v527 = vpop.f32.mrf.mxu0
  %v528 = vadd.f32 %v439, %v527
  %529 = vmatmul.bf16.gmra.mxu0 %v353
  %v530 = vpop.f32.mrf.mxu0
  %v531 = vadd.f32 %v442, %v530
  %v532 = vpop.f32.mrf.mxu0
  %v533 = vadd.f32 %v444, %v532
  %534 = vmatmul.bf16.gmra.mxu0 %v356
  %v535 = vpop.f32.mrf.mxu0
  %v536 = vadd.f32 %v447, %v535
  %v537 = vpop.f32.mrf.mxu0
  %v538 = vadd.f32 %v449, %v537
  %539 = vdwg.mxu0
  %v540 = vmax.f32 %v461, 0.0
  %v541 = vmax.f32 %v463, 0.0
  %v542 = vmax.f32 %v466, 0.0
  %v543 = vmax.f32 %v468, 0.0
  %v544 = vmax.f32 %v471, 0.0
  %v545 = vmax.f32 %v473, 0.0
  %v546 = vmax.f32 %v476, 0.0
  %v547 = vmax.f32 %v478, 0.0
  %v548 = vmax.f32 %v481, 0.0
  %v549 = vmax.f32 %v483, 0.0
  %v550 = vmax.f32 %v486, 0.0
  %v551 = vmax.f32 %v488, 0.0
  %v552 = vmax.f32 %v491, 0.0
  %v553 = vmax.f32 %v493, 0.0
  %v554 = vmax.f32 %v496, 0.0
  %v555 = vmax.f32 %v498, 0.0
  %v556 = vmax.f32 %v501, 0.0
  %v557 = vmax.f32 %v503, 0.0
  %v558 = vmax.f32 %v506, 0.0
  %v559 = vmax.f32 %v508, 0.0
  %v560 = vmax.f32 %v511, 0.0
  %v561 = vmax.f32 %v513, 0.0
  %v562 = vmax.f32 %v516, 0.0
  %v563 = vmax.f32 %v518, 0.0
  %v564 = vmax.f32 %v521, 0.0
  %v565 = vmax.f32 %v523, 0.0
  %v566 = vmax.f32 %v526, 0.0
  %v567 = vmax.f32 %v528, 0.0
  %v568 = vmax.f32 %v531, 0.0
  %v569 = vmax.f32 %v533, 0.0
  %v570 = vmax.f32 %v536, 0.0
  %v571 = vmax.f32 %v538, 0.0
  %v572 = vld [vmem:[%s3] sm:$0x1]
  %v574 = vperm.slane %v572, 0
  %v576 = vmul.f32 %v540, %v574
  %v577 = vmul.f32 %v541, %v574
  %v578 = vmul.f32 %v542, %v574
  %v579 = vmul.f32 %v543, %v574
  %v580 = vmul.f32 %v544, %v574
  %v581 = vmul.f32 %v545, %v574
  %v582 = vmul.f32 %v546, %v574
  %v583 = vmul.f32 %v547, %v574
  %v584 = vmul.f32 %v548, %v574
  %v585 = vmul.f32 %v549, %v574
  %v586 = vmul.f32 %v550, %v574
  %v587 = vmul.f32 %v551, %v574
  %v588 = vmul.f32 %v552, %v574
  %v589 = vmul.f32 %v553, %v574
  %v590 = vmul.f32 %v554, %v574
  %v591 = vmul.f32 %v555, %v574
  %v592 = vmul.f32 %v556, %v574
  %v593 = vmul.f32 %v557, %v574
  %v594 = vmul.f32 %v558, %v574
  %v595 = vmul.f32 %v559, %v574
  %v596 = vmul.f32 %v560, %v574
  %v597 = vmul.f32 %v561, %v574
  %v598 = vmul.f32 %v562, %v574
  %v599 = vmul.f32 %v563, %v574
  %v600 = vmul.f32 %v564, %v574
  %v601 = vmul.f32 %v565, %v574
  %v602 = vmul.f32 %v566, %v574
  %v603 = vmul.f32 %v567, %v574
  %v604 = vmul.f32 %v568, %v574
  %v605 = vmul.f32 %v569, %v574
  %v606 = vmul.f32 %v570, %v574
  %v607 = vmul.f32 %v571, %v574
  %v608 = vld [vmem:[%s4] sm:$0x1]
  %v610 = vperm.slane %v608, 0
  %v612 = vadd.f32 %v576, %v610
  %v613 = vadd.f32 %v577, %v610
  %v614 = vadd.f32 %v578, %v610
  %v615 = vadd.f32 %v579, %v610
  %v616 = vadd.f32 %v580, %v610
  %v617 = vadd.f32 %v581, %v610
  %v618 = vadd.f32 %v582, %v610
  %v619 = vadd.f32 %v583, %v610
  %v620 = vadd.f32 %v584, %v610
  %v621 = vadd.f32 %v585, %v610
  %v622 = vadd.f32 %v586, %v610
  %v623 = vadd.f32 %v587, %v610
  %v624 = vadd.f32 %v588, %v610
  %v625 = vadd.f32 %v589, %v610
  %v626 = vadd.f32 %v590, %v610
  %v627 = vadd.f32 %v591, %v610
  %v628 = vadd.f32 %v592, %v610
  %v629 = vadd.f32 %v593, %v610
  %v630 = vadd.f32 %v594, %v610
  %v631 = vadd.f32 %v595, %v610
  %v632 = vadd.f32 %v596, %v610
  %v633 = vadd.f32 %v597, %v610
  %v634 = vadd.f32 %v598, %v610
  %v635 = vadd.f32 %v599, %v610
  %v636 = vadd.f32 %v600, %v610
  %v637 = vadd.f32 %v601, %v610
  %v638 = vadd.f32 %v602, %v610
  %v639 = vadd.f32 %v603, %v610
  %v640 = vadd.f32 %v604, %v610
  %v641 = vadd.f32 %v605, %v610
  %v642 = vadd.f32 %v606, %v610
  %v643 = vadd.f32 %v607, %v610
  %vm644 = vcmask 195584
  %645 = vst.msk [vmem:[%s5] sm:$0xff] %vm644, %v612
  %646 = vst.msk [vmem:[%s5 + $0x8] sm:$0xff] %vm644, %v613
  %647 = vst.msk [vmem:[%s5 + $0x10] sm:$0xff] %vm644, %v614
  %648 = vst.msk [vmem:[%s5 + $0x18] sm:$0xff] %vm644, %v615
  %649 = vst.msk [vmem:[%s5 + $0x20] sm:$0xff] %vm644, %v616
  %650 = vst.msk [vmem:[%s5 + $0x28] sm:$0xff] %vm644, %v617
  %651 = vst.msk [vmem:[%s5 + $0x30] sm:$0xff] %vm644, %v618
  %652 = vst.msk [vmem:[%s5 + $0x38] sm:$0xff] %vm644, %v619
  %653 = vst.msk [vmem:[%s5 + $0x40] sm:$0xff] %vm644, %v620
  %654 = vst.msk [vmem:[%s5 + $0x48] sm:$0xff] %vm644, %v621
  %655 = vst.msk [vmem:[%s5 + $0x50] sm:$0xff] %vm644, %v622
  %656 = vst.msk [vmem:[%s5 + $0x58] sm:$0xff] %vm644, %v623
  %657 = vst.msk [vmem:[%s5 + $0x60] sm:$0xff] %vm644, %v624
  %658 = vst.msk [vmem:[%s5 + $0x68] sm:$0xff] %vm644, %v625
  %659 = vst.msk [vmem:[%s5 + $0x70] sm:$0xff] %vm644, %v626
  %660 = vst.msk [vmem:[%s5 + $0x78] sm:$0xff] %vm644, %v627
  %661 = vst.msk [vmem:[%s5 + $0x80] sm:$0xff] %vm644, %v628
  %662 = vst.msk [vmem:[%s5 + $0x88] sm:$0xff] %vm644, %v629
  %663 = vst.msk [vmem:[%s5 + $0x90] sm:$0xff] %vm644, %v630
  %664 = vst.msk [vmem:[%s5 + $0x98] sm:$0xff] %vm644, %v631
  %665 = vst.msk [vmem:[%s5 + $0xa0] sm:$0xff] %vm644, %v632
  %666 = vst.msk [vmem:[%s5 + $0xa8] sm:$0xff] %vm644, %v633
  %667 = vst.msk [vmem:[%s5 + $0xb0] sm:$0xff] %vm644, %v634
  %668 = vst.msk [vmem:[%s5 + $0xb8] sm:$0xff] %vm644, %v635
  %669 = vst.msk [vmem:[%s5 + $0xc0] sm:$0xff] %vm644, %v636
  %670 = vst.msk [vmem:[%s5 + $0xc8] sm:$0xff] %vm644, %v637
  %671 = vst.msk [vmem:[%s5 + $0xd0] sm:$0xff] %vm644, %v638
  %672 = vst.msk [vmem:[%s5 + $0xd8] sm:$0xff] %vm644, %v639
  %673 = vst.msk [vmem:[%s5 + $0xe0] sm:$0xff] %vm644, %v640
  %674 = vst.msk [vmem:[%s5 + $0xe8] sm:$0xff] %vm644, %v641
  %675 = vst.msk [vmem:[%s5 + $0xf0] sm:$0xff] %vm644, %v642
  %676 = vst.msk [vmem:[%s5 + $0xf8] sm:$0xff] %vm644, %v643
  // Predicated region
  $region22: #{cnn_mlp_forward.7} parent=0 // pred_check
    _
  $region23: #{cnn_mlp_forward.7} parent=0 // pred_check_branch
    %678 = sbr.rel (0) target = $region25
  $region24: #{cnn_mlp_forward.7} parent=0 // pred_region
    _
  $region25: #{cnn_mlp_forward.7} parent=0 // pred_fallthru
    _
  // Predicated region
  $region26: #{cnn_mlp_forward.7} parent=0 // pred_check
    _
  $region27: #{cnn_mlp_forward.7} parent=0 // pred_check_branch
    %680 = sbr.rel (0) target = $region29
  $region28: #{cnn_mlp_forward.7} parent=0 // pred_region
    _
  $region29: #{cnn_mlp_forward.7} parent=0 // pred_fallthru
    _

// kernel: cnn_mlp_forward.8
$region0: #{cnn_mlp_forward.8}
  #allocation0 [shape = 'u32[]', space=smem, size = 0x4, offset = 0x4, fixed_abs, tag = 'smem constant byte address 0x4 - core index']
  #allocation1 [shape = 'u32[72,128]{1,0:T(1,128)}', space=vmem, size = 0x9000, scoped, tag = 'internal scratch']
  %s0 = inlined_call_operand.vmem [shape: bf16[64,216], index: 0, kind: input, shape index: {}]
  %s1 = inlined_call_operand.vmem [shape: bf16[216,24], index: 1, kind: input, shape index: {}]
  %s2 = inlined_call_operand.vmem [shape: f32[1,24], index: 2, kind: input, shape index: {}]
  %s3 = inlined_call_operand.vmem [shape: f32[1,24], index: 3, kind: input, shape index: {}]
  %s4 = inlined_call_operand.vmem [shape: f32[1,24], index: 4, kind: input, shape index: {}]
  %s5 = inlined_call_operand.vmem [shape: f32[64,24], index: 5, kind: output, shape index: {}]
  %s6 = sld [smem:[#allocation0]]
  $region30: #{cnn_mlp_forward.8} parent=0
    _
  %s8 = ssub.s32 1, %s6
  %s9 = scalar_select 0, %s8, %s6
  // Predicated region
  $region2: #{cnn_mlp_forward.8} parent=0 // pred_check
    _
  $region3: #{cnn_mlp_forward.8} parent=0 // pred_check_branch
    %11 = sbr.rel (0) target = $region5
  $region4: #{cnn_mlp_forward.8} parent=0 // pred_region
    _
  $region5: #{cnn_mlp_forward.8} parent=0 // pred_fallthru
    _
  // Predicated region
  $region6: #{cnn_mlp_forward.8} parent=0 // pred_check
    _
  $region7: #{cnn_mlp_forward.8} parent=0 // pred_check_branch
    %13 = sbr.rel (0) target = $region9
  $region8: #{cnn_mlp_forward.8} parent=0 // pred_region
    _
  $region9: #{cnn_mlp_forward.8} parent=0 // pred_fallthru
    _
  // Predicated region
  $region10: #{cnn_mlp_forward.8} parent=0 // pred_check
    _
  $region11: #{cnn_mlp_forward.8} parent=0 // pred_check_branch
    %15 = sbr.rel (0) target = $region13
  $region12: #{cnn_mlp_forward.8} parent=0 // pred_region
    _
  $region13: #{cnn_mlp_forward.8} parent=0 // pred_fallthru
    _
  // Predicated region
  $region14: #{cnn_mlp_forward.8} parent=0 // pred_check
    _
  $region15: #{cnn_mlp_forward.8} parent=0 // pred_check_branch
    %17 = sbr.rel (0) target = $region17
  $region16: #{cnn_mlp_forward.8} parent=0 // pred_region
    _
  $region17: #{cnn_mlp_forward.8} parent=0 // pred_fallthru
    _
  // Predicated region
  $region18: #{cnn_mlp_forward.8} parent=0 // pred_check
    _
  $region19: #{cnn_mlp_forward.8} parent=0 // pred_check_branch
    %19 = sbr.rel (0) target = $region21
  $region20: #{cnn_mlp_forward.8} parent=0 // pred_region
    _
  $region21: #{cnn_mlp_forward.8} parent=0 // pred_fallthru
    _
  %v21 = vld [vmem:[%s0] sm:$0xff]
  %v22 = vld [vmem:[%s0 + $0x8] sm:$0xff]
  %v23 = vld [vmem:[%s0 + $0x10] sm:$0xff]
  %v24 = vld [vmem:[%s0 + $0x18] sm:$0xff]
  %v25 = vld [vmem:[%s0 + $0x20] sm:$0xff]
  %v26 = vld [vmem:[%s0 + $0x28] sm:$0xff]
  %v27 = vld [vmem:[%s0 + $0x30] sm:$0xff]
  %v28 = vld [vmem:[%s0 + $0x38] sm:$0xff]
  %v29 = vld [vmem:[%s1] sm:$0xf]
  %v30 = vld [vmem:[%s1 + $0x4] sm:$0xf]
  %v31 = vld [vmem:[%s1 + $0x8] sm:$0xf]
  %v32 = vld [vmem:[%s1 + $0xc] sm:$0xf]
  %v33 = vld [vmem:[%s1 + $0x10] sm:$0xf]
  %v34 = vld [vmem:[%s1 + $0x14] sm:$0xf]
  %v35 = vld [vmem:[%s1 + $0x18] sm:$0xf]
  %v36 = vld [vmem:[%s1 + $0x1c] sm:$0xf]
  %v37 = vld [vmem:[%s1 + $0x20] sm:$0xf]
  %v38 = vld [vmem:[%s1 + $0x24] sm:$0xf]
  %v39 = vld [vmem:[%s1 + $0x28] sm:$0xf]
  %v40 = vld [vmem:[%s1 + $0x2c] sm:$0xf]
  %v41 = vld [vmem:[%s1 + $0x30] sm:$0xf]
  %v42 = vld [vmem:[%s1 + $0x34] sm:$0xf]
  %v43 = vld [vmem:[%s1 + $0x38] sm:$0xf]
  %v44 = vld [vmem:[%s1 + $0x3c] sm:$0xf]
  %v45 = vld [vmem:[%s1 + $0x40] sm:$0xf]
  %v46 = vld [vmem:[%s1 + $0x44] sm:$0xf]
  %v47 = vld [vmem:[%s1 + $0x48] sm:$0xf]
  %v48 = vld [vmem:[%s1 + $0x4c] sm:$0xf]
  %v49 = vld [vmem:[%s1 + $0x50] sm:$0xf]
  %v50 = vld [vmem:[%s1 + $0x54] sm:$0xf]
  %v51 = vld [vmem:[%s1 + $0x58] sm:$0xf]
  %v52 = vld [vmem:[%s1 + $0x5c] sm:$0xf]
  %v53 = vld [vmem:[%s1 + $0x60] sm:$0xf]
  %v54 = vld [vmem:[%s1 + $0x64] sm:$0xf]
  %v55 = vld [vmem:[%s1 + $0x68] sm:$0xf]
  %v56 = vld [vmem:[%s2] sm:$0x1]
  %v58 = vperm.slane %v56, 0
  %v68 = vunpack.c.l.b16 %v21
  %v69 = vunpack.c.h.b16 %v21
  %v70 = vunpack.c.l.b16 %v22
  %v71 = vunpack.c.h.b16 %v22
  %v72 = vunpack.c.l.b16 %v23
  %v73 = vunpack.c.h.b16 %v23
  %v74 = vunpack.c.l.b16 %v24
  %v75 = vunpack.c.h.b16 %v24
  %v76 = vunpack.c.l.b16 %v25
  %v77 = vunpack.c.h.b16 %v25
  %v78 = vunpack.c.l.b16 %v26
  %v79 = vunpack.c.h.b16 %v26
  %v80 = vunpack.c.l.b16 %v27
  %v81 = vunpack.c.h.b16 %v27
  %v82 = vunpack.c.l.b16 %v28
  %v83 = vunpack.c.h.b16 %v28
  %v84 = vpack.c.b16 %v70, %v68
  %v85 = vpack.c.b16 %v71, %v69
  %v86 = vpack.c.b16 %v74, %v72
  %v87 = vpack.c.b16 %v75, %v73
  %v88 = vpack.c.b16 %v78, %v76
  %v89 = vpack.c.b16 %v79, %v77
  %v90 = vpack.c.b16 %v82, %v80
  %v91 = vpack.c.b16 %v83, %v81
  %v123 = vunpack.c.l.b16 %v29
  %v124 = vunpack.c.l.b16 %v30
  %v125 = vunpack.c.l.b16 %v31
  %v126 = vunpack.c.l.b16 %v32
  %v127 = vunpack.c.l.b16 %v33
  %v128 = vunpack.c.l.b16 %v34
  %v129 = vunpack.c.l.b16 %v35
  %v130 = vunpack.c.l.b16 %v36
  %v131 = vunpack.c.l.b16 %v37
  %v132 = vunpack.c.l.b16 %v38
  %v133 = vunpack.c.l.b16 %v39
  %v134 = vunpack.c.l.b16 %v40
  %v135 = vunpack.c.l.b16 %v41
  %v136 = vunpack.c.l.b16 %v42
  %v137 = vunpack.c.l.b16 %v43
  %v138 = vunpack.c.l.b16 %v44
  %v139 = vunpack.c.l.b16 %v45
  %v140 = vunpack.c.l.b16 %v46
  %v141 = vunpack.c.l.b16 %v47
  %v142 = vunpack.c.l.b16 %v48
  %v143 = vunpack.c.l.b16 %v49
  %v144 = vunpack.c.l.b16 %v50
  %v145 = vunpack.c.l.b16 %v51
  %v146 = vunpack.c.l.b16 %v52
  %v147 = vunpack.c.l.b16 %v53
  %v148 = vunpack.c.l.b16 %v54
  %v149 = vunpack.c.l.b16 %v55
  %v150 = vpack.c.b16 %v124, %v123
  %v151 = vpack.c.b16 %v126, %v125
  %v152 = vpack.c.b16 %v128, %v127
  %v153 = vpack.c.b16 %v130, %v129
  %v154 = vpack.c.b16 %v132, %v131
  %v155 = vpack.c.b16 %v134, %v133
  %v156 = vpack.c.b16 %v136, %v135
  %v157 = vpack.c.b16 %v138, %v137
  %v158 = vpack.c.b16 %v140, %v139
  %v159 = vpack.c.b16 %v142, %v141
  %v160 = vpack.c.b16 %v144, %v143
  %v161 = vpack.c.b16 %v146, %v145
  %v162 = vpack.c.b16 %v148, %v147
  %v163 = vpack.c.b16 %v149, %v149
  %vm177 = vcmask 719872
  %v179 = vsel %vm177, %v85, 0
  %v182 = vsel %vm177, %v87, 0
  %v185 = vsel %vm177, %v89, 0
  %v188 = vsel %vm177, %v91, 0
  %vm190 = vcmask 1043456
  %v192 = vsel %vm190, %v163, 0
  %194 = vmatpush.bf16.msra.mxu0 %v157
  %195 = vmatpush.bf16.msra.mxu0 %v156
  %196 = vmatpush.bf16.msra.mxu0 %v155
  %197 = vmatpush.bf16.msra.mxu0 %v154
  %198 = vmatpush.bf16.msra.mxu0 %v153
  %199 = vmatpush.bf16.msra.mxu0 %v152
  %200 = vmatpush.bf16.msra.mxu0 %v151
  %201 = vmatpush.bf16.msra.mxu0 %v150
  %202 = vmatmul.bf16.gmra.mxu0 %v84
  %v203 = vpop.f32.mrf.mxu0
  %v204 = vadd.f32 %v58, %v203
  %v205 = vpop.f32.mrf.mxu0
  %v206 = vadd.f32 %v58, %v205
  %207 = vmatmul.bf16.gmra.mxu0 %v86
  %v208 = vpop.f32.mrf.mxu0
  %v209 = vadd.f32 %v58, %v208
  %v210 = vpop.f32.mrf.mxu0
  %v211 = vadd.f32 %v58, %v210
  %212 = vmatmul.bf16.gmra.mxu0 %v88
  %v213 = vpop.f32.mrf.mxu0
  %v214 = vadd.f32 %v58, %v213
  %v215 = vpop.f32.mrf.mxu0
  %v216 = vadd.f32 %v58, %v215
  %217 = vmatmul.bf16.gmra.mxu0 %v90
  %v218 = vpop.f32.mrf.mxu0
  %v219 = vadd.f32 %v58, %v218
  %v220 = vpop.f32.mrf.mxu0
  %v221 = vadd.f32 %v58, %v220
  %222 = vdwg.mxu0
  %223 = vmatpush.bf16.msra.mxu0 0
  %224 = vmatpush.bf16.msra.mxu0 0
  %225 = vmatpush.bf16.msra.mxu0 %v192
  %226 = vmatpush.bf16.msra.mxu0 %v162
  %227 = vmatpush.bf16.msra.mxu0 %v161
  %228 = vmatpush.bf16.msra.mxu0 %v160
  %229 = vmatpush.bf16.msra.mxu0 %v159
  %230 = vmatpush.bf16.msra.mxu0 %v158
  %231 = vmatmul.bf16.gmra.mxu0 %v179
  %v232 = vpop.f32.mrf.mxu0
  %v233 = vadd.f32 %v204, %v232
  %v234 = vpop.f32.mrf.mxu0
  %v235 = vadd.f32 %v206, %v234
  %236 = vmatmul.bf16.gmra.mxu0 %v182
  %v237 = vpop.f32.mrf.mxu0
  %v238 = vadd.f32 %v209, %v237
  %v239 = vpop.f32.mrf.mxu0
  %v240 = vadd.f32 %v211, %v239
  %241 = vmatmul.bf16.gmra.mxu0 %v185
  %v242 = vpop.f32.mrf.mxu0
  %v243 = vadd.f32 %v214, %v242
  %v244 = vpop.f32.mrf.mxu0
  %v245 = vadd.f32 %v216, %v244
  %246 = vmatmul.bf16.gmra.mxu0 %v188
  %v247 = vpop.f32.mrf.mxu0
  %v248 = vadd.f32 %v219, %v247
  %v249 = vpop.f32.mrf.mxu0
  %v250 = vadd.f32 %v221, %v249
  %251 = vdwg.mxu0
  %v252 = vmax.f32 %v233, 0.0
  %v253 = vmax.f32 %v235, 0.0
  %v254 = vmax.f32 %v238, 0.0
  %v255 = vmax.f32 %v240, 0.0
  %v256 = vmax.f32 %v243, 0.0
  %v257 = vmax.f32 %v245, 0.0
  %v258 = vmax.f32 %v248, 0.0
  %v259 = vmax.f32 %v250, 0.0
  %v260 = vld [vmem:[%s3] sm:$0x1]
  %v262 = vperm.slane %v260, 0
  %v264 = vmul.f32 %v252, %v262
  %v265 = vmul.f32 %v253, %v262
  %v266 = vmul.f32 %v254, %v262
  %v267 = vmul.f32 %v255, %v262
  %v268 = vmul.f32 %v256, %v262
  %v269 = vmul.f32 %v257, %v262
  %v270 = vmul.f32 %v258, %v262
  %v271 = vmul.f32 %v259, %v262
  %v272 = vld [vmem:[%s4] sm:$0x1]
  %v274 = vperm.slane %v272, 0
  %v276 = vadd.f32 %v264, %v274
  %v277 = vadd.f32 %v265, %v274
  %v278 = vadd.f32 %v266, %v274
  %v279 = vadd.f32 %v267, %v274
  %v280 = vadd.f32 %v268, %v274
  %v281 = vadd.f32 %v269, %v274
  %v282 = vadd.f32 %v270, %v274
  %v283 = vadd.f32 %v271, %v274
  %vm284 = vcmask 195584
  %285 = vst.msk [vmem:[%s5] sm:$0xff] %vm284, %v276
  %286 = vst.msk [vmem:[%s5 + $0x8] sm:$0xff] %vm284, %v277
  %287 = vst.msk [vmem:[%s5 + $0x10] sm:$0xff] %vm284, %v278
  %288 = vst.msk [vmem:[%s5 + $0x18] sm:$0xff] %vm284, %v279
  %289 = vst.msk [vmem:[%s5 + $0x20] sm:$0xff] %vm284, %v280
  %290 = vst.msk [vmem:[%s5 + $0x28] sm:$0xff] %vm284, %v281
  %291 = vst.msk [vmem:[%s5 + $0x30] sm:$0xff] %vm284, %v282
  %292 = vst.msk [vmem:[%s5 + $0x38] sm:$0xff] %vm284, %v283
  // Predicated region
  $region22: #{cnn_mlp_forward.8} parent=0 // pred_check
    _
  $region23: #{cnn_mlp_forward.8} parent=0 // pred_check_branch
    %294 = sbr.rel (0) target = $region25
  $region24: #{cnn_mlp_forward.8} parent=0 // pred_region
    _
  $region25: #{cnn_mlp_forward.8} parent=0 // pred_fallthru
    _
  // Predicated region
  $region26: #{cnn_mlp_forward.8} parent=0 // pred_check
    _
  $region27: #{cnn_mlp_forward.8} parent=0 // pred_check_branch
    %296 = sbr.rel (0) target = $region29
  $region28: #{cnn_mlp_forward.8} parent=0 // pred_region
    _
  $region29: #{cnn_mlp_forward.8} parent=0 // pred_fallthru
    _

// kernel: cnn_mlp_forward.9
$region0: #{cnn_mlp_forward.9}
  #allocation0 [shape = 'u32[]', space=smem, size = 0x4, offset = 0x4, fixed_abs, tag = 'smem constant byte address 0x4 - core index']
  #allocation1 [shape = 'u32[72,128]{1,0:T(1,128)}', space=vmem, size = 0x9000, scoped, tag = 'internal scratch']
  %s0 = inlined_call_operand.vmem [shape: bf16[2,640], index: 0, kind: input, shape index: {}]
  %s1 = inlined_call_operand.vmem [shape: bf16[640,256], index: 1, kind: input, shape index: {}]
  %s2 = inlined_call_operand.vmem [shape: f32[1,256], index: 2, kind: input, shape index: {}]
  %s3 = inlined_call_operand.vmem [shape: bf16[256,256], index: 3, kind: input, shape index: {}]
  %s4 = inlined_call_operand.vmem [shape: f32[1,256], index: 4, kind: input, shape index: {}]
  %s5 = inlined_call_operand.vmem [shape: bf16[256,128], index: 5, kind: input, shape index: {}]
  %s6 = inlined_call_operand.vmem [shape: f32[1,128], index: 6, kind: input, shape index: {}]
  %s7 = inlined_call_operand.hbm [shape: f32[2,128], index: 7, kind: output, shape index: {}]
  %s8 = sld [smem:[#allocation0]]
  $region38: #{cnn_mlp_forward.9} parent=0
    _
  %s10 = ssub.s32 1, %s8
  %s11 = scalar_select 0, %s10, %s8
  $region1: #{cnn_mlp_forward.9} parent=0
    #allocation2 [shape = 'u8[1024]{0}', space=vmem, size = 0x400, scoped, tag = 'output window, operand 0, single buffered']
    #allocation3 [shape = 's32[1]{0}', space=sflag, size = 0x4, scoped, tag = 'scoped memory for cnn_mlp_forward.9']
    %12 = vsyncpa [#allocation3], 0
    // Predicated region
    $region2: #{cnn_mlp_forward.9} parent=1 // pred_check
      _
    $region3: #{cnn_mlp_forward.9} parent=1 // pred_check_branch
      %14 = sbr.rel (0) target = $region5
    $region4: #{cnn_mlp_forward.9} parent=1 // pred_region
      _
    $region5: #{cnn_mlp_forward.9} parent=1 // pred_fallthru
      _
    // Predicated region
    $region6: #{cnn_mlp_forward.9} parent=1 // pred_check
      _
    $region7: #{cnn_mlp_forward.9} parent=1 // pred_check_branch
      %16 = sbr.rel (0) target = $region9
    $region8: #{cnn_mlp_forward.9} parent=1 // pred_region
      _
    $region9: #{cnn_mlp_forward.9} parent=1 // pred_fallthru
      _
    // Predicated region
    $region10: #{cnn_mlp_forward.9} parent=1 // pred_check
      _
    $region11: #{cnn_mlp_forward.9} parent=1 // pred_check_branch
      %18 = sbr.rel (0) target = $region13
    $region12: #{cnn_mlp_forward.9} parent=1 // pred_region
      _
    $region13: #{cnn_mlp_forward.9} parent=1 // pred_fallthru
      _
    // Predicated region
    $region14: #{cnn_mlp_forward.9} parent=1 // pred_check
      _
    $region15: #{cnn_mlp_forward.9} parent=1 // pred_check_branch
      %20 = sbr.rel (0) target = $region17
    $region16: #{cnn_mlp_forward.9} parent=1 // pred_region
      _
    $region17: #{cnn_mlp_forward.9} parent=1 // pred_fallthru
      _
    // Predicated region
    $region18: #{cnn_mlp_forward.9} parent=1 // pred_check
      _
    $region19: #{cnn_mlp_forward.9} parent=1 // pred_check_branch
      %22 = sbr.rel (0) target = $region21
    $region20: #{cnn_mlp_forward.9} parent=1 // pred_region
      _
    $region21: #{cnn_mlp_forward.9} parent=1 // pred_fallthru
      _
    // Predicated region
    $region22: #{cnn_mlp_forward.9} parent=1 // pred_check
      _
    $region23: #{cnn_mlp_forward.9} parent=1 // pred_check_branch
      %24 = sbr.rel (0) target = $region25
    $region24: #{cnn_mlp_forward.9} parent=1 // pred_region
      _
    $region25: #{cnn_mlp_forward.9} parent=1 // pred_fallthru
      _
    // Predicated region
    $region26: #{cnn_mlp_forward.9} parent=1 // pred_check
      _
    $region27: #{cnn_mlp_forward.9} parent=1 // pred_check_branch
      %26 = sbr.rel (0) target = $region29
    $region28: #{cnn_mlp_forward.9} parent=1 // pred_region
      _
    $region29: #{cnn_mlp_forward.9} parent=1 // pred_fallthru
      _
    %v27 = vld [vmem:[%s0] sm:$0x1f]
    %v28 = vld [vmem:[%s1] sm:$0xff]
    %v29 = vld [vmem:[%s1 + $0x8] sm:$0xff]
    %v30 = vld [vmem:[%s1 + $0x10] sm:$0xff]
    %v31 = vld [vmem:[%s1 + $0x18] sm:$0xff]
    %v32 = vld [vmem:[%s1 + $0x20] sm:$0xff]
    %v33 = vld [vmem:[%s1 + $0x28] sm:$0xff]
    %v34 = vld [vmem:[%s1 + $0x30] sm:$0xff]
    %v35 = vld [vmem:[%s1 + $0x38] sm:$0xff]
    %v36 = vld [vmem:[%s1 + $0x40] sm:$0xff]
    %v37 = vld [vmem:[%s1 + $0x48] sm:$0xff]
    %v38 = vld [vmem:[%s1 + $0x50] sm:$0xff]
    %v39 = vld [vmem:[%s1 + $0x58] sm:$0xff]
    %v40 = vld [vmem:[%s1 + $0x60] sm:$0xff]
    %v41 = vld [vmem:[%s1 + $0x68] sm:$0xff]
    %v42 = vld [vmem:[%s1 + $0x70] sm:$0xff]
    %v43 = vld [vmem:[%s1 + $0x78] sm:$0xff]
    %v44 = vld [vmem:[%s1 + $0x80] sm:$0xff]
    %v45 = vld [vmem:[%s1 + $0x88] sm:$0xff]
    %v46 = vld [vmem:[%s1 + $0x90] sm:$0xff]
    %v47 = vld [vmem:[%s1 + $0x98] sm:$0xff]
    %v48 = vld [vmem:[%s1 + $0xa0] sm:$0xff]
    %v49 = vld [vmem:[%s1 + $0xa8] sm:$0xff]
    %v50 = vld [vmem:[%s1 + $0xb0] sm:$0xff]
    %v51 = vld [vmem:[%s1 + $0xb8] sm:$0xff]
    %v52 = vld [vmem:[%s1 + $0xc0] sm:$0xff]
    %v53 = vld [vmem:[%s1 + $0xc8] sm:$0xff]
    %v54 = vld [vmem:[%s1 + $0xd0] sm:$0xff]
    %v55 = vld [vmem:[%s1 + $0xd8] sm:$0xff]
    %v56 = vld [vmem:[%s1 + $0xe0] sm:$0xff]
    %v57 = vld [vmem:[%s1 + $0xe8] sm:$0xff]
    %v58 = vld [vmem:[%s1 + $0xf0] sm:$0xff]
    %v59 = vld [vmem:[%s1 + $0xf8] sm:$0xff]
    %v60 = vld [vmem:[%s1 + $0x100] sm:$0xff]
    %v61 = vld [vmem:[%s1 + $0x108] sm:$0xff]
    %v62 = vld [vmem:[%s1 + $0x110] sm:$0xff]
    %v63 = vld [vmem:[%s1 + $0x118] sm:$0xff]
    %v64 = vld [vmem:[%s1 + $0x120] sm:$0xff]
    %v65 = vld [vmem:[%s1 + $0x128] sm:$0xff]
    %v66 = vld [vmem:[%s1 + $0x130] sm:$0xff]
    %v67 = vld [vmem:[%s1 + $0x138] sm:$0xff]
    %v68 = vld [vmem:[%s1 + $0x140] sm:$0xff]
    %v69 = vld [vmem:[%s1 + $0x148] sm:$0xff]
    %v70 = vld [vmem:[%s1 + $0x150] sm:$0xff]
    %v71 = vld [vmem:[%s1 + $0x158] sm:$0xff]
    %v72 = vld [vmem:[%s1 + $0x160] sm:$0xff]
    %v73 = vld [vmem:[%s1 + $0x168] sm:$0xff]
    %v74 = vld [vmem:[%s1 + $0x170] sm:$0xff]
    %v75 = vld [vmem:[%s1 + $0x178] sm:$0xff]
    %v76 = vld [vmem:[%s1 + $0x180] sm:$0xff]
    %v77 = vld [vmem:[%s1 + $0x188] sm:$0xff]
    %v78 = vld [vmem:[%s1 + $0x190] sm:$0xff]
    %v79 = vld [vmem:[%s1 + $0x198] sm:$0xff]
    %v80 = vld [vmem:[%s1 + $0x1a0] sm:$0xff]
    %v81 = vld [vmem:[%s1 + $0x1a8] sm:$0xff]
    %v82 = vld [vmem:[%s1 + $0x1b0] sm:$0xff]
    %v83 = vld [vmem:[%s1 + $0x1b8] sm:$0xff]
    %v84 = vld [vmem:[%s1 + $0x1c0] sm:$0xff]
    %v85 = vld [vmem:[%s1 + $0x1c8] sm:$0xff]
    %v86 = vld [vmem:[%s1 + $0x1d0] sm:$0xff]
    %v87 = vld [vmem:[%s1 + $0x1d8] sm:$0xff]
    %v88 = vld [vmem:[%s1 + $0x1e0] sm:$0xff]
    %v89 = vld [vmem:[%s1 + $0x1e8] sm:$0xff]
    %v90 = vld [vmem:[%s1 + $0x1f0] sm:$0xff]
    %v91 = vld [vmem:[%s1 + $0x1f8] sm:$0xff]
    %v92 = vld [vmem:[%s1 + $0x200] sm:$0xff]
    %v93 = vld [vmem:[%s1 + $0x208] sm:$0xff]
    %v94 = vld [vmem:[%s1 + $0x210] sm:$0xff]
    %v95 = vld [vmem:[%s1 + $0x218] sm:$0xff]
    %v96 = vld [vmem:[%s1 + $0x220] sm:$0xff]
    %v97 = vld [vmem:[%s1 + $0x228] sm:$0xff]
    %v98 = vld [vmem:[%s1 + $0x230] sm:$0xff]
    %v99 = vld [vmem:[%s1 + $0x238] sm:$0xff]
    %v100 = vld [vmem:[%s1 + $0x240] sm:$0xff]
    %v101 = vld [vmem:[%s1 + $0x248] sm:$0xff]
    %v102 = vld [vmem:[%s1 + $0x250] sm:$0xff]
    %v103 = vld [vmem:[%s1 + $0x258] sm:$0xff]
    %v104 = vld [vmem:[%s1 + $0x260] sm:$0xff]
    %v105 = vld [vmem:[%s1 + $0x268] sm:$0xff]
    %v106 = vld [vmem:[%s1 + $0x270] sm:$0xff]
    %v107 = vld [vmem:[%s1 + $0x278] sm:$0xff]
    %v108 = vld [vmem:[%s2] sm:$0x3]
    %v110 = vperm.slane %v108, 0
    %v111 = vperm.slane %v108, 1
    %115 = vst [vmem:[#allocation1] ss:$9 sm:$0xff] %v27
    %v116 = vld [vmem:[#allocation1] sm:$0xff]
    %v117 = vld [vmem:[#allocation1 + $0x9] sm:$0xff]
    %v118 = vld [vmem:[#allocation1 + $0x12] sm:$0xff]
    %v119 = vld [vmem:[#allocation1 + $0x1b] sm:$0xff]
    %v120 = vld [vmem:[#allocation1 + $0x24] sm:$0xff]
    %v206 = vunpack.c.l.b16 %v28
    %v207 = vunpack.c.h.b16 %v28
    %v208 = vunpack.c.l.b16 %v29
    %v209 = vunpack.c.h.b16 %v29
    %v210 = vunpack.c.l.b16 %v30
    %v211 = vunpack.c.h.b16 %v30
    %v212 = vunpack.c.l.b16 %v31
    %v213 = vunpack.c.h.b16 %v31
    %v214 = vunpack.c.l.b16 %v32
    %v215 = vunpack.c.h.b16 %v32
    %v216 = vunpack.c.l.b16 %v33
    %v217 = vunpack.c.h.b16 %v33
    %v218 = vunpack.c.l.b16 %v34
    %v219 = vunpack.c.h.b16 %v34
    %v220 = vunpack.c.l.b16 %v35
    %v221 = vunpack.c.h.b16 %v35
    %v222 = vunpack.c.l.b16 %v36
    %v223 = vunpack.c.h.b16 %v36
    %v224 = vunpack.c.l.b16 %v37
    %v225 = vunpack.c.h.b16 %v37
    %v226 = vunpack.c.l.b16 %v38
    %v227 = vunpack.c.h.b16 %v38
    %v228 = vunpack.c.l.b16 %v39
    %v229 = vunpack.c.h.b16 %v39
    %v230 = vunpack.c.l.b16 %v40
    %v231 = vunpack.c.h.b16 %v40
    %v232 = vunpack.c.l.b16 %v41
    %v233 = vunpack.c.h.b16 %v41
    %v234 = vunpack.c.l.b16 %v42
    %v235 = vunpack.c.h.b16 %v42
    %v236 = vunpack.c.l.b16 %v43
    %v237 = vunpack.c.h.b16 %v43
    %v238 = vunpack.c.l.b16 %v44
    %v239 = vunpack.c.h.b16 %v44
    %v240 = vunpack.c.l.b16 %v45
    %v241 = vunpack.c.h.b16 %v45
    %v242 = vunpack.c.l.b16 %v46
    %v243 = vunpack.c.h.b16 %v46
    %v244 = vunpack.c.l.b16 %v47
    %v245 = vunpack.c.h.b16 %v47
    %v246 = vunpack.c.l.b16 %v48
    %v247 = vunpack.c.h.b16 %v48
    %v248 = vunpack.c.l.b16 %v49
    %v249 = vunpack.c.h.b16 %v49
    %v250 = vunpack.c.l.b16 %v50
    %v251 = vunpack.c.h.b16 %v50
    %v252 = vunpack.c.l.b16 %v51
    %v253 = vunpack.c.h.b16 %v51
    %v254 = vunpack.c.l.b16 %v52
    %v255 = vunpack.c.h.b16 %v52
    %v256 = vunpack.c.l.b16 %v53
    %v257 = vunpack.c.h.b16 %v53
    %v258 = vunpack.c.l.b16 %v54
    %v259 = vunpack.c.h.b16 %v54
    %v260 = vunpack.c.l.b16 %v55
    %v261 = vunpack.c.h.b16 %v55
    %v262 = vunpack.c.l.b16 %v56
    %v263 = vunpack.c.h.b16 %v56
    %v264 = vunpack.c.l.b16 %v57
    %v265 = vunpack.c.h.b16 %v57
    %v266 = vunpack.c.l.b16 %v58
    %v267 = vunpack.c.h.b16 %v58
    %v268 = vunpack.c.l.b16 %v59
    %v269 = vunpack.c.h.b16 %v59
    %v270 = vunpack.c.l.b16 %v60
    %v271 = vunpack.c.h.b16 %v60
    %v272 = vunpack.c.l.b16 %v61
    %v273 = vunpack.c.h.b16 %v61
    %v274 = vunpack.c.l.b16 %v62
    %v275 = vunpack.c.h.b16 %v62
    %v276 = vunpack.c.l.b16 %v63
    %v277 = vunpack.c.h.b16 %v63
    %v278 = vunpack.c.l.b16 %v64
    %v279 = vunpack.c.h.b16 %v64
    %v280 = vunpack.c.l.b16 %v65
    %v281 = vunpack.c.h.b16 %v65
    %v282 = vunpack.c.l.b16 %v66
    %v283 = vunpack.c.h.b16 %v66
    %v284 = vunpack.c.l.b16 %v67
    %v285 = vunpack.c.h.b16 %v67
    %v286 = vunpack.c.l.b16 %v68
    %v287 = vunpack.c.h.b16 %v68
    %v288 = vunpack.c.l.b16 %v69
    %v289 = vunpack.c.h.b16 %v69
    %v290 = vunpack.c.l.b16 %v70
    %v291 = vunpack.c.h.b16 %v70
    %v292 = vunpack.c.l.b16 %v71
    %v293 = vunpack.c.h.b16 %v71
    %v294 = vunpack.c.l.b16 %v72
    %v295 = vunpack.c.h.b16 %v72
    %v296 = vunpack.c.l.b16 %v73
    %v297 = vunpack.c.h.b16 %v73
    %v298 = vunpack.c.l.b16 %v74
    %v299 = vunpack.c.h.b16 %v74
    %v300 = vunpack.c.l.b16 %v75
    %v301 = vunpack.c.h.b16 %v75
    %v302 = vunpack.c.l.b16 %v76
    %v303 = vunpack.c.h.b16 %v76
    %v304 = vunpack.c.l.b16 %v77
    %v305 = vunpack.c.h.b16 %v77
    %v306 = vunpack.c.l.b16 %v78
    %v307 = vunpack.c.h.b16 %v78
    %v308 = vunpack.c.l.b16 %v79
    %v309 = vunpack.c.h.b16 %v79
    %v310 = vunpack.c.l.b16 %v80
    %v311 = vunpack.c.h.b16 %v80
    %v312 = vunpack.c.l.b16 %v81
    %v313 = vunpack.c.h.b16 %v81
    %v314 = vunpack.c.l.b16 %v82
    %v315 = vunpack.c.h.b16 %v82
    %v316 = vunpack.c.l.b16 %v83
    %v317 = vunpack.c.h.b16 %v83
    %v318 = vunpack.c.l.b16 %v84
    %v319 = vunpack.c.h.b16 %v84
    %v320 = vunpack.c.l.b16 %v85
    %v321 = vunpack.c.h.b16 %v85
    %v322 = vunpack.c.l.b16 %v86
    %v323 = vunpack.c.h.b16 %v86
    %v324 = vunpack.c.l.b16 %v87
    %v325 = vunpack.c.h.b16 %v87
    %v326 = vunpack.c.l.b16 %v88
    %v327 = vunpack.c.h.b16 %v88
    %v328 = vunpack.c.l.b16 %v89
    %v329 = vunpack.c.h.b16 %v89
    %v330 = vunpack.c.l.b16 %v90
    %v331 = vunpack.c.h.b16 %v90
    %v332 = vunpack.c.l.b16 %v91
    %v333 = vunpack.c.h.b16 %v91
    %v334 = vunpack.c.l.b16 %v92
    %v335 = vunpack.c.h.b16 %v92
    %v336 = vunpack.c.l.b16 %v93
    %v337 = vunpack.c.h.b16 %v93
    %v338 = vunpack.c.l.b16 %v94
    %v339 = vunpack.c.h.b16 %v94
    %v340 = vunpack.c.l.b16 %v95
    %v341 = vunpack.c.h.b16 %v95
    %v342 = vunpack.c.l.b16 %v96
    %v343 = vunpack.c.h.b16 %v96
    %v344 = vunpack.c.l.b16 %v97
    %v345 = vunpack.c.h.b16 %v97
    %v346 = vunpack.c.l.b16 %v98
    %v347 = vunpack.c.h.b16 %v98
    %v348 = vunpack.c.l.b16 %v99
    %v349 = vunpack.c.h.b16 %v99
    %v350 = vunpack.c.l.b16 %v100
    %v351 = vunpack.c.h.b16 %v100
    %v352 = vunpack.c.l.b16 %v101
    %v353 = vunpack.c.h.b16 %v101
    %v354 = vunpack.c.l.b16 %v102
    %v355 = vunpack.c.h.b16 %v102
    %v356 = vunpack.c.l.b16 %v103
    %v357 = vunpack.c.h.b16 %v103
    %v358 = vunpack.c.l.b16 %v104
    %v359 = vunpack.c.h.b16 %v104
    %v360 = vunpack.c.l.b16 %v105
    %v361 = vunpack.c.h.b16 %v105
    %v362 = vunpack.c.l.b16 %v106
    %v363 = vunpack.c.h.b16 %v106
    %v364 = vunpack.c.l.b16 %v107
    %v365 = vunpack.c.h.b16 %v107
    %v366 = vpack.c.b16 %v208, %v206
    %v367 = vpack.c.b16 %v209, %v207
    %v368 = vpack.c.b16 %v212, %v210
    %v369 = vpack.c.b16 %v213, %v211
    %v370 = vpack.c.b16 %v216, %v214
    %v371 = vpack.c.b16 %v217, %v215
    %v372 = vpack.c.b16 %v220, %v218
    %v373 = vpack.c.b16 %v221, %v219
    %v374 = vpack.c.b16 %v224, %v222
    %v375 = vpack.c.b16 %v225, %v223
    %v376 = vpack.c.b16 %v228, %v226
    %v377 = vpack.c.b16 %v229, %v227
    %v378 = vpack.c.b16 %v232, %v230
    %v379 = vpack.c.b16 %v233, %v231
    %v380 = vpack.c.b16 %v236, %v234
    %v381 = vpack.c.b16 %v237, %v235
    %v382 = vpack.c.b16 %v240, %v238
    %v383 = vpack.c.b16 %v241, %v239
    %v384 = vpack.c.b16 %v244, %v242
    %v385 = vpack.c.b16 %v245, %v243
    %v386 = vpack.c.b16 %v248, %v246
    %v387 = vpack.c.b16 %v249, %v247
    %v388 = vpack.c.b16 %v252, %v250
    %v389 = vpack.c.b16 %v253, %v251
    %v390 = vpack.c.b16 %v256, %v254
    %v391 = vpack.c.b16 %v257, %v255
    %v392 = vpack.c.b16 %v260, %v258
    %v393 = vpack.c.b16 %v261, %v259
    %v394 = vpack.c.b16 %v264, %v262
    %v395 = vpack.c.b16 %v265, %v263
    %v396 = vpack.c.b16 %v268, %v266
    %v397 = vpack.c.b16 %v269, %v267
    %v398 = vpack.c.b16 %v272, %v270
    %v399 = vpack.c.b16 %v273, %v271
    %v400 = vpack.c.b16 %v276, %v274
    %v401 = vpack.c.b16 %v277, %v275
    %v402 = vpack.c.b16 %v280, %v278
    %v403 = vpack.c.b16 %v281, %v279
    %v404 = vpack.c.b16 %v284, %v282
    %v405 = vpack.c.b16 %v285, %v283
    %v406 = vpack.c.b16 %v288, %v286
    %v407 = vpack.c.b16 %v289, %v287
    %v408 = vpack.c.b16 %v292, %v290
    %v409 = vpack.c.b16 %v293, %v291
    %v410 = vpack.c.b16 %v296, %v294
    %v411 = vpack.c.b16 %v297, %v295
    %v412 = vpack.c.b16 %v300, %v298
    %v413 = vpack.c.b16 %v301, %v299
    %v414 = vpack.c.b16 %v304, %v302
    %v415 = vpack.c.b16 %v305, %v303
    %v416 = vpack.c.b16 %v308, %v306
    %v417 = vpack.c.b16 %v309, %v307
    %v418 = vpack.c.b16 %v312, %v310
    %v419 = vpack.c.b16 %v313, %v311
    %v420 = vpack.c.b16 %v316, %v314
    %v421 = vpack.c.b16 %v317, %v315
    %v422 = vpack.c.b16 %v320, %v318
    %v423 = vpack.c.b16 %v321, %v319
    %v424 = vpack.c.b16 %v324, %v322
    %v425 = vpack.c.b16 %v325, %v323
    %v426 = vpack.c.b16 %v328, %v326
    %v427 = vpack.c.b16 %v329, %v327
    %v428 = vpack.c.b16 %v332, %v330
    %v429 = vpack.c.b16 %v333, %v331
    %v430 = vpack.c.b16 %v336, %v334
    %v431 = vpack.c.b16 %v337, %v335
    %v432 = vpack.c.b16 %v340, %v338
    %v433 = vpack.c.b16 %v341, %v339
    %v434 = vpack.c.b16 %v344, %v342
    %v435 = vpack.c.b16 %v345, %v343
    %v436 = vpack.c.b16 %v348, %v346
    %v437 = vpack.c.b16 %v349, %v347
    %v438 = vpack.c.b16 %v352, %v350
    %v439 = vpack.c.b16 %v353, %v351
    %v440 = vpack.c.b16 %v356, %v354
    %v441 = vpack.c.b16 %v357, %v355
    %v442 = vpack.c.b16 %v360, %v358
    %v443 = vpack.c.b16 %v361, %v359
    %v444 = vpack.c.b16 %v364, %v362
    %v445 = vpack.c.b16 %v365, %v363
    %526 = vmatpush.bf16.msra.mxu0 %v380
    %527 = vmatpush.bf16.msra.mxu0 %v378
    %528 = vmatpush.bf16.msra.mxu0 %v376
    %529 = vmatpush.bf16.msra.mxu0 %v374
    %530 = vmatpush.bf16.msra.mxu0 %v372
    %531 = vmatpush.bf16.msra.mxu0 %v370
    %532 = vmatpush.bf16.msra.mxu0 %v368
    %533 = vmatpush.bf16.msra.mxu0 %v366
    %534 = vmatmul.bf16.gmra.mxu0 %v116
    %v535 = vpop.f32.mrf.mxu0
    %v536 = vadd.f32 %v110, %v535
    %v537 = vpop.f32.mrf.mxu0
    %538 = vdwg.mxu0
    %539 = vmatpush.bf16.msra.mxu0 %v396
    %540 = vmatpush.bf16.msra.mxu0 %v394
    %541 = vmatpush.bf16.msra.mxu0 %v392
    %542 = vmatpush.bf16.msra.mxu0 %v390
    %543 = vmatpush.bf16.msra.mxu0 %v388
    %544 = vmatpush.bf16.msra.mxu0 %v386
    %545 = vmatpush.bf16.msra.mxu0 %v384
    %546 = vmatpush.bf16.msra.mxu0 %v382
    %547 = vmatmul.bf16.gmra.mxu0 %v117
    %v548 = vpop.f32.mrf.mxu0
    %v549 = vadd.f32 %v536, %v548
    %v550 = vpop.f32.mrf.mxu0
    %551 = vdwg.mxu0
    %552 = vmatpush.bf16.msra.mxu0 %v412
    %553 = vmatpush.bf16.msra.mxu0 %v410
    %554 = vmatpush.bf16.msra.mxu0 %v408
    %555 = vmatpush.bf16.msra.mxu0 %v406
    %556 = vmatpush.bf16.msra.mxu0 %v404
    %557 = vmatpush.bf16.msra.mxu0 %v402
    %558 = vmatpush.bf16.msra.mxu0 %v400
    %559 = vmatpush.bf16.msra.mxu0 %v398
    %560 = vmatmul.bf16.gmra.mxu0 %v118
    %v561 = vpop.f32.mrf.mxu0
    %v562 = vadd.f32 %v549, %v561
    %v563 = vpop.f32.mrf.mxu0
    %564 = vdwg.mxu0
    %565 = vmatpush.bf16.msra.mxu0 %v428
    %566 = vmatpush.bf16.msra.mxu0 %v426
    %567 = vmatpush.bf16.msra.mxu0 %v424
    %568 = vmatpush.bf16.msra.mxu0 %v422
    %569 = vmatpush.bf16.msra.mxu0 %v420
    %570 = vmatpush.bf16.msra.mxu0 %v418
    %571 = vmatpush.bf16.msra.mxu0 %v416
    %572 = vmatpush.bf16.msra.mxu0 %v414
    %573 = vmatmul.bf16.gmra.mxu0 %v119
    %v574 = vpop.f32.mrf.mxu0
    %v575 = vadd.f32 %v562, %v574
    %v576 = vpop.f32.mrf.mxu0
    %577 = vdwg.mxu0
    %578 = vmatpush.bf16.msra.mxu0 %v444
    %579 = vmatpush.bf16.msra.mxu0 %v442
    %580 = vmatpush.bf16.msra.mxu0 %v440
    %581 = vmatpush.bf16.msra.mxu0 %v438
    %582 = vmatpush.bf16.msra.mxu0 %v436
    %583 = vmatpush.bf16.msra.mxu0 %v434
    %584 = vmatpush.bf16.msra.mxu0 %v432
    %585 = vmatpush.bf16.msra.mxu0 %v430
    %586 = vmatmul.bf16.gmra.mxu0 %v120
    %v587 = vpop.f32.mrf.mxu0
    %v588 = vadd.f32 %v575, %v587
    %v589 = vpop.f32.mrf.mxu0
    %590 = vdwg.mxu0
    %591 = vmatpush.bf16.msra.mxu0 %v381
    %592 = vmatpush.bf16.msra.mxu0 %v379
    %593 = vmatpush.bf16.msra.mxu0 %v377
    %594 = vmatpush.bf16.msra.mxu0 %v375
    %595 = vmatpush.bf16.msra.mxu0 %v373
    %596 = vmatpush.bf16.msra.mxu0 %v371
    %597 = vmatpush.bf16.msra.mxu0 %v369
    %598 = vmatpush.bf16.msra.mxu0 %v367
    %599 = vmatmul.bf16.gmra.mxu0 %v116
    %v600 = vpop.f32.mrf.mxu0
    %v601 = vadd.f32 %v111, %v600
    %v602 = vpop.f32.mrf.mxu0
    %603 = vdwg.mxu0
    %604 = vmatpush.bf16.msra.mxu0 %v397
    %605 = vmatpush.bf16.msra.mxu0 %v395
    %606 = vmatpush.bf16.msra.mxu0 %v393
    %607 = vmatpush.bf16.msra.mxu0 %v391
    %608 = vmatpush.bf16.msra.mxu0 %v389
    %609 = vmatpush.bf16.msra.mxu0 %v387
    %610 = vmatpush.bf16.msra.mxu0 %v385
    %611 = vmatpush.bf16.msra.mxu0 %v383
    %612 = vmatmul.bf16.gmra.mxu0 %v117
    %v613 = vpop.f32.mrf.mxu0
    %v614 = vadd.f32 %v601, %v613
    %v615 = vpop.f32.mrf.mxu0
    %616 = vdwg.mxu0
    %617 = vmatpush.bf16.msra.mxu0 %v413
    %618 = vmatpush.bf16.msra.mxu0 %v411
    %619 = vmatpush.bf16.msra.mxu0 %v409
    %620 = vmatpush.bf16.msra.mxu0 %v407
    %621 = vmatpush.bf16.msra.mxu0 %v405
    %622 = vmatpush.bf16.msra.mxu0 %v403
    %623 = vmatpush.bf16.msra.mxu0 %v401
    %624 = vmatpush.bf16.msra.mxu0 %v399
    %625 = vmatmul.bf16.gmra.mxu0 %v118
    %v626 = vpop.f32.mrf.mxu0
    %v627 = vadd.f32 %v614, %v626
    %v628 = vpop.f32.mrf.mxu0
    %629 = vdwg.mxu0
    %630 = vmatpush.bf16.msra.mxu0 %v429
    %631 = vmatpush.bf16.msra.mxu0 %v427
    %632 = vmatpush.bf16.msra.mxu0 %v425
    %633 = vmatpush.bf16.msra.mxu0 %v423
    %634 = vmatpush.bf16.msra.mxu0 %v421
    %635 = vmatpush.bf16.msra.mxu0 %v419
    %636 = vmatpush.bf16.msra.mxu0 %v417
    %637 = vmatpush.bf16.msra.mxu0 %v415
    %638 = vmatmul.bf16.gmra.mxu0 %v119
    %v639 = vpop.f32.mrf.mxu0
    %v640 = vadd.f32 %v627, %v639
    %v641 = vpop.f32.mrf.mxu0
    %642 = vdwg.mxu0
    %643 = vmatpush.bf16.msra.mxu0 %v445
    %644 = vmatpush.bf16.msra.mxu0 %v443
    %645 = vmatpush.bf16.msra.mxu0 %v441
    %646 = vmatpush.bf16.msra.mxu0 %v439
    %647 = vmatpush.bf16.msra.mxu0 %v437
    %648 = vmatpush.bf16.msra.mxu0 %v435
    %649 = vmatpush.bf16.msra.mxu0 %v433
    %650 = vmatpush.bf16.msra.mxu0 %v431
    %651 = vmatmul.bf16.gmra.mxu0 %v120
    %v652 = vpop.f32.mrf.mxu0
    %v653 = vadd.f32 %v640, %v652
    %v654 = vpop.f32.mrf.mxu0
    %655 = vdwg.mxu0
    %v656 = vmax.f32 %v588, 0.0
    %v657 = vmax.f32 %v653, 0.0
    %v658 = vpack.c.bf16 %v656, %v656
    %v659 = vpack.c.bf16 %v657, %v657
    %v660 = vld [vmem:[%s3] sm:$0xff]
    %v661 = vld [vmem:[%s3 + $0x8] sm:$0xff]
    %v662 = vld [vmem:[%s3 + $0x10] sm:$0xff]
    %v663 = vld [vmem:[%s3 + $0x18] sm:$0xff]
    %v664 = vld [vmem:[%s3 + $0x20] sm:$0xff]
    %v665 = vld [vmem:[%s3 + $0x28] sm:$0xff]
    %v666 = vld [vmem:[%s3 + $0x30] sm:$0xff]
    %v667 = vld [vmem:[%s3 + $0x38] sm:$0xff]
    %v668 = vld [vmem:[%s3 + $0x40] sm:$0xff]
    %v669 = vld [vmem:[%s3 + $0x48] sm:$0xff]
    %v670 = vld [vmem:[%s3 + $0x50] sm:$0xff]
    %v671 = vld [vmem:[%s3 + $0x58] sm:$0xff]
    %v672 = vld [vmem:[%s3 + $0x60] sm:$0xff]
    %v673 = vld [vmem:[%s3 + $0x68] sm:$0xff]
    %v674 = vld [vmem:[%s3 + $0x70] sm:$0xff]
    %v675 = vld [vmem:[%s3 + $0x78] sm:$0xff]
    %v676 = vld [vmem:[%s3 + $0x80] sm:$0xff]
    %v677 = vld [vmem:[%s3 + $0x88] sm:$0xff]
    %v678 = vld [vmem:[%s3 + $0x90] sm:$0xff]
    %v679 = vld [vmem:[%s3 + $0x98] sm:$0xff]
    %v680 = vld [vmem:[%s3 + $0xa0] sm:$0xff]
    %v681 = vld [vmem:[%s3 + $0xa8] sm:$0xff]
    %v682 = vld [vmem:[%s3 + $0xb0] sm:$0xff]
    %v683 = vld [vmem:[%s3 + $0xb8] sm:$0xff]
    %v684 = vld [vmem:[%s3 + $0xc0] sm:$0xff]
    %v685 = vld [vmem:[%s3 + $0xc8] sm:$0xff]
    %v686 = vld [vmem:[%s3 + $0xd0] sm:$0xff]
    %v687 = vld [vmem:[%s3 + $0xd8] sm:$0xff]
    %v688 = vld [vmem:[%s3 + $0xe0] sm:$0xff]
    %v689 = vld [vmem:[%s3 + $0xe8] sm:$0xff]
    %v690 = vld [vmem:[%s3 + $0xf0] sm:$0xff]
    %v691 = vld [vmem:[%s3 + $0xf8] sm:$0xff]
    %v692 = vld [vmem:[%s4] sm:$0x3]
    %v694 = vperm.slane %v692, 0
    %v695 = vperm.slane %v692, 1
    %v730 = vunpack.c.l.b16 %v660
    %v731 = vunpack.c.h.b16 %v660
    %v732 = vunpack.c.l.b16 %v661
    %v733 = vunpack.c.h.b16 %v661
    %v734 = vunpack.c.l.b16 %v662
    %v735 = vunpack.c.h.b16 %v662
    %v736 = vunpack.c.l.b16 %v663
    %v737 = vunpack.c.h.b16 %v663
    %v738 = vunpack.c.l.b16 %v664
    %v739 = vunpack.c.h.b16 %v664
    %v740 = vunpack.c.l.b16 %v665
    %v741 = vunpack.c.h.b16 %v665
    %v742 = vunpack.c.l.b16 %v666
    %v743 = vunpack.c.h.b16 %v666
    %v744 = vunpack.c.l.b16 %v667
    %v745 = vunpack.c.h.b16 %v667
    %v746 = vunpack.c.l.b16 %v668
    %v747 = vunpack.c.h.b16 %v668
    %v748 = vunpack.c.l.b16 %v669
    %v749 = vunpack.c.h.b16 %v669
    %v750 = vunpack.c.l.b16 %v670
    %v751 = vunpack.c.h.b16 %v670
    %v752 = vunpack.c.l.b16 %v671
    %v753 = vunpack.c.h.b16 %v671
    %v754 = vunpack.c.l.b16 %v672
    %v755 = vunpack.c.h.b16 %v672
    %v756 = vunpack.c.l.b16 %v673
    %v757 = vunpack.c.h.b16 %v673
    %v758 = vunpack.c.l.b16 %v674
    %v759 = vunpack.c.h.b16 %v674
    %v760 = vunpack.c.l.b16 %v675
    %v761 = vunpack.c.h.b16 %v675
    %v762 = vunpack.c.l.b16 %v676
    %v763 = vunpack.c.h.b16 %v676
    %v764 = vunpack.c.l.b16 %v677
    %v765 = vunpack.c.h.b16 %v677
    %v766 = vunpack.c.l.b16 %v678
    %v767 = vunpack.c.h.b16 %v678
    %v768 = vunpack.c.l.b16 %v679
    %v769 = vunpack.c.h.b16 %v679
    %v770 = vunpack.c.l.b16 %v680
    %v771 = vunpack.c.h.b16 %v680
    %v772 = vunpack.c.l.b16 %v681
    %v773 = vunpack.c.h.b16 %v681
    %v774 = vunpack.c.l.b16 %v682
    %v775 = vunpack.c.h.b16 %v682
    %v776 = vunpack.c.l.b16 %v683
    %v777 = vunpack.c.h.b16 %v683
    %v778 = vunpack.c.l.b16 %v684
    %v779 = vunpack.c.h.b16 %v684
    %v780 = vunpack.c.l.b16 %v685
    %v781 = vunpack.c.h.b16 %v685
    %v782 = vunpack.c.l.b16 %v686
    %v783 = vunpack.c.h.b16 %v686
    %v784 = vunpack.c.l.b16 %v687
    %v785 = vunpack.c.h.b16 %v687
    %v786 = vunpack.c.l.b16 %v688
    %v787 = vunpack.c.h.b16 %v688
    %v788 = vunpack.c.l.b16 %v689
    %v789 = vunpack.c.h.b16 %v689
    %v790 = vunpack.c.l.b16 %v690
    %v791 = vunpack.c.h.b16 %v690
    %v792 = vunpack.c.l.b16 %v691
    %v793 = vunpack.c.h.b16 %v691
    %v794 = vpack.c.b16 %v732, %v730
    %v795 = vpack.c.b16 %v733, %v731
    %v796 = vpack.c.b16 %v736, %v734
    %v797 = vpack.c.b16 %v737, %v735
    %v798 = vpack.c.b16 %v740, %v738
    %v799 = vpack.c.b16 %v741, %v739
    %v800 = vpack.c.b16 %v744, %v742
    %v801 = vpack.c.b16 %v745, %v743
    %v802 = vpack.c.b16 %v748, %v746
    %v803 = vpack.c.b16 %v749, %v747
    %v804 = vpack.c.b16 %v752, %v750
    %v805 = vpack.c.b16 %v753, %v751
    %v806 = vpack.c.b16 %v756, %v754
    %v807 = vpack.c.b16 %v757, %v755
    %v808 = vpack.c.b16 %v760, %v758
    %v809 = vpack.c.b16 %v761, %v759
    %v810 = vpack.c.b16 %v764, %v762
    %v811 = vpack.c.b16 %v765, %v763
    %v812 = vpack.c.b16 %v768, %v766
    %v813 = vpack.c.b16 %v769, %v767
    %v814 = vpack.c.b16 %v772, %v770
    %v815 = vpack.c.b16 %v773, %v771
    %v816 = vpack.c.b16 %v776, %v774
    %v817 = vpack.c.b16 %v777, %v775
    %v818 = vpack.c.b16 %v780, %v778
    %v819 = vpack.c.b16 %v781, %v779
    %v820 = vpack.c.b16 %v784, %v782
    %v821 = vpack.c.b16 %v785, %v783
    %v822 = vpack.c.b16 %v788, %v786
    %v823 = vpack.c.b16 %v789, %v787
    %v824 = vpack.c.b16 %v792, %v790
    %v825 = vpack.c.b16 %v793, %v791
    %858 = vmatpush.bf16.msra.mxu0 %v808
    %859 = vmatpush.bf16.msra.mxu0 %v806
    %860 = vmatpush.bf16.msra.mxu0 %v804
    %861 = vmatpush.bf16.msra.mxu0 %v802
    %862 = vmatpush.bf16.msra.mxu0 %v800
    %863 = vmatpush.bf16.msra.mxu0 %v798
    %864 = vmatpush.bf16.msra.mxu0 %v796
    %865 = vmatpush.bf16.msra.mxu0 %v794
    %866 = vmatmul.bf16.gmra.mxu0 %v658
    %v867 = vpop.f32.mrf.mxu0
    %v868 = vadd.f32 %v694, %v867
    %v869 = vpop.f32.mrf.mxu0
    %870 = vdwg.mxu0
    %871 = vmatpush.bf16.msra.mxu0 %v824
    %872 = vmatpush.bf16.msra.mxu0 %v822
    %873 = vmatpush.bf16.msra.mxu0 %v820
    %874 = vmatpush.bf16.msra.mxu0 %v818
    %875 = vmatpush.bf16.msra.mxu0 %v816
    %876 = vmatpush.bf16.msra.mxu0 %v814
    %877 = vmatpush.bf16.msra.mxu0 %v812
    %878 = vmatpush.bf16.msra.mxu0 %v810
    %879 = vmatmul.bf16.gmra.mxu0 %v659
    %v880 = vpop.f32.mrf.mxu0
    %v881 = vadd.f32 %v868, %v880
    %v882 = vpop.f32.mrf.mxu0
    %883 = vdwg.mxu0
    %884 = vmatpush.bf16.msra.mxu0 %v809
    %885 = vmatpush.bf16.msra.mxu0 %v807
    %886 = vmatpush.bf16.msra.mxu0 %v805
    %887 = vmatpush.bf16.msra.mxu0 %v803
    %888 = vmatpush.bf16.msra.mxu0 %v801
    %889 = vmatpush.bf16.msra.mxu0 %v799
    %890 = vmatpush.bf16.msra.mxu0 %v797
    %891 = vmatpush.bf16.msra.mxu0 %v795
    %892 = vmatmul.bf16.gmra.mxu0 %v658
    %v893 = vpop.f32.mrf.mxu0
    %v894 = vadd.f32 %v695, %v893
    %v895 = vpop.f32.mrf.mxu0
    %896 = vdwg.mxu0
    %897 = vmatpush.bf16.msra.mxu0 %v825
    %898 = vmatpush.bf16.msra.mxu0 %v823
    %899 = vmatpush.bf16.msra.mxu0 %v821
    %900 = vmatpush.bf16.msra.mxu0 %v819
    %901 = vmatpush.bf16.msra.mxu0 %v817
    %902 = vmatpush.bf16.msra.mxu0 %v815
    %903 = vmatpush.bf16.msra.mxu0 %v813
    %904 = vmatpush.bf16.msra.mxu0 %v811
    %905 = vmatmul.bf16.gmra.mxu0 %v659
    %v906 = vpop.f32.mrf.mxu0
    %v907 = vadd.f32 %v894, %v906
    %v908 = vpop.f32.mrf.mxu0
    %909 = vdwg.mxu0
    %v910 = vmax.f32 %v881, 0.0
    %v911 = vmax.f32 %v907, 0.0
    %v912 = vpack.c.bf16 %v910, %v910
    %v913 = vpack.c.bf16 %v911, %v911
    %v914 = vld [vmem:[%s5] sm:$0xf]
    %v915 = vld [vmem:[%s5 + $0x4] sm:$0xf]
    %v916 = vld [vmem:[%s5 + $0x8] sm:$0xf]
    %v917 = vld [vmem:[%s5 + $0xc] sm:$0xf]
    %v918 = vld [vmem:[%s5 + $0x10] sm:$0xf]
    %v919 = vld [vmem:[%s5 + $0x14] sm:$0xf]
    %v920 = vld [vmem:[%s5 + $0x18] sm:$0xf]
    %v921 = vld [vmem:[%s5 + $0x1c] sm:$0xf]
    %v922 = vld [vmem:[%s5 + $0x20] sm:$0xf]
    %v923 = vld [vmem:[%s5 + $0x24] sm:$0xf]
    %v924 = vld [vmem:[%s5 + $0x28] sm:$0xf]
    %v925 = vld [vmem:[%s5 + $0x2c] sm:$0xf]
    %v926 = vld [vmem:[%s5 + $0x30] sm:$0xf]
    %v927 = vld [vmem:[%s5 + $0x34] sm:$0xf]
    %v928 = vld [vmem:[%s5 + $0x38] sm:$0xf]
    %v929 = vld [vmem:[%s5 + $0x3c] sm:$0xf]
    %v930 = vld [vmem:[%s5 + $0x40] sm:$0xf]
    %v931 = vld [vmem:[%s5 + $0x44] sm:$0xf]
    %v932 = vld [vmem:[%s5 + $0x48] sm:$0xf]
    %v933 = vld [vmem:[%s5 + $0x4c] sm:$0xf]
    %v934 = vld [vmem:[%s5 + $0x50] sm:$0xf]
    %v935 = vld [vmem:[%s5 + $0x54] sm:$0xf]
    %v936 = vld [vmem:[%s5 + $0x58] sm:$0xf]
    %v937 = vld [vmem:[%s5 + $0x5c] sm:$0xf]
    %v938 = vld [vmem:[%s5 + $0x60] sm:$0xf]
    %v939 = vld [vmem:[%s5 + $0x64] sm:$0xf]
    %v940 = vld [vmem:[%s5 + $0x68] sm:$0xf]
    %v941 = vld [vmem:[%s5 + $0x6c] sm:$0xf]
    %v942 = vld [vmem:[%s5 + $0x70] sm:$0xf]
    %v943 = vld [vmem:[%s5 + $0x74] sm:$0xf]
    %v944 = vld [vmem:[%s5 + $0x78] sm:$0xf]
    %v945 = vld [vmem:[%s5 + $0x7c] sm:$0xf]
    %v946 = vld [vmem:[%s6] sm:$0x1]
    %v948 = vperm.slane %v946, 0
    %v982 = vunpack.c.l.b16 %v914
    %v983 = vunpack.c.l.b16 %v915
    %v984 = vunpack.c.l.b16 %v916
    %v985 = vunpack.c.l.b16 %v917
    %v986 = vunpack.c.l.b16 %v918
    %v987 = vunpack.c.l.b16 %v919
    %v988 = vunpack.c.l.b16 %v920
    %v989 = vunpack.c.l.b16 %v921
    %v990 = vunpack.c.l.b16 %v922
    %v991 = vunpack.c.l.b16 %v923
    %v992 = vunpack.c.l.b16 %v924
    %v993 = vunpack.c.l.b16 %v925
    %v994 = vunpack.c.l.b16 %v926
    %v995 = vunpack.c.l.b16 %v927
    %v996 = vunpack.c.l.b16 %v928
    %v997 = vunpack.c.l.b16 %v929
    %v998 = vunpack.c.l.b16 %v930
    %v999 = vunpack.c.l.b16 %v931
    %v1000 = vunpack.c.l.b16 %v932
    %v1001 = vunpack.c.l.b16 %v933
    %v1002 = vunpack.c.l.b16 %v934
    %v1003 = vunpack.c.l.b16 %v935
    %v1004 = vunpack.c.l.b16 %v936
    %v1005 = vunpack.c.l.b16 %v937
    %v1006 = vunpack.c.l.b16 %v938
    %v1007 = vunpack.c.l.b16 %v939
    %v1008 = vunpack.c.l.b16 %v940
    %v1009 = vunpack.c.l.b16 %v941
    %v1010 = vunpack.c.l.b16 %v942
    %v1011 = vunpack.c.l.b16 %v943
    %v1012 = vunpack.c.l.b16 %v944
    %v1013 = vunpack.c.l.b16 %v945
    %v1014 = vpack.c.b16 %v983, %v982
    %v1015 = vpack.c.b16 %v985, %v984
    %v1016 = vpack.c.b16 %v987, %v986
    %v1017 = vpack.c.b16 %v989, %v988
    %v1018 = vpack.c.b16 %v991, %v990
    %v1019 = vpack.c.b16 %v993, %v992
    %v1020 = vpack.c.b16 %v995, %v994
    %v1021 = vpack.c.b16 %v997, %v996
    %v1022 = vpack.c.b16 %v999, %v998
    %v1023 = vpack.c.b16 %v1001, %v1000
    %v1024 = vpack.c.b16 %v1003, %v1002
    %v1025 = vpack.c.b16 %v1005, %v1004
    %v1026 = vpack.c.b16 %v1007, %v1006
    %v1027 = vpack.c.b16 %v1009, %v1008
    %v1028 = vpack.c.b16 %v1011, %v1010
    %v1029 = vpack.c.b16 %v1013, %v1012
    %1046 = vmatpush.bf16.msra.mxu0 %v1021
    %1047 = vmatpush.bf16.msra.mxu0 %v1020
    %1048 = vmatpush.bf16.msra.mxu0 %v1019
    %1049 = vmatpush.bf16.msra.mxu0 %v1018
    %1050 = vmatpush.bf16.msra.mxu0 %v1017
    %1051 = vmatpush.bf16.msra.mxu0 %v1016
    %1052 = vmatpush.bf16.msra.mxu0 %v1015
    %1053 = vmatpush.bf16.msra.mxu0 %v1014
    %1054 = vmatmul.bf16.gmra.mxu0 %v912
    %v1055 = vpop.f32.mrf.mxu0
    %v1056 = vadd.f32 %v948, %v1055
    %v1057 = vpop.f32.mrf.mxu0
    %1058 = vdwg.mxu0
    %1059 = vmatpush.bf16.msra.mxu0 %v1029
    %1060 = vmatpush.bf16.msra.mxu0 %v1028
    %1061 = vmatpush.bf16.msra.mxu0 %v1027
    %1062 = vmatpush.bf16.msra.mxu0 %v1026
    %1063 = vmatpush.bf16.msra.mxu0 %v1025
    %1064 = vmatpush.bf16.msra.mxu0 %v1024
    %1065 = vmatpush.bf16.msra.mxu0 %v1023
    %1066 = vmatpush.bf16.msra.mxu0 %v1022
    %1067 = vmatmul.bf16.gmra.mxu0 %v913
    %v1068 = vpop.f32.mrf.mxu0
    %v1069 = vadd.f32 %v1056, %v1068
    %v1070 = vpop.f32.mrf.mxu0
    %1071 = vdwg.mxu0
    %v1072 = vlaneseq
    %v1073 = vand.u32 %v1072, 127
    %vm1074 = vcmp.lt.s32.totalorder %v1073, 10
    %v1075 = vsel %vm1074, %v1069, -1e+30
    %vm1076 = vcmask 1041408
    %v1077 = vsel %vm1076, %v1075, -inf
    %1078 = vmax.xlane.f32.xlu0 %v1077
    %v1079 = vpop.xlane.xlu0 %1078
    %v1080 = vsub.f32 %v1075, %v1079
    %v1081 = vmul.f32 %v1080, 1.442695
    %v1082 = vpow.pop %v1081
    %v1083 = vsel %vm1076, %v1082, 0.0
    %1084 = vadd.xlane.f32.xlu0 %v1083
    %v1085 = vpop.xlane.xlu0 %1084
    %v1086 = vlog2.pop %v1085
    %v1087 = vmul.f32 %v1086, 0.6931472
    %v1088 = vsub.f32 %v1080, %v1087
    %1089 = vst [vmem:[#allocation2] sm:$0x3] %v1088
    // Predicated region
    $region30: #{cnn_mlp_forward.9} parent=1 // pred_check
      _
    $region31: #{cnn_mlp_forward.9} parent=1 // pred_check_branch
      %1091 = sbr.rel (0) target = $region33
    $region32: #{cnn_mlp_forward.9} parent=1 // pred_region
      %1093 = vsyncadd [#allocation3], 0
      %s1095 = sshll.u32 [#allocation2], 4
      %s1096 = int_to_ptr.vmem [resolvable:$true] %s1095
      %s1097 = sshll.u32 %s7, 4
      %s1098 = int_to_ptr.hbm [resolvable:$true] %s1097
      %1100 = dma.vmem_to_hbm [thread:$0]  %s1096, 32, %s1098, [#allocation3]
    $region33: #{cnn_mlp_forward.9} parent=1 // pred_fallthru
      _
    // Predicated region
    $region34: #{cnn_mlp_forward.9} parent=1 // pred_check
      _
    $region35: #{cnn_mlp_forward.9} parent=1 // pred_check_branch
      %1102 = sbr.rel (0) target = $region37
    $region36: #{cnn_mlp_forward.9} parent=1 // pred_region
      %1104 = dma.done [#allocation3], 32
    $region37: #{cnn_mlp_forward.9} parent=1 // pred_fallthru
      _
    %1105 = vsyncpa [#allocation3], 1

</llo_original>
